<compile_context>
chip_gen: v6e
topology: v6e:2x2x1
jax: 0.10.0
libtpu: 0.0.40
codegen_flags: <defaults>
</compile_context>

<pallas_src>
import jax
import jax.numpy as jnp
import numpy as np
from jax import lax
from jax.experimental import pallas as pl
from jax.experimental.pallas import tpu as pltpu

OC, KH, KW = 2, 5, 5
H_IN = W_IN = 28
N_IN = H_IN * W_IN               # 784
H_CONV = W_CONV = 24             # 28 - 5 + 1
POOL = 3
H_POOL = W_POOL = 8              # 24 // 3
N_FLAT = OC * H_POOL * W_POOL    # 128  (torch Flatten feature count)
N_WIN = POOL * POOL              # 9    (positions inside one pool window)
N_CONV = N_WIN * N_FLAT          # 1152 (Toeplitz output columns)
N_OUT = 10
TB = 128                         # batch rows per grid step (sublane axis)


def fused_cnn_kernel(x_ref, tt_ref, bc_ref, wfc_ref, bfc_ref, out_ref):
    # x_ref:   (TB, 784)   f32  one batch tile, flattened 28x28 image on lanes
    # tt_ref:  (784, 1152) bf16 transposed banded-Toeplitz conv matrix
    # bc_ref:  (1, 128)    f32  conv bias expanded to feature order oc*64+p*8+q
    # wfc_ref: (128, 10)   bf16 FC weight (transposed; torch Flatten column order)
    # bfc_ref: (1, 10)     f32  FC bias
    # out_ref: (TB, 10)    f32  logits
    x = x_ref[...].astype(jnp.bfloat16)      # in-kernel downcast (keeps HBM traffic to one f32 read)

    # Conv as a single MXU matmul: (TB,784) @ (784,1152) -> (TB,1152) f32.
    y = jnp.dot(x, tt_ref[...], preferred_element_type=jnp.float32)

    # MaxPool(3,3): column u*128 + f of y is the conv output at window-position u of
    # pooled feature f, so pooling is an elementwise max over 9 lane-tile-aligned slabs.
    z = y[:, :N_FLAT]
    for u in range(1, N_WIN):
        z = jnp.maximum(z, y[:, u * N_FLAT:(u + 1) * N_FLAT])

    # Conv bias + ReLU after pooling (bias constant per window, ReLU monotone => same
    # result as torch's conv -> +bias -> relu -> pool).
    feat = jnp.maximum(z + bc_ref[...], 0.0)                 # (TB, 128) f32

    # Fused fully-connected layer on the MXU: (TB,128) @ (128,10) + (1,10).
    logits = jnp.dot(feat.astype(jnp.bfloat16), wfc_ref[...],
                     preferred_element_type=jnp.float32) + bfc_ref[...]
    out_ref[...] = logits


def simple_cnn_forward(x_nchw, params):
    B = x_nchw.shape[0]
    # Free layout change: NCHW (B,1,28,28) -> (B,784).  Batch stays on sublanes, so the
    # previous un-fused HBM transpose (batch-to-lanes) is eliminated entirely.
    # TODO(synk): produce activations in bf16 upstream to halve input HBM traffic further.
    x_flat = x_nchw.reshape(B, N_IN)
    pad = (-B) % TB
    if pad:
        x_flat = jnp.pad(x_flat, ((0, pad), (0, 0)))
    bp = B + pad

    out = pl.pallas_call(
        fused_cnn_kernel,
        out_shape=jax.ShapeDtypeStruct((bp, N_OUT), jnp.float32),
        grid=(bp // TB,),
        in_specs=[
            pl.BlockSpec((TB, N_IN), lambda b: (b, 0)),
            pl.BlockSpec((N_IN, N_CONV), lambda b: (0, 0)),
            pl.BlockSpec((1, N_FLAT), lambda b: (0, 0)),
            pl.BlockSpec((N_FLAT, N_OUT), lambda b: (0, 0)),
            pl.BlockSpec((1, N_OUT), lambda b: (0, 0)),
        ],
        out_specs=pl.BlockSpec((TB, N_OUT), lambda b: (b, 0)),
        compiler_params=pltpu.CompilerParams(dimension_semantics=("parallel",)),
    )(x_flat, params["tt"], params["b_conv_row"], params["w_fc_t"], params["b_fc_row"])

    return out[:B]                                            # (B, 10)


def prepare_params(w_conv, b_conv, w_fc, b_fc):
    """Precompute the banded Toeplitz conv matrix and FC weights in kernel layout."""
    w = np.asarray(w_conv, np.float32)                        # (2,1,5,5)
    T = np.zeros((N_CONV, N_IN), np.float32)                  # (1152, 784)
    for ui in range(POOL):
        for uj in range(POOL):
            u = ui * POOL + uj
            for oc in range(OC):
                for p in range(H_POOL):
                    for q in range(W_POOL):
                        r = u * N_FLAT + oc * (H_POOL * W_POOL) + p * W_POOL + q
                        i, j = p * POOL + ui, q * POOL + uj   # conv output position
                        for di in range(KH):
                            for dj in range(KW):
                                T[r, (i + di) * W_IN + (j + dj)] = w[oc, 0, di, dj]
    b_conv_row = np.repeat(np.asarray(b_conv, np.float32),
                           H_POOL * W_POOL).reshape(1, N_FLAT)
    return {
        "tt": jnp.asarray(T.T, jnp.bfloat16),                 # (784, 1152)
        "b_conv_row": jnp.asarray(b_conv_row),                # (1, 128)
        "w_fc_t": jnp.asarray(np.asarray(w_fc, np.float32).T, jnp.bfloat16),  # (128, 10)
        "b_fc_row": jnp.asarray(np.asarray(b_fc, np.float32).reshape(1, N_OUT)),  # (1, 10)
    }


def _bf16_rt(a):
    # bf16 round-trip, mirroring the kernel's bf16 data path.
    return jnp.asarray(a, jnp.float32).astype(jnp.bfloat16).astype(jnp.float32)


def reference_forward(x_nchw, w_conv, b_conv, w_fc, b_fc):
    # f32 reference of the torch module, applying the same bf16 rounding the kernel uses
    # on x / conv weight / pooled features / FC weight (accumulation stays f32).
    y = lax.conv_general_dilated(_bf16_rt(x_nchw), _bf16_rt(w_conv), (1, 1), "VALID",
                                 dimension_numbers=("NCHW", "OIHW", "NCHW"))
    y = jnp.maximum(y + b_conv.reshape(1, -1, 1, 1), 0.0)
    y = lax.reduce_window(y, -jnp.inf, lax.max, (1, 1, POOL, POOL),
                          (1, 1, POOL, POOL), "VALID")
    flat = y.reshape(y.shape[0], -1)
    return _bf16_rt(flat) @ _bf16_rt(w_fc).T + b_fc


if __name__ == "__main__":
    key = jax.random.PRNGKey(0)
    kx, k1, k2, k3, k4 = jax.random.split(key, 5)
    B = 2
    # Conv(1->2, k=5) + MaxPool(3,3) + Linear(2*8*8, 10) implies 28x28 inputs.
    x = jax.random.normal(kx, (B, 1, H_IN, W_IN), jnp.float32)

    # Deterministic params (PyTorch-style uniform(-1/sqrt(fan_in), 1/sqrt(fan_in))).
    conv_bound = 1.0 / (1 * KH * KW) ** 0.5
    w_conv = jax.random.uniform(k1, (OC, 1, KH, KW), jnp.float32, -conv_bound, conv_bound)
    b_conv = jax.random.uniform(k2, (OC,), jnp.float32, -conv_bound, conv_bound)
    fc_bound = 1.0 / N_FLAT ** 0.5
    w_fc = jax.random.uniform(k3, (N_OUT, N_FLAT), jnp.float32, -fc_bound, fc_bound)
    b_fc = jax.random.uniform(k4, (N_OUT,), jnp.float32, -fc_bound, fc_bound)

    params = prepare_params(w_conv, b_conv, w_fc, b_fc)

    out = jax.block_until_ready(simple_cnn_forward(x, params))
    assert out.shape == (B, N_OUT)
    ref = reference_forward(x, w_conv, b_conv, w_fc, b_fc)
    # Tolerance covers only f32 accumulation-order differences (the bf16 rounding the
    # kernel applies is mirrored in the reference), so 1e-3 is comfortably safe.
    np.testing.assert_allclose(np.asarray(out), np.asarray(ref), rtol=1e-3, atol=1e-3)
    print("KERNEL_OK")
</pallas_src>

<mosaic_0001>
module attributes {stable_mosaic.version = 11 : i64} {
  func.func @fused_cnn_kernel(%arg0: i32, %arg1: memref<128x784xf32, #tpu.memory_space<vmem>>, %arg2: memref<784x1152xbf16, #tpu.memory_space<vmem>>, %arg3: memref<1x128xf32, #tpu.memory_space<vmem>>, %arg4: memref<128x10xbf16, #tpu.memory_space<vmem>>, %arg5: memref<1x10xf32, #tpu.memory_space<vmem>>, %arg6: memref<128x10xf32, #tpu.memory_space<vmem>>) attributes {dimension_semantics = [#tpu.dimension_semantics<parallel>], iteration_bounds = array<i64: 1>, scalar_prefetch = 0 : i64, scratch_operands = 0 : i64, tpu.core_type = #tpu.core_type<tc>, window_params = [{transform_indices = @transform_0, window_bounds = array<i64: 128, 784>}, {pipeline_mode = #tpu.pipeline_mode<synchronous>, transform_indices = @transform_1, window_bounds = array<i64: 784, 1152>}, {pipeline_mode = #tpu.pipeline_mode<synchronous>, transform_indices = @transform_2, window_bounds = array<i64: 1, 128>}, {pipeline_mode = #tpu.pipeline_mode<synchronous>, transform_indices = @transform_3, window_bounds = array<i64: 128, 10>}, {pipeline_mode = #tpu.pipeline_mode<synchronous>, transform_indices = @transform_4, window_bounds = array<i64: 1, 10>}, {transform_indices = @transform_5, window_bounds = array<i64: 128, 10>}]} {
    %c0 = arith.constant 0 : index
    %c0_0 = arith.constant 0 : index
    %0 = vector.load %arg1[%c0, %c0_0] : memref<128x784xf32, #tpu.memory_space<vmem>>, vector<128x784xf32>
    %1 = arith.truncf %0 : vector<128x784xf32> to vector<128x784xbf16>
    %c0_1 = arith.constant 0 : index
    %c0_2 = arith.constant 0 : index
    %2 = vector.load %arg2[%c0_1, %c0_2] : memref<784x1152xbf16, #tpu.memory_space<vmem>>, vector<784x1152xbf16>
    %cst = arith.constant dense<0.000000e+00> : vector<128x1152xf32>
    %3 = tpu.matmul %1, %2, %cst {dimension_numbers = #tpu.dot_dimension_numbers<[1], [0], [0], [1], [0, 0, 1, 1], [], []>} : vector<128x784xbf16>, vector<784x1152xbf16>, vector<128x1152xf32> -> vector<128x1152xf32>
    %4 = vector.extract_strided_slice %3 {offsets = [0, 0], sizes = [128, 128], strides = [1, 1]} : vector<128x1152xf32> to vector<128x128xf32>
    %5 = vector.extract_strided_slice %3 {offsets = [0, 128], sizes = [128, 128], strides = [1, 1]} : vector<128x1152xf32> to vector<128x128xf32>
    %6 = arith.maximumf %4, %5 : vector<128x128xf32>
    %7 = vector.extract_strided_slice %3 {offsets = [0, 256], sizes = [128, 128], strides = [1, 1]} : vector<128x1152xf32> to vector<128x128xf32>
    %8 = arith.maximumf %6, %7 : vector<128x128xf32>
    %9 = vector.extract_strided_slice %3 {offsets = [0, 384], sizes = [128, 128], strides = [1, 1]} : vector<128x1152xf32> to vector<128x128xf32>
    %10 = arith.maximumf %8, %9 : vector<128x128xf32>
    %11 = vector.extract_strided_slice %3 {offsets = [0, 512], sizes = [128, 128], strides = [1, 1]} : vector<128x1152xf32> to vector<128x128xf32>
    %12 = arith.maximumf %10, %11 : vector<128x128xf32>
    %13 = vector.extract_strided_slice %3 {offsets = [0, 640], sizes = [128, 128], strides = [1, 1]} : vector<128x1152xf32> to vector<128x128xf32>
    %14 = arith.maximumf %12, %13 : vector<128x128xf32>
    %15 = vector.extract_strided_slice %3 {offsets = [0, 768], sizes = [128, 128], strides = [1, 1]} : vector<128x1152xf32> to vector<128x128xf32>
    %16 = arith.maximumf %14, %15 : vector<128x128xf32>
    %17 = vector.extract_strided_slice %3 {offsets = [0, 896], sizes = [128, 128], strides = [1, 1]} : vector<128x1152xf32> to vector<128x128xf32>
    %18 = arith.maximumf %16, %17 : vector<128x128xf32>
    %19 = vector.extract_strided_slice %3 {offsets = [0, 1024], sizes = [128, 128], strides = [1, 1]} : vector<128x1152xf32> to vector<128x128xf32>
    %20 = arith.maximumf %18, %19 : vector<128x128xf32>
    %c0_3 = arith.constant 0 : index
    %c0_4 = arith.constant 0 : index
    %21 = vector.load %arg3[%c0_3, %c0_4] : memref<1x128xf32, #tpu.memory_space<vmem>>, vector<1x128xf32>
    %22 = vector.broadcast %21 : vector<1x128xf32> to vector<128x128xf32>
    %23 = arith.addf %20, %22 : vector<128x128xf32>
    %cst_5 = arith.constant 0.000000e+00 : f32
    %24 = vector.broadcast %cst_5 : f32 to vector<128x128xf32>
    %25 = arith.maximumf %23, %24 : vector<128x128xf32>
    %26 = arith.truncf %25 : vector<128x128xf32> to vector<128x128xbf16>
    %c0_6 = arith.constant 0 : index
    %c0_7 = arith.constant 0 : index
    %27 = vector.load %arg4[%c0_6, %c0_7] : memref<128x10xbf16, #tpu.memory_space<vmem>>, vector<128x10xbf16>
    %cst_8 = arith.constant dense<0.000000e+00> : vector<128x10xf32>
    %28 = tpu.matmul %26, %27, %cst_8 {dimension_numbers = #tpu.dot_dimension_numbers<[1], [0], [0], [1], [0, 0, 1, 1], [], []>} : vector<128x128xbf16>, vector<128x10xbf16>, vector<128x10xf32> -> vector<128x10xf32>
    %c0_9 = arith.constant 0 : index
    %c0_10 = arith.constant 0 : index
    %29 = vector.load %arg5[%c0_9, %c0_10] : memref<1x10xf32, #tpu.memory_space<vmem>>, vector<1x10xf32>
    %30 = vector.broadcast %29 : vector<1x10xf32> to vector<128x10xf32>
    %31 = arith.addf %28, %30 : vector<128x10xf32>
    %c0_11 = arith.constant 0 : index
    %c0_12 = arith.constant 0 : index
    %32 = vector.load %arg6[%c0_11, %c0_12] : memref<128x10xf32, #tpu.memory_space<vmem>>, vector<128x10xf32>
    tpu.vector_store %arg6[%c0_11, %c0_12], %31 {strides = array<i32>} : memref<128x10xf32, #tpu.memory_space<vmem>>, vector<128x10xf32>,
    return
  }
  func.func @transform_0(%arg0: i32) -> (i32, i32) {
    %c0_i32 = arith.constant 0 : i32
    %c0_i32_0 = arith.constant 0 : i32
    return %arg0, %c0_i32 : i32, i32
  }
  func.func @transform_1(%arg0: i32) -> (i32, i32) {
    %c0_i32 = arith.constant 0 : i32
    %c0_i32_0 = arith.constant 0 : i32
    %c0_i32_1 = arith.constant 0 : i32
    return %c0_i32, %c0_i32_0 : i32, i32
  }
  func.func @transform_2(%arg0: i32) -> (i32, i32) {
    %c0_i32 = arith.constant 0 : i32
    %c0_i32_0 = arith.constant 0 : i32
    %c0_i32_1 = arith.constant 0 : i32
    return %c0_i32, %c0_i32_0 : i32, i32
  }
  func.func @transform_3(%arg0: i32) -> (i32, i32) {
    %c0_i32 = arith.constant 0 : i32
    %c0_i32_0 = arith.constant 0 : i32
    %c0_i32_1 = arith.constant 0 : i32
    return %c0_i32, %c0_i32_0 : i32, i32
  }
  func.func @transform_4(%arg0: i32) -> (i32, i32) {
    %c0_i32 = arith.constant 0 : i32
    %c0_i32_0 = arith.constant 0 : i32
    %c0_i32_1 = arith.constant 0 : i32
    return %c0_i32, %c0_i32_0 : i32, i32
  }
  func.func @transform_5(%arg0: i32) -> (i32, i32) {
    %c0_i32 = arith.constant 0 : i32
    %c0_i32_0 = arith.constant 0 : i32
    return %arg0, %c0_i32 : i32, i32
  }
}

</mosaic_0001>

<llo_original>
// kernel: tpu_custom_call.1
$region0: #{tpu_custom_call.1}
  #allocation0 [shape = 'u32[]', space=smem, size = 0x4, offset = 0x4, fixed_abs, tag = 'smem constant byte address 0x4 - core index']
  #allocation1 [shape = 'u32[144,128]{1,0:T(1,128)}', space=vmem, size = 0x12000, scoped, tag = 'internal scratch']
  %s0 = inlined_call_operand.vmem [shape: f32[128,784], index: 0, kind: input, shape index: {}]
  %s1 = inlined_call_operand.hbm [shape: bf16[784,1152], index: 1, kind: input, shape index: {}]
  %s2 = inlined_call_operand.hbm [shape: f32[1,128], index: 2, kind: input, shape index: {}]
  %s3 = inlined_call_operand.vmem [shape: bf16[128,10], index: 3, kind: input, shape index: {}]
  %s4 = inlined_call_operand.hbm [shape: f32[1,10], index: 4, kind: input, shape index: {}]
  %s5 = inlined_call_operand.vmem [shape: f32[128,10], index: 5, kind: output, shape index: {}]
  %s6 = sld [smem:[#allocation0]]
  $region42: #{tpu_custom_call.1} parent=0
    _
  %s8 = ssub.s32 1, %s6
  %s9 = scalar_select 0, %s8, %s6
  $region1: #{tpu_custom_call.1} parent=0
    #allocation2 [shape = 'u8[1806336]{0}', space=vmem, size = 0x1b9000, scoped, tag = 'input window, operand 1, single buffered']
    #allocation3 [shape = 's32[1]{0}', space=sflag, size = 0x4, scoped, tag = 'scoped memory for tpu_custom_call.1']
    #allocation4 [shape = 'u8[512]{0}', space=vmem, size = 0x400, scoped, tag = 'input window, operand 2, single buffered']
    #allocation5 [shape = 's32[1]{0}', space=sflag, size = 0x4, scoped, tag = 'scoped memory for tpu_custom_call.1']
    #allocation6 [shape = 'u8[512]{0}', space=vmem, size = 0x400, scoped, tag = 'input window, operand 4, single buffered']
    %10 = vsyncpa [#allocation3], 0
    %11 = vsyncpa [#allocation5], 0
    // Predicated region
    $region2: #{tpu_custom_call.1} parent=1 // pred_check
      _
    $region3: #{tpu_custom_call.1} parent=1 // pred_check_branch
      %13 = sbr.rel (0) target = $region5
    $region4: #{tpu_custom_call.1} parent=1 // pred_region
      _
    $region5: #{tpu_custom_call.1} parent=1 // pred_fallthru
      _
    // Predicated region
    $region6: #{tpu_custom_call.1} parent=1 // pred_check
      _
    $region7: #{tpu_custom_call.1} parent=1 // pred_check_branch
      %15 = sbr.rel (0) target = $region9
    $region8: #{tpu_custom_call.1} parent=1 // pred_region
      %s17 = ssub.s32 56448, 56448
      %18 = vsyncadd [#allocation3], %s17
      %s19 = sshll.u32 [#allocation2], 4
      %s20 = int_to_ptr.vmem [resolvable:$true] %s19
      %25 = dma.hbm_to_vmem [thread:$0]  %s1, 56448, %s20, [#allocation3], 576, 576, 36
    $region9: #{tpu_custom_call.1} parent=1 // pred_fallthru
      _
    // Predicated region
    $region10: #{tpu_custom_call.1} parent=1 // pred_check
      _
    $region11: #{tpu_custom_call.1} parent=1 // pred_check_branch
      %27 = sbr.rel (0) target = $region13
    $region12: #{tpu_custom_call.1} parent=1 // pred_region
      %s29 = ssub.s32 16, 16
      %30 = vsyncadd [#allocation5], %s29
      %s32 = sshll.u32 [#allocation4], 4
      %s33 = int_to_ptr.vmem [resolvable:$true] %s32
      %35 = dma.hbm_to_vmem [thread:$0]  %s2, 16, %s33, [#allocation5]
    $region13: #{tpu_custom_call.1} parent=1 // pred_fallthru
      _
    // Predicated region
    $region14: #{tpu_custom_call.1} parent=1 // pred_check
      _
    $region15: #{tpu_custom_call.1} parent=1 // pred_check_branch
      %37 = sbr.rel (0) target = $region17
    $region16: #{tpu_custom_call.1} parent=1 // pred_region
      _
    $region17: #{tpu_custom_call.1} parent=1 // pred_fallthru
      _
    // Predicated region
    $region18: #{tpu_custom_call.1} parent=1 // pred_check
      _
    $region19: #{tpu_custom_call.1} parent=1 // pred_check_branch
      %39 = sbr.rel (0) target = $region21
    $region20: #{tpu_custom_call.1} parent=1 // pred_region
      %s41 = ssub.s32 16, 16
      %42 = vsyncadd [#allocation5], %s41
      %s44 = sshll.u32 [#allocation6], 4
      %s45 = int_to_ptr.vmem [resolvable:$true] %s44
      %47 = dma.hbm_to_vmem [thread:$0]  %s4, 16, %s45, [#allocation5]
    $region21: #{tpu_custom_call.1} parent=1 // pred_fallthru
      _
    // Predicated region
    $region22: #{tpu_custom_call.1} parent=1 // pred_check
      _
    $region23: #{tpu_custom_call.1} parent=1 // pred_check_branch
      %49 = sbr.rel (0) target = $region25
    $region24: #{tpu_custom_call.1} parent=1 // pred_region
      %50 = dma.done [#allocation3], 56448
    $region25: #{tpu_custom_call.1} parent=1 // pred_fallthru
      _
    // Predicated region
    $region26: #{tpu_custom_call.1} parent=1 // pred_check
      _
    $region27: #{tpu_custom_call.1} parent=1 // pred_check_branch
      %52 = sbr.rel (0) target = $region29
    $region28: #{tpu_custom_call.1} parent=1 // pred_region
      %53 = dma.done [#allocation5], 16
    $region29: #{tpu_custom_call.1} parent=1 // pred_fallthru
      _
    // Predicated region
    $region30: #{tpu_custom_call.1} parent=1 // pred_check
      _
    $region31: #{tpu_custom_call.1} parent=1 // pred_check_branch
      %55 = sbr.rel (0) target = $region33
    $region32: #{tpu_custom_call.1} parent=1 // pred_region
      %56 = dma.done [#allocation5], 16
    $region33: #{tpu_custom_call.1} parent=1 // pred_fallthru
      _
    %v58 = vld [vmem:[%s0] sm:$0xff]
    %v59 = vld [vmem:[%s0 + $0x8] sm:$0xff]
    %v60 = vld [vmem:[%s0 + $0x10] sm:$0xff]
    %v61 = vld [vmem:[%s0 + $0x18] sm:$0xff]
    %v62 = vld [vmem:[%s0 + $0x20] sm:$0xff]
    %v63 = vld [vmem:[%s0 + $0x28] sm:$0xff]
    %v64 = vld [vmem:[%s0 + $0x30] sm:$0xff]
    %v65 = vld [vmem:[%s0 + $0x38] sm:$0xff]
    %v66 = vld [vmem:[%s0 + $0x40] sm:$0xff]
    %v67 = vld [vmem:[%s0 + $0x48] sm:$0xff]
    %v68 = vld [vmem:[%s0 + $0x50] sm:$0xff]
    %v69 = vld [vmem:[%s0 + $0x58] sm:$0xff]
    %v70 = vld [vmem:[%s0 + $0x60] sm:$0xff]
    %v71 = vld [vmem:[%s0 + $0x68] sm:$0xff]
    %v72 = vld [vmem:[%s0 + $0x70] sm:$0xff]
    %v73 = vld [vmem:[%s0 + $0x78] sm:$0xff]
    %v74 = vld [vmem:[%s0 + $0x80] sm:$0xff]
    %v75 = vld [vmem:[%s0 + $0x88] sm:$0xff]
    %v76 = vld [vmem:[%s0 + $0x90] sm:$0xff]
    %v77 = vld [vmem:[%s0 + $0x98] sm:$0xff]
    %v78 = vld [vmem:[%s0 + $0xa0] sm:$0xff]
    %v79 = vld [vmem:[%s0 + $0xa8] sm:$0xff]
    %v80 = vld [vmem:[%s0 + $0xb0] sm:$0xff]
    %v81 = vld [vmem:[%s0 + $0xb8] sm:$0xff]
    %v82 = vld [vmem:[%s0 + $0xc0] sm:$0xff]
    %v83 = vld [vmem:[%s0 + $0xc8] sm:$0xff]
    %v84 = vld [vmem:[%s0 + $0xd0] sm:$0xff]
    %v85 = vld [vmem:[%s0 + $0xd8] sm:$0xff]
    %v86 = vld [vmem:[%s0 + $0xe0] sm:$0xff]
    %v87 = vld [vmem:[%s0 + $0xe8] sm:$0xff]
    %v88 = vld [vmem:[%s0 + $0xf0] sm:$0xff]
    %v89 = vld [vmem:[%s0 + $0xf8] sm:$0xff]
    %v90 = vld [vmem:[%s0 + $0x100] sm:$0xff]
    %v91 = vld [vmem:[%s0 + $0x108] sm:$0xff]
    %v92 = vld [vmem:[%s0 + $0x110] sm:$0xff]
    %v93 = vld [vmem:[%s0 + $0x118] sm:$0xff]
    %v94 = vld [vmem:[%s0 + $0x120] sm:$0xff]
    %v95 = vld [vmem:[%s0 + $0x128] sm:$0xff]
    %v96 = vld [vmem:[%s0 + $0x130] sm:$0xff]
    %v97 = vld [vmem:[%s0 + $0x138] sm:$0xff]
    %v98 = vld [vmem:[%s0 + $0x140] sm:$0xff]
    %v99 = vld [vmem:[%s0 + $0x148] sm:$0xff]
    %v100 = vld [vmem:[%s0 + $0x150] sm:$0xff]
    %v101 = vld [vmem:[%s0 + $0x158] sm:$0xff]
    %v102 = vld [vmem:[%s0 + $0x160] sm:$0xff]
    %v103 = vld [vmem:[%s0 + $0x168] sm:$0xff]
    %v104 = vld [vmem:[%s0 + $0x170] sm:$0xff]
    %v105 = vld [vmem:[%s0 + $0x178] sm:$0xff]
    %v106 = vld [vmem:[%s0 + $0x180] sm:$0xff]
    %v107 = vld [vmem:[%s0 + $0x188] sm:$0xff]
    %v108 = vld [vmem:[%s0 + $0x190] sm:$0xff]
    %v109 = vld [vmem:[%s0 + $0x198] sm:$0xff]
    %v110 = vld [vmem:[%s0 + $0x1a0] sm:$0xff]
    %v111 = vld [vmem:[%s0 + $0x1a8] sm:$0xff]
    %v112 = vld [vmem:[%s0 + $0x1b0] sm:$0xff]
    %v113 = vld [vmem:[%s0 + $0x1b8] sm:$0xff]
    %v114 = vld [vmem:[%s0 + $0x1c0] sm:$0xff]
    %v115 = vld [vmem:[%s0 + $0x1c8] sm:$0xff]
    %v116 = vld [vmem:[%s0 + $0x1d0] sm:$0xff]
    %v117 = vld [vmem:[%s0 + $0x1d8] sm:$0xff]
    %v118 = vld [vmem:[%s0 + $0x1e0] sm:$0xff]
    %v119 = vld [vmem:[%s0 + $0x1e8] sm:$0xff]
    %v120 = vld [vmem:[%s0 + $0x1f0] sm:$0xff]
    %v121 = vld [vmem:[%s0 + $0x1f8] sm:$0xff]
    %v122 = vld [vmem:[%s0 + $0x200] sm:$0xff]
    %v123 = vld [vmem:[%s0 + $0x208] sm:$0xff]
    %v124 = vld [vmem:[%s0 + $0x210] sm:$0xff]
    %v125 = vld [vmem:[%s0 + $0x218] sm:$0xff]
    %v126 = vld [vmem:[%s0 + $0x220] sm:$0xff]
    %v127 = vld [vmem:[%s0 + $0x228] sm:$0xff]
    %v128 = vld [vmem:[%s0 + $0x230] sm:$0xff]
    %v129 = vld [vmem:[%s0 + $0x238] sm:$0xff]
    %v130 = vld [vmem:[%s0 + $0x240] sm:$0xff]
    %v131 = vld [vmem:[%s0 + $0x248] sm:$0xff]
    %v132 = vld [vmem:[%s0 + $0x250] sm:$0xff]
    %v133 = vld [vmem:[%s0 + $0x258] sm:$0xff]
    %v134 = vld [vmem:[%s0 + $0x260] sm:$0xff]
    %v135 = vld [vmem:[%s0 + $0x268] sm:$0xff]
    %v136 = vld [vmem:[%s0 + $0x270] sm:$0xff]
    %v137 = vld [vmem:[%s0 + $0x278] sm:$0xff]
    %v138 = vld [vmem:[%s0 + $0x280] sm:$0xff]
    %v139 = vld [vmem:[%s0 + $0x288] sm:$0xff]
    %v140 = vld [vmem:[%s0 + $0x290] sm:$0xff]
    %v141 = vld [vmem:[%s0 + $0x298] sm:$0xff]
    %v142 = vld [vmem:[%s0 + $0x2a0] sm:$0xff]
    %v143 = vld [vmem:[%s0 + $0x2a8] sm:$0xff]
    %v144 = vld [vmem:[%s0 + $0x2b0] sm:$0xff]
    %v145 = vld [vmem:[%s0 + $0x2b8] sm:$0xff]
    %v146 = vld [vmem:[%s0 + $0x2c0] sm:$0xff]
    %v147 = vld [vmem:[%s0 + $0x2c8] sm:$0xff]
    %v148 = vld [vmem:[%s0 + $0x2d0] sm:$0xff]
    %v149 = vld [vmem:[%s0 + $0x2d8] sm:$0xff]
    %v150 = vld [vmem:[%s0 + $0x2e0] sm:$0xff]
    %v151 = vld [vmem:[%s0 + $0x2e8] sm:$0xff]
    %v152 = vld [vmem:[%s0 + $0x2f0] sm:$0xff]
    %v153 = vld [vmem:[%s0 + $0x2f8] sm:$0xff]
    %v154 = vld [vmem:[%s0 + $0x300] sm:$0xff]
    %v155 = vld [vmem:[%s0 + $0x308] sm:$0xff]
    %v156 = vld [vmem:[%s0 + $0x310] sm:$0xff]
    %v157 = vld [vmem:[%s0 + $0x318] sm:$0xff]
    %v158 = vld [vmem:[%s0 + $0x320] sm:$0xff]
    %v159 = vld [vmem:[%s0 + $0x328] sm:$0xff]
    %v160 = vld [vmem:[%s0 + $0x330] sm:$0xff]
    %v161 = vld [vmem:[%s0 + $0x338] sm:$0xff]
    %v162 = vld [vmem:[%s0 + $0x340] sm:$0xff]
    %v163 = vld [vmem:[%s0 + $0x348] sm:$0xff]
    %v164 = vld [vmem:[%s0 + $0x350] sm:$0xff]
    %v165 = vld [vmem:[%s0 + $0x358] sm:$0xff]
    %v166 = vld [vmem:[%s0 + $0x360] sm:$0xff]
    %v167 = vld [vmem:[%s0 + $0x368] sm:$0xff]
    %v168 = vld [vmem:[%s0 + $0x370] sm:$0xff]
    %v169 = vld [vmem:[%s0 + $0x378] sm:$0xff]
    %v170 = vpack.c.bf16 %v65, %v58
    %v171 = vpack.c.bf16 %v66, %v59
    %v172 = vpack.c.bf16 %v67, %v60
    %v173 = vpack.c.bf16 %v68, %v61
    %v174 = vpack.c.bf16 %v69, %v62
    %v175 = vpack.c.bf16 %v70, %v63
    %v176 = vpack.c.bf16 %v71, %v64
    %v177 = vpack.c.bf16 %v79, %v72
    %v178 = vpack.c.bf16 %v80, %v73
    %v179 = vpack.c.bf16 %v81, %v74
    %v180 = vpack.c.bf16 %v82, %v75
    %v181 = vpack.c.bf16 %v83, %v76
    %v182 = vpack.c.bf16 %v84, %v77
    %v183 = vpack.c.bf16 %v85, %v78
    %v184 = vpack.c.bf16 %v93, %v86
    %v185 = vpack.c.bf16 %v94, %v87
    %v186 = vpack.c.bf16 %v95, %v88
    %v187 = vpack.c.bf16 %v96, %v89
    %v188 = vpack.c.bf16 %v97, %v90
    %v189 = vpack.c.bf16 %v98, %v91
    %v190 = vpack.c.bf16 %v99, %v92
    %v191 = vpack.c.bf16 %v107, %v100
    %v192 = vpack.c.bf16 %v108, %v101
    %v193 = vpack.c.bf16 %v109, %v102
    %v194 = vpack.c.bf16 %v110, %v103
    %v195 = vpack.c.bf16 %v111, %v104
    %v196 = vpack.c.bf16 %v112, %v105
    %v197 = vpack.c.bf16 %v113, %v106
    %v198 = vpack.c.bf16 %v121, %v114
    %v199 = vpack.c.bf16 %v122, %v115
    %v200 = vpack.c.bf16 %v123, %v116
    %v201 = vpack.c.bf16 %v124, %v117
    %v202 = vpack.c.bf16 %v125, %v118
    %v203 = vpack.c.bf16 %v126, %v119
    %v204 = vpack.c.bf16 %v127, %v120
    %v205 = vpack.c.bf16 %v135, %v128
    %v206 = vpack.c.bf16 %v136, %v129
    %v207 = vpack.c.bf16 %v137, %v130
    %v208 = vpack.c.bf16 %v138, %v131
    %v209 = vpack.c.bf16 %v139, %v132
    %v210 = vpack.c.bf16 %v140, %v133
    %v211 = vpack.c.bf16 %v141, %v134
    %v212 = vpack.c.bf16 %v149, %v142
    %v213 = vpack.c.bf16 %v150, %v143
    %v214 = vpack.c.bf16 %v151, %v144
    %v215 = vpack.c.bf16 %v152, %v145
    %v216 = vpack.c.bf16 %v153, %v146
    %v217 = vpack.c.bf16 %v154, %v147
    %v218 = vpack.c.bf16 %v155, %v148
    %v219 = vpack.c.bf16 %v163, %v156
    %v220 = vpack.c.bf16 %v164, %v157
    %v221 = vpack.c.bf16 %v165, %v158
    %v222 = vpack.c.bf16 %v166, %v159
    %v223 = vpack.c.bf16 %v167, %v160
    %v224 = vpack.c.bf16 %v168, %v161
    %v225 = vpack.c.bf16 %v169, %v162
    %v226 = vld [vmem:[#allocation2] sm:$0xff]
    %v227 = vld [vmem:[#allocation2 + $0x8] sm:$0xff]
    %v228 = vld [vmem:[#allocation2 + $0x10] sm:$0xff]
    %v229 = vld [vmem:[#allocation2 + $0x18] sm:$0xff]
    %v230 = vld [vmem:[#allocation2 + $0x20] sm:$0xf]
    %v231 = vld [vmem:[#allocation2 + $0x24] sm:$0xff]
    %v232 = vld [vmem:[#allocation2 + $0x2c] sm:$0xff]
    %v233 = vld [vmem:[#allocation2 + $0x34] sm:$0xff]
    %v234 = vld [vmem:[#allocation2 + $0x3c] sm:$0xff]
    %v235 = vld [vmem:[#allocation2 + $0x44] sm:$0xf]
    %v236 = vld [vmem:[#allocation2 + $0x48] sm:$0xff]
    %v237 = vld [vmem:[#allocation2 + $0x50] sm:$0xff]
    %v238 = vld [vmem:[#allocation2 + $0x58] sm:$0xff]
    %v239 = vld [vmem:[#allocation2 + $0x60] sm:$0xff]
    %v240 = vld [vmem:[#allocation2 + $0x68] sm:$0xf]
    %v241 = vld [vmem:[#allocation2 + $0x6c] sm:$0xff]
    %v242 = vld [vmem:[#allocation2 + $0x74] sm:$0xff]
    %v243 = vld [vmem:[#allocation2 + $0x7c] sm:$0xff]
    %v244 = vld [vmem:[#allocation2 + $0x84] sm:$0xff]
    %v245 = vld [vmem:[#allocation2 + $0x8c] sm:$0xf]
    %v246 = vld [vmem:[#allocation2 + $0x90] sm:$0xff]
    %v247 = vld [vmem:[#allocation2 + $0x98] sm:$0xff]
    %v248 = vld [vmem:[#allocation2 + $0xa0] sm:$0xff]
    %v249 = vld [vmem:[#allocation2 + $0xa8] sm:$0xff]
    %v250 = vld [vmem:[#allocation2 + $0xb0] sm:$0xf]
    %v251 = vld [vmem:[#allocation2 + $0xb4] sm:$0xff]
    %v252 = vld [vmem:[#allocation2 + $0xbc] sm:$0xff]
    %v253 = vld [vmem:[#allocation2 + $0xc4] sm:$0xff]
    %v254 = vld [vmem:[#allocation2 + $0xcc] sm:$0xff]
    %v255 = vld [vmem:[#allocation2 + $0xd4] sm:$0xf]
    %v256 = vld [vmem:[#allocation2 + $0xd8] sm:$0xff]
    %v257 = vld [vmem:[#allocation2 + $0xe0] sm:$0xff]
    %v258 = vld [vmem:[#allocation2 + $0xe8] sm:$0xff]
    %v259 = vld [vmem:[#allocation2 + $0xf0] sm:$0xff]
    %v260 = vld [vmem:[#allocation2 + $0xf8] sm:$0xf]
    %v261 = vld [vmem:[#allocation2 + $0xfc] sm:$0xff]
    %v262 = vld [vmem:[#allocation2 + $0x104] sm:$0xff]
    %v263 = vld [vmem:[#allocation2 + $0x10c] sm:$0xff]
    %v264 = vld [vmem:[#allocation2 + $0x114] sm:$0xff]
    %v265 = vld [vmem:[#allocation2 + $0x11c] sm:$0xf]
    %v266 = vld [vmem:[#allocation2 + $0x120] sm:$0xff]
    %v267 = vld [vmem:[#allocation2 + $0x128] sm:$0xff]
    %v268 = vld [vmem:[#allocation2 + $0x130] sm:$0xff]
    %v269 = vld [vmem:[#allocation2 + $0x138] sm:$0xff]
    %v270 = vld [vmem:[#allocation2 + $0x140] sm:$0xf]
    %v271 = vld [vmem:[#allocation2 + $0x144] sm:$0xff]
    %v272 = vld [vmem:[#allocation2 + $0x14c] sm:$0xff]
    %v273 = vld [vmem:[#allocation2 + $0x154] sm:$0xff]
    %v274 = vld [vmem:[#allocation2 + $0x15c] sm:$0xff]
    %v275 = vld [vmem:[#allocation2 + $0x164] sm:$0xf]
    %v276 = vld [vmem:[#allocation2 + $0x168] sm:$0xff]
    %v277 = vld [vmem:[#allocation2 + $0x170] sm:$0xff]
    %v278 = vld [vmem:[#allocation2 + $0x178] sm:$0xff]
    %v279 = vld [vmem:[#allocation2 + $0x180] sm:$0xff]
    %v280 = vld [vmem:[#allocation2 + $0x188] sm:$0xf]
    %v281 = vld [vmem:[#allocation2 + $0x18c] sm:$0xff]
    %v282 = vld [vmem:[#allocation2 + $0x194] sm:$0xff]
    %v283 = vld [vmem:[#allocation2 + $0x19c] sm:$0xff]
    %v284 = vld [vmem:[#allocation2 + $0x1a4] sm:$0xff]
    %v285 = vld [vmem:[#allocation2 + $0x1ac] sm:$0xf]
    %v286 = vld [vmem:[#allocation2 + $0x1b0] sm:$0xff]
    %v287 = vld [vmem:[#allocation2 + $0x1b8] sm:$0xff]
    %v288 = vld [vmem:[#allocation2 + $0x1c0] sm:$0xff]
    %v289 = vld [vmem:[#allocation2 + $0x1c8] sm:$0xff]
    %v290 = vld [vmem:[#allocation2 + $0x1d0] sm:$0xf]
    %v291 = vld [vmem:[#allocation2 + $0x1d4] sm:$0xff]
    %v292 = vld [vmem:[#allocation2 + $0x1dc] sm:$0xff]
    %v293 = vld [vmem:[#allocation2 + $0x1e4] sm:$0xff]
    %v294 = vld [vmem:[#allocation2 + $0x1ec] sm:$0xff]
    %v295 = vld [vmem:[#allocation2 + $0x1f4] sm:$0xf]
    %v296 = vld [vmem:[#allocation2 + $0x1f8] sm:$0xff]
    %v297 = vld [vmem:[#allocation2 + $0x200] sm:$0xff]
    %v298 = vld [vmem:[#allocation2 + $0x208] sm:$0xff]
    %v299 = vld [vmem:[#allocation2 + $0x210] sm:$0xff]
    %v300 = vld [vmem:[#allocation2 + $0x218] sm:$0xf]
    %v301 = vld [vmem:[#allocation2 + $0x21c] sm:$0xff]
    %v302 = vld [vmem:[#allocation2 + $0x224] sm:$0xff]
    %v303 = vld [vmem:[#allocation2 + $0x22c] sm:$0xff]
    %v304 = vld [vmem:[#allocation2 + $0x234] sm:$0xff]
    %v305 = vld [vmem:[#allocation2 + $0x23c] sm:$0xf]
    %v306 = vld [vmem:[#allocation2 + $0x240] sm:$0xff]
    %v307 = vld [vmem:[#allocation2 + $0x248] sm:$0xff]
    %v308 = vld [vmem:[#allocation2 + $0x250] sm:$0xff]
    %v309 = vld [vmem:[#allocation2 + $0x258] sm:$0xff]
    %v310 = vld [vmem:[#allocation2 + $0x260] sm:$0xf]
    %v311 = vld [vmem:[#allocation2 + $0x264] sm:$0xff]
    %v312 = vld [vmem:[#allocation2 + $0x26c] sm:$0xff]
    %v313 = vld [vmem:[#allocation2 + $0x274] sm:$0xff]
    %v314 = vld [vmem:[#allocation2 + $0x27c] sm:$0xff]
    %v315 = vld [vmem:[#allocation2 + $0x284] sm:$0xf]
    %v316 = vld [vmem:[#allocation2 + $0x288] sm:$0xff]
    %v317 = vld [vmem:[#allocation2 + $0x290] sm:$0xff]
    %v318 = vld [vmem:[#allocation2 + $0x298] sm:$0xff]
    %v319 = vld [vmem:[#allocation2 + $0x2a0] sm:$0xff]
    %v320 = vld [vmem:[#allocation2 + $0x2a8] sm:$0xf]
    %v321 = vld [vmem:[#allocation2 + $0x2ac] sm:$0xff]
    %v322 = vld [vmem:[#allocation2 + $0x2b4] sm:$0xff]
    %v323 = vld [vmem:[#allocation2 + $0x2bc] sm:$0xff]
    %v324 = vld [vmem:[#allocation2 + $0x2c4] sm:$0xff]
    %v325 = vld [vmem:[#allocation2 + $0x2cc] sm:$0xf]
    %v326 = vld [vmem:[#allocation2 + $0x2d0] sm:$0xff]
    %v327 = vld [vmem:[#allocation2 + $0x2d8] sm:$0xff]
    %v328 = vld [vmem:[#allocation2 + $0x2e0] sm:$0xff]
    %v329 = vld [vmem:[#allocation2 + $0x2e8] sm:$0xff]
    %v330 = vld [vmem:[#allocation2 + $0x2f0] sm:$0xf]
    %v331 = vld [vmem:[#allocation2 + $0x2f4] sm:$0xff]
    %v332 = vld [vmem:[#allocation2 + $0x2fc] sm:$0xff]
    %v333 = vld [vmem:[#allocation2 + $0x304] sm:$0xff]
    %v334 = vld [vmem:[#allocation2 + $0x30c] sm:$0xff]
    %v335 = vld [vmem:[#allocation2 + $0x314] sm:$0xf]
    %v336 = vld [vmem:[#allocation2 + $0x318] sm:$0xff]
    %v337 = vld [vmem:[#allocation2 + $0x320] sm:$0xff]
    %v338 = vld [vmem:[#allocation2 + $0x328] sm:$0xff]
    %v339 = vld [vmem:[#allocation2 + $0x330] sm:$0xff]
    %v340 = vld [vmem:[#allocation2 + $0x338] sm:$0xf]
    %v341 = vld [vmem:[#allocation2 + $0x33c] sm:$0xff]
    %v342 = vld [vmem:[#allocation2 + $0x344] sm:$0xff]
    %v343 = vld [vmem:[#allocation2 + $0x34c] sm:$0xff]
    %v344 = vld [vmem:[#allocation2 + $0x354] sm:$0xff]
    %v345 = vld [vmem:[#allocation2 + $0x35c] sm:$0xf]
    %v346 = vld [vmem:[#allocation2 + $0x360] sm:$0xff]
    %v347 = vld [vmem:[#allocation2 + $0x368] sm:$0xff]
    %v348 = vld [vmem:[#allocation2 + $0x370] sm:$0xff]
    %v349 = vld [vmem:[#allocation2 + $0x378] sm:$0xff]
    %v350 = vld [vmem:[#allocation2 + $0x380] sm:$0xf]
    %v351 = vld [vmem:[#allocation2 + $0x384] sm:$0xff]
    %v352 = vld [vmem:[#allocation2 + $0x38c] sm:$0xff]
    %v353 = vld [vmem:[#allocation2 + $0x394] sm:$0xff]
    %v354 = vld [vmem:[#allocation2 + $0x39c] sm:$0xff]
    %v355 = vld [vmem:[#allocation2 + $0x3a4] sm:$0xf]
    %v356 = vld [vmem:[#allocation2 + $0x3a8] sm:$0xff]
    %v357 = vld [vmem:[#allocation2 + $0x3b0] sm:$0xff]
    %v358 = vld [vmem:[#allocation2 + $0x3b8] sm:$0xff]
    %v359 = vld [vmem:[#allocation2 + $0x3c0] sm:$0xff]
    %v360 = vld [vmem:[#allocation2 + $0x3c8] sm:$0xf]
    %v361 = vld [vmem:[#allocation2 + $0x3cc] sm:$0xff]
    %v362 = vld [vmem:[#allocation2 + $0x3d4] sm:$0xff]
    %v363 = vld [vmem:[#allocation2 + $0x3dc] sm:$0xff]
    %v364 = vld [vmem:[#allocation2 + $0x3e4] sm:$0xff]
    %v365 = vld [vmem:[#allocation2 + $0x3ec] sm:$0xf]
    %v366 = vld [vmem:[#allocation2 + $0x3f0] sm:$0xff]
    %v367 = vld [vmem:[#allocation2 + $0x3f8] sm:$0xff]
    %v368 = vld [vmem:[#allocation2 + $0x400] sm:$0xff]
    %v369 = vld [vmem:[#allocation2 + $0x408] sm:$0xff]
    %v370 = vld [vmem:[#allocation2 + $0x410] sm:$0xf]
    %v371 = vld [vmem:[#allocation2 + $0x414] sm:$0xff]
    %v372 = vld [vmem:[#allocation2 + $0x41c] sm:$0xff]
    %v373 = vld [vmem:[#allocation2 + $0x424] sm:$0xff]
    %v374 = vld [vmem:[#allocation2 + $0x42c] sm:$0xff]
    %v375 = vld [vmem:[#allocation2 + $0x434] sm:$0xf]
    %v376 = vld [vmem:[#allocation2 + $0x438] sm:$0xff]
    %v377 = vld [vmem:[#allocation2 + $0x440] sm:$0xff]
    %v378 = vld [vmem:[#allocation2 + $0x448] sm:$0xff]
    %v379 = vld [vmem:[#allocation2 + $0x450] sm:$0xff]
    %v380 = vld [vmem:[#allocation2 + $0x458] sm:$0xf]
    %v381 = vld [vmem:[#allocation2 + $0x45c] sm:$0xff]
    %v382 = vld [vmem:[#allocation2 + $0x464] sm:$0xff]
    %v383 = vld [vmem:[#allocation2 + $0x46c] sm:$0xff]
    %v384 = vld [vmem:[#allocation2 + $0x474] sm:$0xff]
    %v385 = vld [vmem:[#allocation2 + $0x47c] sm:$0xf]
    %v386 = vld [vmem:[#allocation2 + $0x480] sm:$0xff]
    %v387 = vld [vmem:[#allocation2 + $0x488] sm:$0xff]
    %v388 = vld [vmem:[#allocation2 + $0x490] sm:$0xff]
    %v389 = vld [vmem:[#allocation2 + $0x498] sm:$0xff]
    %v390 = vld [vmem:[#allocation2 + $0x4a0] sm:$0xf]
    %v391 = vld [vmem:[#allocation2 + $0x4a4] sm:$0xff]
    %v392 = vld [vmem:[#allocation2 + $0x4ac] sm:$0xff]
    %v393 = vld [vmem:[#allocation2 + $0x4b4] sm:$0xff]
    %v394 = vld [vmem:[#allocation2 + $0x4bc] sm:$0xff]
    %v395 = vld [vmem:[#allocation2 + $0x4c4] sm:$0xf]
    %v396 = vld [vmem:[#allocation2 + $0x4c8] sm:$0xff]
    %v397 = vld [vmem:[#allocation2 + $0x4d0] sm:$0xff]
    %v398 = vld [vmem:[#allocation2 + $0x4d8] sm:$0xff]
    %v399 = vld [vmem:[#allocation2 + $0x4e0] sm:$0xff]
    %v400 = vld [vmem:[#allocation2 + $0x4e8] sm:$0xf]
    %v401 = vld [vmem:[#allocation2 + $0x4ec] sm:$0xff]
    %v402 = vld [vmem:[#allocation2 + $0x4f4] sm:$0xff]
    %v403 = vld [vmem:[#allocation2 + $0x4fc] sm:$0xff]
    %v404 = vld [vmem:[#allocation2 + $0x504] sm:$0xff]
    %v405 = vld [vmem:[#allocation2 + $0x50c] sm:$0xf]
    %v406 = vld [vmem:[#allocation2 + $0x510] sm:$0xff]
    %v407 = vld [vmem:[#allocation2 + $0x518] sm:$0xff]
    %v408 = vld [vmem:[#allocation2 + $0x520] sm:$0xff]
    %v409 = vld [vmem:[#allocation2 + $0x528] sm:$0xff]
    %v410 = vld [vmem:[#allocation2 + $0x530] sm:$0xf]
    %v411 = vld [vmem:[#allocation2 + $0x534] sm:$0xff]
    %v412 = vld [vmem:[#allocation2 + $0x53c] sm:$0xff]
    %v413 = vld [vmem:[#allocation2 + $0x544] sm:$0xff]
    %v414 = vld [vmem:[#allocation2 + $0x54c] sm:$0xff]
    %v415 = vld [vmem:[#allocation2 + $0x554] sm:$0xf]
    %v416 = vld [vmem:[#allocation2 + $0x558] sm:$0xff]
    %v417 = vld [vmem:[#allocation2 + $0x560] sm:$0xff]
    %v418 = vld [vmem:[#allocation2 + $0x568] sm:$0xff]
    %v419 = vld [vmem:[#allocation2 + $0x570] sm:$0xff]
    %v420 = vld [vmem:[#allocation2 + $0x578] sm:$0xf]
    %v421 = vld [vmem:[#allocation2 + $0x57c] sm:$0xff]
    %v422 = vld [vmem:[#allocation2 + $0x584] sm:$0xff]
    %v423 = vld [vmem:[#allocation2 + $0x58c] sm:$0xff]
    %v424 = vld [vmem:[#allocation2 + $0x594] sm:$0xff]
    %v425 = vld [vmem:[#allocation2 + $0x59c] sm:$0xf]
    %v426 = vld [vmem:[#allocation2 + $0x5a0] sm:$0xff]
    %v427 = vld [vmem:[#allocation2 + $0x5a8] sm:$0xff]
    %v428 = vld [vmem:[#allocation2 + $0x5b0] sm:$0xff]
    %v429 = vld [vmem:[#allocation2 + $0x5b8] sm:$0xff]
    %v430 = vld [vmem:[#allocation2 + $0x5c0] sm:$0xf]
    %v431 = vld [vmem:[#allocation2 + $0x5c4] sm:$0xff]
    %v432 = vld [vmem:[#allocation2 + $0x5cc] sm:$0xff]
    %v433 = vld [vmem:[#allocation2 + $0x5d4] sm:$0xff]
    %v434 = vld [vmem:[#allocation2 + $0x5dc] sm:$0xff]
    %v435 = vld [vmem:[#allocation2 + $0x5e4] sm:$0xf]
    %v436 = vld [vmem:[#allocation2 + $0x5e8] sm:$0xff]
    %v437 = vld [vmem:[#allocation2 + $0x5f0] sm:$0xff]
    %v438 = vld [vmem:[#allocation2 + $0x5f8] sm:$0xff]
    %v439 = vld [vmem:[#allocation2 + $0x600] sm:$0xff]
    %v440 = vld [vmem:[#allocation2 + $0x608] sm:$0xf]
    %v441 = vld [vmem:[#allocation2 + $0x60c] sm:$0xff]
    %v442 = vld [vmem:[#allocation2 + $0x614] sm:$0xff]
    %v443 = vld [vmem:[#allocation2 + $0x61c] sm:$0xff]
    %v444 = vld [vmem:[#allocation2 + $0x624] sm:$0xff]
    %v445 = vld [vmem:[#allocation2 + $0x62c] sm:$0xf]
    %v446 = vld [vmem:[#allocation2 + $0x630] sm:$0xff]
    %v447 = vld [vmem:[#allocation2 + $0x638] sm:$0xff]
    %v448 = vld [vmem:[#allocation2 + $0x640] sm:$0xff]
    %v449 = vld [vmem:[#allocation2 + $0x648] sm:$0xff]
    %v450 = vld [vmem:[#allocation2 + $0x650] sm:$0xf]
    %v451 = vld [vmem:[#allocation2 + $0x654] sm:$0xff]
    %v452 = vld [vmem:[#allocation2 + $0x65c] sm:$0xff]
    %v453 = vld [vmem:[#allocation2 + $0x664] sm:$0xff]
    %v454 = vld [vmem:[#allocation2 + $0x66c] sm:$0xff]
    %v455 = vld [vmem:[#allocation2 + $0x674] sm:$0xf]
    %v456 = vld [vmem:[#allocation2 + $0x678] sm:$0xff]
    %v457 = vld [vmem:[#allocation2 + $0x680] sm:$0xff]
    %v458 = vld [vmem:[#allocation2 + $0x688] sm:$0xff]
    %v459 = vld [vmem:[#allocation2 + $0x690] sm:$0xff]
    %v460 = vld [vmem:[#allocation2 + $0x698] sm:$0xf]
    %v461 = vld [vmem:[#allocation2 + $0x69c] sm:$0xff]
    %v462 = vld [vmem:[#allocation2 + $0x6a4] sm:$0xff]
    %v463 = vld [vmem:[#allocation2 + $0x6ac] sm:$0xff]
    %v464 = vld [vmem:[#allocation2 + $0x6b4] sm:$0xff]
    %v465 = vld [vmem:[#allocation2 + $0x6bc] sm:$0xf]
    %v466 = vld [vmem:[#allocation2 + $0x6c0] sm:$0xff]
    %v467 = vld [vmem:[#allocation2 + $0x6c8] sm:$0xff]
    %v468 = vld [vmem:[#allocation2 + $0x6d0] sm:$0xff]
    %v469 = vld [vmem:[#allocation2 + $0x6d8] sm:$0xff]
    %v470 = vld [vmem:[#allocation2 + $0x6e0] sm:$0xf]
    %v471 = vld [vmem:[#allocation2 + $0x6e4] sm:$0xff]
    %v472 = vld [vmem:[#allocation2 + $0x6ec] sm:$0xff]
    %v473 = vld [vmem:[#allocation2 + $0x6f4] sm:$0xff]
    %v474 = vld [vmem:[#allocation2 + $0x6fc] sm:$0xff]
    %v475 = vld [vmem:[#allocation2 + $0x704] sm:$0xf]
    %v476 = vld [vmem:[#allocation2 + $0x708] sm:$0xff]
    %v477 = vld [vmem:[#allocation2 + $0x710] sm:$0xff]
    %v478 = vld [vmem:[#allocation2 + $0x718] sm:$0xff]
    %v479 = vld [vmem:[#allocation2 + $0x720] sm:$0xff]
    %v480 = vld [vmem:[#allocation2 + $0x728] sm:$0xf]
    %v481 = vld [vmem:[#allocation2 + $0x72c] sm:$0xff]
    %v482 = vld [vmem:[#allocation2 + $0x734] sm:$0xff]
    %v483 = vld [vmem:[#allocation2 + $0x73c] sm:$0xff]
    %v484 = vld [vmem:[#allocation2 + $0x744] sm:$0xff]
    %v485 = vld [vmem:[#allocation2 + $0x74c] sm:$0xf]
    %v486 = vld [vmem:[#allocation2 + $0x750] sm:$0xff]
    %v487 = vld [vmem:[#allocation2 + $0x758] sm:$0xff]
    %v488 = vld [vmem:[#allocation2 + $0x760] sm:$0xff]
    %v489 = vld [vmem:[#allocation2 + $0x768] sm:$0xff]
    %v490 = vld [vmem:[#allocation2 + $0x770] sm:$0xf]
    %v491 = vld [vmem:[#allocation2 + $0x774] sm:$0xff]
    %v492 = vld [vmem:[#allocation2 + $0x77c] sm:$0xff]
    %v493 = vld [vmem:[#allocation2 + $0x784] sm:$0xff]
    %v494 = vld [vmem:[#allocation2 + $0x78c] sm:$0xff]
    %v495 = vld [vmem:[#allocation2 + $0x794] sm:$0xf]
    %v496 = vld [vmem:[#allocation2 + $0x798] sm:$0xff]
    %v497 = vld [vmem:[#allocation2 + $0x7a0] sm:$0xff]
    %v498 = vld [vmem:[#allocation2 + $0x7a8] sm:$0xff]
    %v499 = vld [vmem:[#allocation2 + $0x7b0] sm:$0xff]
    %v500 = vld [vmem:[#allocation2 + $0x7b8] sm:$0xf]
    %v501 = vld [vmem:[#allocation2 + $0x7bc] sm:$0xff]
    %v502 = vld [vmem:[#allocation2 + $0x7c4] sm:$0xff]
    %v503 = vld [vmem:[#allocation2 + $0x7cc] sm:$0xff]
    %v504 = vld [vmem:[#allocation2 + $0x7d4] sm:$0xff]
    %v505 = vld [vmem:[#allocation2 + $0x7dc] sm:$0xf]
    %v506 = vld [vmem:[#allocation2 + $0x7e0] sm:$0xff]
    %v507 = vld [vmem:[#allocation2 + $0x7e8] sm:$0xff]
    %v508 = vld [vmem:[#allocation2 + $0x7f0] sm:$0xff]
    %v509 = vld [vmem:[#allocation2 + $0x7f8] sm:$0xff]
    %v510 = vld [vmem:[#allocation2 + $0x800] sm:$0xf]
    %v511 = vld [vmem:[#allocation2 + $0x804] sm:$0xff]
    %v512 = vld [vmem:[#allocation2 + $0x80c] sm:$0xff]
    %v513 = vld [vmem:[#allocation2 + $0x814] sm:$0xff]
    %v514 = vld [vmem:[#allocation2 + $0x81c] sm:$0xff]
    %v515 = vld [vmem:[#allocation2 + $0x824] sm:$0xf]
    %v516 = vld [vmem:[#allocation2 + $0x828] sm:$0xff]
    %v517 = vld [vmem:[#allocation2 + $0x830] sm:$0xff]
    %v518 = vld [vmem:[#allocation2 + $0x838] sm:$0xff]
    %v519 = vld [vmem:[#allocation2 + $0x840] sm:$0xff]
    %v520 = vld [vmem:[#allocation2 + $0x848] sm:$0xf]
    %v521 = vld [vmem:[#allocation2 + $0x84c] sm:$0xff]
    %v522 = vld [vmem:[#allocation2 + $0x854] sm:$0xff]
    %v523 = vld [vmem:[#allocation2 + $0x85c] sm:$0xff]
    %v524 = vld [vmem:[#allocation2 + $0x864] sm:$0xff]
    %v525 = vld [vmem:[#allocation2 + $0x86c] sm:$0xf]
    %v526 = vld [vmem:[#allocation2 + $0x870] sm:$0xff]
    %v527 = vld [vmem:[#allocation2 + $0x878] sm:$0xff]
    %v528 = vld [vmem:[#allocation2 + $0x880] sm:$0xff]
    %v529 = vld [vmem:[#allocation2 + $0x888] sm:$0xff]
    %v530 = vld [vmem:[#allocation2 + $0x890] sm:$0xf]
    %v531 = vld [vmem:[#allocation2 + $0x894] sm:$0xff]
    %v532 = vld [vmem:[#allocation2 + $0x89c] sm:$0xff]
    %v533 = vld [vmem:[#allocation2 + $0x8a4] sm:$0xff]
    %v534 = vld [vmem:[#allocation2 + $0x8ac] sm:$0xff]
    %v535 = vld [vmem:[#allocation2 + $0x8b4] sm:$0xf]
    %v536 = vld [vmem:[#allocation2 + $0x8b8] sm:$0xff]
    %v537 = vld [vmem:[#allocation2 + $0x8c0] sm:$0xff]
    %v538 = vld [vmem:[#allocation2 + $0x8c8] sm:$0xff]
    %v539 = vld [vmem:[#allocation2 + $0x8d0] sm:$0xff]
    %v540 = vld [vmem:[#allocation2 + $0x8d8] sm:$0xf]
    %v541 = vld [vmem:[#allocation2 + $0x8dc] sm:$0xff]
    %v542 = vld [vmem:[#allocation2 + $0x8e4] sm:$0xff]
    %v543 = vld [vmem:[#allocation2 + $0x8ec] sm:$0xff]
    %v544 = vld [vmem:[#allocation2 + $0x8f4] sm:$0xff]
    %v545 = vld [vmem:[#allocation2 + $0x8fc] sm:$0xf]
    %v546 = vld [vmem:[#allocation2 + $0x900] sm:$0xff]
    %v547 = vld [vmem:[#allocation2 + $0x908] sm:$0xff]
    %v548 = vld [vmem:[#allocation2 + $0x910] sm:$0xff]
    %v549 = vld [vmem:[#allocation2 + $0x918] sm:$0xff]
    %v550 = vld [vmem:[#allocation2 + $0x920] sm:$0xf]
    %v551 = vld [vmem:[#allocation2 + $0x924] sm:$0xff]
    %v552 = vld [vmem:[#allocation2 + $0x92c] sm:$0xff]
    %v553 = vld [vmem:[#allocation2 + $0x934] sm:$0xff]
    %v554 = vld [vmem:[#allocation2 + $0x93c] sm:$0xff]
    %v555 = vld [vmem:[#allocation2 + $0x944] sm:$0xf]
    %v556 = vld [vmem:[#allocation2 + $0x948] sm:$0xff]
    %v557 = vld [vmem:[#allocation2 + $0x950] sm:$0xff]
    %v558 = vld [vmem:[#allocation2 + $0x958] sm:$0xff]
    %v559 = vld [vmem:[#allocation2 + $0x960] sm:$0xff]
    %v560 = vld [vmem:[#allocation2 + $0x968] sm:$0xf]
    %v561 = vld [vmem:[#allocation2 + $0x96c] sm:$0xff]
    %v562 = vld [vmem:[#allocation2 + $0x974] sm:$0xff]
    %v563 = vld [vmem:[#allocation2 + $0x97c] sm:$0xff]
    %v564 = vld [vmem:[#allocation2 + $0x984] sm:$0xff]
    %v565 = vld [vmem:[#allocation2 + $0x98c] sm:$0xf]
    %v566 = vld [vmem:[#allocation2 + $0x990] sm:$0xff]
    %v567 = vld [vmem:[#allocation2 + $0x998] sm:$0xff]
    %v568 = vld [vmem:[#allocation2 + $0x9a0] sm:$0xff]
    %v569 = vld [vmem:[#allocation2 + $0x9a8] sm:$0xff]
    %v570 = vld [vmem:[#allocation2 + $0x9b0] sm:$0xf]
    %v571 = vld [vmem:[#allocation2 + $0x9b4] sm:$0xff]
    %v572 = vld [vmem:[#allocation2 + $0x9bc] sm:$0xff]
    %v573 = vld [vmem:[#allocation2 + $0x9c4] sm:$0xff]
    %v574 = vld [vmem:[#allocation2 + $0x9cc] sm:$0xff]
    %v575 = vld [vmem:[#allocation2 + $0x9d4] sm:$0xf]
    %v576 = vld [vmem:[#allocation2 + $0x9d8] sm:$0xff]
    %v577 = vld [vmem:[#allocation2 + $0x9e0] sm:$0xff]
    %v578 = vld [vmem:[#allocation2 + $0x9e8] sm:$0xff]
    %v579 = vld [vmem:[#allocation2 + $0x9f0] sm:$0xff]
    %v580 = vld [vmem:[#allocation2 + $0x9f8] sm:$0xf]
    %v581 = vld [vmem:[#allocation2 + $0x9fc] sm:$0xff]
    %v582 = vld [vmem:[#allocation2 + $0xa04] sm:$0xff]
    %v583 = vld [vmem:[#allocation2 + $0xa0c] sm:$0xff]
    %v584 = vld [vmem:[#allocation2 + $0xa14] sm:$0xff]
    %v585 = vld [vmem:[#allocation2 + $0xa1c] sm:$0xf]
    %v586 = vld [vmem:[#allocation2 + $0xa20] sm:$0xff]
    %v587 = vld [vmem:[#allocation2 + $0xa28] sm:$0xff]
    %v588 = vld [vmem:[#allocation2 + $0xa30] sm:$0xff]
    %v589 = vld [vmem:[#allocation2 + $0xa38] sm:$0xff]
    %v590 = vld [vmem:[#allocation2 + $0xa40] sm:$0xf]
    %v591 = vld [vmem:[#allocation2 + $0xa44] sm:$0xff]
    %v592 = vld [vmem:[#allocation2 + $0xa4c] sm:$0xff]
    %v593 = vld [vmem:[#allocation2 + $0xa54] sm:$0xff]
    %v594 = vld [vmem:[#allocation2 + $0xa5c] sm:$0xff]
    %v595 = vld [vmem:[#allocation2 + $0xa64] sm:$0xf]
    %v596 = vld [vmem:[#allocation2 + $0xa68] sm:$0xff]
    %v597 = vld [vmem:[#allocation2 + $0xa70] sm:$0xff]
    %v598 = vld [vmem:[#allocation2 + $0xa78] sm:$0xff]
    %v599 = vld [vmem:[#allocation2 + $0xa80] sm:$0xff]
    %v600 = vld [vmem:[#allocation2 + $0xa88] sm:$0xf]
    %v601 = vld [vmem:[#allocation2 + $0xa8c] sm:$0xff]
    %v602 = vld [vmem:[#allocation2 + $0xa94] sm:$0xff]
    %v603 = vld [vmem:[#allocation2 + $0xa9c] sm:$0xff]
    %v604 = vld [vmem:[#allocation2 + $0xaa4] sm:$0xff]
    %v605 = vld [vmem:[#allocation2 + $0xaac] sm:$0xf]
    %v606 = vld [vmem:[#allocation2 + $0xab0] sm:$0xff]
    %v607 = vld [vmem:[#allocation2 + $0xab8] sm:$0xff]
    %v608 = vld [vmem:[#allocation2 + $0xac0] sm:$0xff]
    %v609 = vld [vmem:[#allocation2 + $0xac8] sm:$0xff]
    %v610 = vld [vmem:[#allocation2 + $0xad0] sm:$0xf]
    %v611 = vld [vmem:[#allocation2 + $0xad4] sm:$0xff]
    %v612 = vld [vmem:[#allocation2 + $0xadc] sm:$0xff]
    %v613 = vld [vmem:[#allocation2 + $0xae4] sm:$0xff]
    %v614 = vld [vmem:[#allocation2 + $0xaec] sm:$0xff]
    %v615 = vld [vmem:[#allocation2 + $0xaf4] sm:$0xf]
    %v616 = vld [vmem:[#allocation2 + $0xaf8] sm:$0xff]
    %v617 = vld [vmem:[#allocation2 + $0xb00] sm:$0xff]
    %v618 = vld [vmem:[#allocation2 + $0xb08] sm:$0xff]
    %v619 = vld [vmem:[#allocation2 + $0xb10] sm:$0xff]
    %v620 = vld [vmem:[#allocation2 + $0xb18] sm:$0xf]
    %v621 = vld [vmem:[#allocation2 + $0xb1c] sm:$0xff]
    %v622 = vld [vmem:[#allocation2 + $0xb24] sm:$0xff]
    %v623 = vld [vmem:[#allocation2 + $0xb2c] sm:$0xff]
    %v624 = vld [vmem:[#allocation2 + $0xb34] sm:$0xff]
    %v625 = vld [vmem:[#allocation2 + $0xb3c] sm:$0xf]
    %v626 = vld [vmem:[#allocation2 + $0xb40] sm:$0xff]
    %v627 = vld [vmem:[#allocation2 + $0xb48] sm:$0xff]
    %v628 = vld [vmem:[#allocation2 + $0xb50] sm:$0xff]
    %v629 = vld [vmem:[#allocation2 + $0xb58] sm:$0xff]
    %v630 = vld [vmem:[#allocation2 + $0xb60] sm:$0xf]
    %v631 = vld [vmem:[#allocation2 + $0xb64] sm:$0xff]
    %v632 = vld [vmem:[#allocation2 + $0xb6c] sm:$0xff]
    %v633 = vld [vmem:[#allocation2 + $0xb74] sm:$0xff]
    %v634 = vld [vmem:[#allocation2 + $0xb7c] sm:$0xff]
    %v635 = vld [vmem:[#allocation2 + $0xb84] sm:$0xf]
    %v636 = vld [vmem:[#allocation2 + $0xb88] sm:$0xff]
    %v637 = vld [vmem:[#allocation2 + $0xb90] sm:$0xff]
    %v638 = vld [vmem:[#allocation2 + $0xb98] sm:$0xff]
    %v639 = vld [vmem:[#allocation2 + $0xba0] sm:$0xff]
    %v640 = vld [vmem:[#allocation2 + $0xba8] sm:$0xf]
    %v641 = vld [vmem:[#allocation2 + $0xbac] sm:$0xff]
    %v642 = vld [vmem:[#allocation2 + $0xbb4] sm:$0xff]
    %v643 = vld [vmem:[#allocation2 + $0xbbc] sm:$0xff]
    %v644 = vld [vmem:[#allocation2 + $0xbc4] sm:$0xff]
    %v645 = vld [vmem:[#allocation2 + $0xbcc] sm:$0xf]
    %v646 = vld [vmem:[#allocation2 + $0xbd0] sm:$0xff]
    %v647 = vld [vmem:[#allocation2 + $0xbd8] sm:$0xff]
    %v648 = vld [vmem:[#allocation2 + $0xbe0] sm:$0xff]
    %v649 = vld [vmem:[#allocation2 + $0xbe8] sm:$0xff]
    %v650 = vld [vmem:[#allocation2 + $0xbf0] sm:$0xf]
    %v651 = vld [vmem:[#allocation2 + $0xbf4] sm:$0xff]
    %v652 = vld [vmem:[#allocation2 + $0xbfc] sm:$0xff]
    %v653 = vld [vmem:[#allocation2 + $0xc04] sm:$0xff]
    %v654 = vld [vmem:[#allocation2 + $0xc0c] sm:$0xff]
    %v655 = vld [vmem:[#allocation2 + $0xc14] sm:$0xf]
    %v656 = vld [vmem:[#allocation2 + $0xc18] sm:$0xff]
    %v657 = vld [vmem:[#allocation2 + $0xc20] sm:$0xff]
    %v658 = vld [vmem:[#allocation2 + $0xc28] sm:$0xff]
    %v659 = vld [vmem:[#allocation2 + $0xc30] sm:$0xff]
    %v660 = vld [vmem:[#allocation2 + $0xc38] sm:$0xf]
    %v661 = vld [vmem:[#allocation2 + $0xc3c] sm:$0xff]
    %v662 = vld [vmem:[#allocation2 + $0xc44] sm:$0xff]
    %v663 = vld [vmem:[#allocation2 + $0xc4c] sm:$0xff]
    %v664 = vld [vmem:[#allocation2 + $0xc54] sm:$0xff]
    %v665 = vld [vmem:[#allocation2 + $0xc5c] sm:$0xf]
    %v666 = vld [vmem:[#allocation2 + $0xc60] sm:$0xff]
    %v667 = vld [vmem:[#allocation2 + $0xc68] sm:$0xff]
    %v668 = vld [vmem:[#allocation2 + $0xc70] sm:$0xff]
    %v669 = vld [vmem:[#allocation2 + $0xc78] sm:$0xff]
    %v670 = vld [vmem:[#allocation2 + $0xc80] sm:$0xf]
    %v671 = vld [vmem:[#allocation2 + $0xc84] sm:$0xff]
    %v672 = vld [vmem:[#allocation2 + $0xc8c] sm:$0xff]
    %v673 = vld [vmem:[#allocation2 + $0xc94] sm:$0xff]
    %v674 = vld [vmem:[#allocation2 + $0xc9c] sm:$0xff]
    %v675 = vld [vmem:[#allocation2 + $0xca4] sm:$0xf]
    %v676 = vld [vmem:[#allocation2 + $0xca8] sm:$0xff]
    %v677 = vld [vmem:[#allocation2 + $0xcb0] sm:$0xff]
    %v678 = vld [vmem:[#allocation2 + $0xcb8] sm:$0xff]
    %v679 = vld [vmem:[#allocation2 + $0xcc0] sm:$0xff]
    %v680 = vld [vmem:[#allocation2 + $0xcc8] sm:$0xf]
    %v681 = vld [vmem:[#allocation2 + $0xccc] sm:$0xff]
    %v682 = vld [vmem:[#allocation2 + $0xcd4] sm:$0xff]
    %v683 = vld [vmem:[#allocation2 + $0xcdc] sm:$0xff]
    %v684 = vld [vmem:[#allocation2 + $0xce4] sm:$0xff]
    %v685 = vld [vmem:[#allocation2 + $0xcec] sm:$0xf]
    %v686 = vld [vmem:[#allocation2 + $0xcf0] sm:$0xff]
    %v687 = vld [vmem:[#allocation2 + $0xcf8] sm:$0xff]
    %v688 = vld [vmem:[#allocation2 + $0xd00] sm:$0xff]
    %v689 = vld [vmem:[#allocation2 + $0xd08] sm:$0xff]
    %v690 = vld [vmem:[#allocation2 + $0xd10] sm:$0xf]
    %v691 = vld [vmem:[#allocation2 + $0xd14] sm:$0xff]
    %v692 = vld [vmem:[#allocation2 + $0xd1c] sm:$0xff]
    %v693 = vld [vmem:[#allocation2 + $0xd24] sm:$0xff]
    %v694 = vld [vmem:[#allocation2 + $0xd2c] sm:$0xff]
    %v695 = vld [vmem:[#allocation2 + $0xd34] sm:$0xf]
    %v696 = vld [vmem:[#allocation2 + $0xd38] sm:$0xff]
    %v697 = vld [vmem:[#allocation2 + $0xd40] sm:$0xff]
    %v698 = vld [vmem:[#allocation2 + $0xd48] sm:$0xff]
    %v699 = vld [vmem:[#allocation2 + $0xd50] sm:$0xff]
    %v700 = vld [vmem:[#allocation2 + $0xd58] sm:$0xf]
    %v701 = vld [vmem:[#allocation2 + $0xd5c] sm:$0xff]
    %v702 = vld [vmem:[#allocation2 + $0xd64] sm:$0xff]
    %v703 = vld [vmem:[#allocation2 + $0xd6c] sm:$0xff]
    %v704 = vld [vmem:[#allocation2 + $0xd74] sm:$0xff]
    %v705 = vld [vmem:[#allocation2 + $0xd7c] sm:$0xf]
    %v706 = vld [vmem:[#allocation2 + $0xd80] sm:$0xff]
    %v707 = vld [vmem:[#allocation2 + $0xd88] sm:$0xff]
    %v708 = vld [vmem:[#allocation2 + $0xd90] sm:$0xff]
    %v709 = vld [vmem:[#allocation2 + $0xd98] sm:$0xff]
    %v710 = vld [vmem:[#allocation2 + $0xda0] sm:$0xf]
    %v711 = vld [vmem:[#allocation2 + $0xda4] sm:$0xff]
    %v712 = vld [vmem:[#allocation2 + $0xdac] sm:$0xff]
    %v713 = vld [vmem:[#allocation2 + $0xdb4] sm:$0xff]
    %v714 = vld [vmem:[#allocation2 + $0xdbc] sm:$0xff]
    %v715 = vld [vmem:[#allocation2 + $0xdc4] sm:$0xf]
    %v1206 = vunpack.c.l.b16 %v226
    %v1207 = vunpack.c.h.b16 %v226
    %v1208 = vunpack.c.l.b16 %v227
    %v1209 = vunpack.c.h.b16 %v227
    %v1210 = vunpack.c.l.b16 %v228
    %v1211 = vunpack.c.h.b16 %v228
    %v1212 = vunpack.c.l.b16 %v229
    %v1213 = vunpack.c.h.b16 %v229
    %v1214 = vunpack.c.l.b16 %v230
    %v1215 = vunpack.c.l.b16 %v231
    %v1216 = vunpack.c.h.b16 %v231
    %v1217 = vunpack.c.l.b16 %v232
    %v1218 = vunpack.c.h.b16 %v232
    %v1219 = vunpack.c.l.b16 %v233
    %v1220 = vunpack.c.h.b16 %v233
    %v1221 = vunpack.c.l.b16 %v234
    %v1222 = vunpack.c.h.b16 %v234
    %v1223 = vunpack.c.l.b16 %v235
    %v1224 = vunpack.c.l.b16 %v236
    %v1225 = vunpack.c.h.b16 %v236
    %v1226 = vunpack.c.l.b16 %v237
    %v1227 = vunpack.c.h.b16 %v237
    %v1228 = vunpack.c.l.b16 %v238
    %v1229 = vunpack.c.h.b16 %v238
    %v1230 = vunpack.c.l.b16 %v239
    %v1231 = vunpack.c.h.b16 %v239
    %v1232 = vunpack.c.l.b16 %v240
    %v1233 = vunpack.c.l.b16 %v241
    %v1234 = vunpack.c.h.b16 %v241
    %v1235 = vunpack.c.l.b16 %v242
    %v1236 = vunpack.c.h.b16 %v242
    %v1237 = vunpack.c.l.b16 %v243
    %v1238 = vunpack.c.h.b16 %v243
    %v1239 = vunpack.c.l.b16 %v244
    %v1240 = vunpack.c.h.b16 %v244
    %v1241 = vunpack.c.l.b16 %v245
    %v1242 = vunpack.c.l.b16 %v246
    %v1243 = vunpack.c.h.b16 %v246
    %v1244 = vunpack.c.l.b16 %v247
    %v1245 = vunpack.c.h.b16 %v247
    %v1246 = vunpack.c.l.b16 %v248
    %v1247 = vunpack.c.h.b16 %v248
    %v1248 = vunpack.c.l.b16 %v249
    %v1249 = vunpack.c.h.b16 %v249
    %v1250 = vunpack.c.l.b16 %v250
    %v1251 = vunpack.c.l.b16 %v251
    %v1252 = vunpack.c.h.b16 %v251
    %v1253 = vunpack.c.l.b16 %v252
    %v1254 = vunpack.c.h.b16 %v252
    %v1255 = vunpack.c.l.b16 %v253
    %v1256 = vunpack.c.h.b16 %v253
    %v1257 = vunpack.c.l.b16 %v254
    %v1258 = vunpack.c.h.b16 %v254
    %v1259 = vunpack.c.l.b16 %v255
    %v1260 = vunpack.c.l.b16 %v256
    %v1261 = vunpack.c.h.b16 %v256
    %v1262 = vunpack.c.l.b16 %v257
    %v1263 = vunpack.c.h.b16 %v257
    %v1264 = vunpack.c.l.b16 %v258
    %v1265 = vunpack.c.h.b16 %v258
    %v1266 = vunpack.c.l.b16 %v259
    %v1267 = vunpack.c.h.b16 %v259
    %v1268 = vunpack.c.l.b16 %v260
    %v1269 = vunpack.c.l.b16 %v261
    %v1270 = vunpack.c.h.b16 %v261
    %v1271 = vunpack.c.l.b16 %v262
    %v1272 = vunpack.c.h.b16 %v262
    %v1273 = vunpack.c.l.b16 %v263
    %v1274 = vunpack.c.h.b16 %v263
    %v1275 = vunpack.c.l.b16 %v264
    %v1276 = vunpack.c.h.b16 %v264
    %v1277 = vunpack.c.l.b16 %v265
    %v1278 = vunpack.c.l.b16 %v266
    %v1279 = vunpack.c.h.b16 %v266
    %v1280 = vunpack.c.l.b16 %v267
    %v1281 = vunpack.c.h.b16 %v267
    %v1282 = vunpack.c.l.b16 %v268
    %v1283 = vunpack.c.h.b16 %v268
    %v1284 = vunpack.c.l.b16 %v269
    %v1285 = vunpack.c.h.b16 %v269
    %v1286 = vunpack.c.l.b16 %v270
    %v1287 = vunpack.c.l.b16 %v271
    %v1288 = vunpack.c.h.b16 %v271
    %v1289 = vunpack.c.l.b16 %v272
    %v1290 = vunpack.c.h.b16 %v272
    %v1291 = vunpack.c.l.b16 %v273
    %v1292 = vunpack.c.h.b16 %v273
    %v1293 = vunpack.c.l.b16 %v274
    %v1294 = vunpack.c.h.b16 %v274
    %v1295 = vunpack.c.l.b16 %v275
    %v1296 = vunpack.c.l.b16 %v276
    %v1297 = vunpack.c.h.b16 %v276
    %v1298 = vunpack.c.l.b16 %v277
    %v1299 = vunpack.c.h.b16 %v277
    %v1300 = vunpack.c.l.b16 %v278
    %v1301 = vunpack.c.h.b16 %v278
    %v1302 = vunpack.c.l.b16 %v279
    %v1303 = vunpack.c.h.b16 %v279
    %v1304 = vunpack.c.l.b16 %v280
    %v1305 = vunpack.c.l.b16 %v281
    %v1306 = vunpack.c.h.b16 %v281
    %v1307 = vunpack.c.l.b16 %v282
    %v1308 = vunpack.c.h.b16 %v282
    %v1309 = vunpack.c.l.b16 %v283
    %v1310 = vunpack.c.h.b16 %v283
    %v1311 = vunpack.c.l.b16 %v284
    %v1312 = vunpack.c.h.b16 %v284
    %v1313 = vunpack.c.l.b16 %v285
    %v1314 = vunpack.c.l.b16 %v286
    %v1315 = vunpack.c.h.b16 %v286
    %v1316 = vunpack.c.l.b16 %v287
    %v1317 = vunpack.c.h.b16 %v287
    %v1318 = vunpack.c.l.b16 %v288
    %v1319 = vunpack.c.h.b16 %v288
    %v1320 = vunpack.c.l.b16 %v289
    %v1321 = vunpack.c.h.b16 %v289
    %v1322 = vunpack.c.l.b16 %v290
    %v1323 = vunpack.c.l.b16 %v291
    %v1324 = vunpack.c.h.b16 %v291
    %v1325 = vunpack.c.l.b16 %v292
    %v1326 = vunpack.c.h.b16 %v292
    %v1327 = vunpack.c.l.b16 %v293
    %v1328 = vunpack.c.h.b16 %v293
    %v1329 = vunpack.c.l.b16 %v294
    %v1330 = vunpack.c.h.b16 %v294
    %v1331 = vunpack.c.l.b16 %v295
    %v1332 = vunpack.c.l.b16 %v296
    %v1333 = vunpack.c.h.b16 %v296
    %v1334 = vunpack.c.l.b16 %v297
    %v1335 = vunpack.c.h.b16 %v297
    %v1336 = vunpack.c.l.b16 %v298
    %v1337 = vunpack.c.h.b16 %v298
    %v1338 = vunpack.c.l.b16 %v299
    %v1339 = vunpack.c.h.b16 %v299
    %v1340 = vunpack.c.l.b16 %v300
    %v1341 = vunpack.c.l.b16 %v301
    %v1342 = vunpack.c.h.b16 %v301
    %v1343 = vunpack.c.l.b16 %v302
    %v1344 = vunpack.c.h.b16 %v302
    %v1345 = vunpack.c.l.b16 %v303
    %v1346 = vunpack.c.h.b16 %v303
    %v1347 = vunpack.c.l.b16 %v304
    %v1348 = vunpack.c.h.b16 %v304
    %v1349 = vunpack.c.l.b16 %v305
    %v1350 = vunpack.c.l.b16 %v306
    %v1351 = vunpack.c.h.b16 %v306
    %v1352 = vunpack.c.l.b16 %v307
    %v1353 = vunpack.c.h.b16 %v307
    %v1354 = vunpack.c.l.b16 %v308
    %v1355 = vunpack.c.h.b16 %v308
    %v1356 = vunpack.c.l.b16 %v309
    %v1357 = vunpack.c.h.b16 %v309
    %v1358 = vunpack.c.l.b16 %v310
    %v1359 = vunpack.c.l.b16 %v311
    %v1360 = vunpack.c.h.b16 %v311
    %v1361 = vunpack.c.l.b16 %v312
    %v1362 = vunpack.c.h.b16 %v312
    %v1363 = vunpack.c.l.b16 %v313
    %v1364 = vunpack.c.h.b16 %v313
    %v1365 = vunpack.c.l.b16 %v314
    %v1366 = vunpack.c.h.b16 %v314
    %v1367 = vunpack.c.l.b16 %v315
    %v1368 = vunpack.c.l.b16 %v316
    %v1369 = vunpack.c.h.b16 %v316
    %v1370 = vunpack.c.l.b16 %v317
    %v1371 = vunpack.c.h.b16 %v317
    %v1372 = vunpack.c.l.b16 %v318
    %v1373 = vunpack.c.h.b16 %v318
    %v1374 = vunpack.c.l.b16 %v319
    %v1375 = vunpack.c.h.b16 %v319
    %v1376 = vunpack.c.l.b16 %v320
    %v1377 = vunpack.c.l.b16 %v321
    %v1378 = vunpack.c.h.b16 %v321
    %v1379 = vunpack.c.l.b16 %v322
    %v1380 = vunpack.c.h.b16 %v322
    %v1381 = vunpack.c.l.b16 %v323
    %v1382 = vunpack.c.h.b16 %v323
    %v1383 = vunpack.c.l.b16 %v324
    %v1384 = vunpack.c.h.b16 %v324
    %v1385 = vunpack.c.l.b16 %v325
    %v1386 = vunpack.c.l.b16 %v326
    %v1387 = vunpack.c.h.b16 %v326
    %v1388 = vunpack.c.l.b16 %v327
    %v1389 = vunpack.c.h.b16 %v327
    %v1390 = vunpack.c.l.b16 %v328
    %v1391 = vunpack.c.h.b16 %v328
    %v1392 = vunpack.c.l.b16 %v329
    %v1393 = vunpack.c.h.b16 %v329
    %v1394 = vunpack.c.l.b16 %v330
    %v1395 = vunpack.c.l.b16 %v331
    %v1396 = vunpack.c.h.b16 %v331
    %v1397 = vunpack.c.l.b16 %v332
    %v1398 = vunpack.c.h.b16 %v332
    %v1399 = vunpack.c.l.b16 %v333
    %v1400 = vunpack.c.h.b16 %v333
    %v1401 = vunpack.c.l.b16 %v334
    %v1402 = vunpack.c.h.b16 %v334
    %v1403 = vunpack.c.l.b16 %v335
    %v1404 = vunpack.c.l.b16 %v336
    %v1405 = vunpack.c.h.b16 %v336
    %v1406 = vunpack.c.l.b16 %v337
    %v1407 = vunpack.c.h.b16 %v337
    %v1408 = vunpack.c.l.b16 %v338
    %v1409 = vunpack.c.h.b16 %v338
    %v1410 = vunpack.c.l.b16 %v339
    %v1411 = vunpack.c.h.b16 %v339
    %v1412 = vunpack.c.l.b16 %v340
    %v1413 = vunpack.c.l.b16 %v341
    %v1414 = vunpack.c.h.b16 %v341
    %v1415 = vunpack.c.l.b16 %v342
    %v1416 = vunpack.c.h.b16 %v342
    %v1417 = vunpack.c.l.b16 %v343
    %v1418 = vunpack.c.h.b16 %v343
    %v1419 = vunpack.c.l.b16 %v344
    %v1420 = vunpack.c.h.b16 %v344
    %v1421 = vunpack.c.l.b16 %v345
    %v1422 = vunpack.c.l.b16 %v346
    %v1423 = vunpack.c.h.b16 %v346
    %v1424 = vunpack.c.l.b16 %v347
    %v1425 = vunpack.c.h.b16 %v347
    %v1426 = vunpack.c.l.b16 %v348
    %v1427 = vunpack.c.h.b16 %v348
    %v1428 = vunpack.c.l.b16 %v349
    %v1429 = vunpack.c.h.b16 %v349
    %v1430 = vunpack.c.l.b16 %v350
    %v1431 = vunpack.c.l.b16 %v351
    %v1432 = vunpack.c.h.b16 %v351
    %v1433 = vunpack.c.l.b16 %v352
    %v1434 = vunpack.c.h.b16 %v352
    %v1435 = vunpack.c.l.b16 %v353
    %v1436 = vunpack.c.h.b16 %v353
    %v1437 = vunpack.c.l.b16 %v354
    %v1438 = vunpack.c.h.b16 %v354
    %v1439 = vunpack.c.l.b16 %v355
    %v1440 = vunpack.c.l.b16 %v356
    %v1441 = vunpack.c.h.b16 %v356
    %v1442 = vunpack.c.l.b16 %v357
    %v1443 = vunpack.c.h.b16 %v357
    %v1444 = vunpack.c.l.b16 %v358
    %v1445 = vunpack.c.h.b16 %v358
    %v1446 = vunpack.c.l.b16 %v359
    %v1447 = vunpack.c.h.b16 %v359
    %v1448 = vunpack.c.l.b16 %v360
    %v1449 = vunpack.c.l.b16 %v361
    %v1450 = vunpack.c.h.b16 %v361
    %v1451 = vunpack.c.l.b16 %v362
    %v1452 = vunpack.c.h.b16 %v362
    %v1453 = vunpack.c.l.b16 %v363
    %v1454 = vunpack.c.h.b16 %v363
    %v1455 = vunpack.c.l.b16 %v364
    %v1456 = vunpack.c.h.b16 %v364
    %v1457 = vunpack.c.l.b16 %v365
    %v1458 = vunpack.c.l.b16 %v366
    %v1459 = vunpack.c.h.b16 %v366
    %v1460 = vunpack.c.l.b16 %v367
    %v1461 = vunpack.c.h.b16 %v367
    %v1462 = vunpack.c.l.b16 %v368
    %v1463 = vunpack.c.h.b16 %v368
    %v1464 = vunpack.c.l.b16 %v369
    %v1465 = vunpack.c.h.b16 %v369
    %v1466 = vunpack.c.l.b16 %v370
    %v1467 = vunpack.c.l.b16 %v371
    %v1468 = vunpack.c.h.b16 %v371
    %v1469 = vunpack.c.l.b16 %v372
    %v1470 = vunpack.c.h.b16 %v372
    %v1471 = vunpack.c.l.b16 %v373
    %v1472 = vunpack.c.h.b16 %v373
    %v1473 = vunpack.c.l.b16 %v374
    %v1474 = vunpack.c.h.b16 %v374
    %v1475 = vunpack.c.l.b16 %v375
    %v1476 = vunpack.c.l.b16 %v376
    %v1477 = vunpack.c.h.b16 %v376
    %v1478 = vunpack.c.l.b16 %v377
    %v1479 = vunpack.c.h.b16 %v377
    %v1480 = vunpack.c.l.b16 %v378
    %v1481 = vunpack.c.h.b16 %v378
    %v1482 = vunpack.c.l.b16 %v379
    %v1483 = vunpack.c.h.b16 %v379
    %v1484 = vunpack.c.l.b16 %v380
    %v1485 = vunpack.c.l.b16 %v381
    %v1486 = vunpack.c.h.b16 %v381
    %v1487 = vunpack.c.l.b16 %v382
    %v1488 = vunpack.c.h.b16 %v382
    %v1489 = vunpack.c.l.b16 %v383
    %v1490 = vunpack.c.h.b16 %v383
    %v1491 = vunpack.c.l.b16 %v384
    %v1492 = vunpack.c.h.b16 %v384
    %v1493 = vunpack.c.l.b16 %v385
    %v1494 = vunpack.c.l.b16 %v386
    %v1495 = vunpack.c.h.b16 %v386
    %v1496 = vunpack.c.l.b16 %v387
    %v1497 = vunpack.c.h.b16 %v387
    %v1498 = vunpack.c.l.b16 %v388
    %v1499 = vunpack.c.h.b16 %v388
    %v1500 = vunpack.c.l.b16 %v389
    %v1501 = vunpack.c.h.b16 %v389
    %v1502 = vunpack.c.l.b16 %v390
    %v1503 = vunpack.c.l.b16 %v391
    %v1504 = vunpack.c.h.b16 %v391
    %v1505 = vunpack.c.l.b16 %v392
    %v1506 = vunpack.c.h.b16 %v392
    %v1507 = vunpack.c.l.b16 %v393
    %v1508 = vunpack.c.h.b16 %v393
    %v1509 = vunpack.c.l.b16 %v394
    %v1510 = vunpack.c.h.b16 %v394
    %v1511 = vunpack.c.l.b16 %v395
    %v1512 = vunpack.c.l.b16 %v396
    %v1513 = vunpack.c.h.b16 %v396
    %v1514 = vunpack.c.l.b16 %v397
    %v1515 = vunpack.c.h.b16 %v397
    %v1516 = vunpack.c.l.b16 %v398
    %v1517 = vunpack.c.h.b16 %v398
    %v1518 = vunpack.c.l.b16 %v399
    %v1519 = vunpack.c.h.b16 %v399
    %v1520 = vunpack.c.l.b16 %v400
    %v1521 = vunpack.c.l.b16 %v401
    %v1522 = vunpack.c.h.b16 %v401
    %v1523 = vunpack.c.l.b16 %v402
    %v1524 = vunpack.c.h.b16 %v402
    %v1525 = vunpack.c.l.b16 %v403
    %v1526 = vunpack.c.h.b16 %v403
    %v1527 = vunpack.c.l.b16 %v404
    %v1528 = vunpack.c.h.b16 %v404
    %v1529 = vunpack.c.l.b16 %v405
    %v1530 = vunpack.c.l.b16 %v406
    %v1531 = vunpack.c.h.b16 %v406
    %v1532 = vunpack.c.l.b16 %v407
    %v1533 = vunpack.c.h.b16 %v407
    %v1534 = vunpack.c.l.b16 %v408
    %v1535 = vunpack.c.h.b16 %v408
    %v1536 = vunpack.c.l.b16 %v409
    %v1537 = vunpack.c.h.b16 %v409
    %v1538 = vunpack.c.l.b16 %v410
    %v1539 = vunpack.c.l.b16 %v411
    %v1540 = vunpack.c.h.b16 %v411
    %v1541 = vunpack.c.l.b16 %v412
    %v1542 = vunpack.c.h.b16 %v412
    %v1543 = vunpack.c.l.b16 %v413
    %v1544 = vunpack.c.h.b16 %v413
    %v1545 = vunpack.c.l.b16 %v414
    %v1546 = vunpack.c.h.b16 %v414
    %v1547 = vunpack.c.l.b16 %v415
    %v1548 = vunpack.c.l.b16 %v416
    %v1549 = vunpack.c.h.b16 %v416
    %v1550 = vunpack.c.l.b16 %v417
    %v1551 = vunpack.c.h.b16 %v417
    %v1552 = vunpack.c.l.b16 %v418
    %v1553 = vunpack.c.h.b16 %v418
    %v1554 = vunpack.c.l.b16 %v419
    %v1555 = vunpack.c.h.b16 %v419
    %v1556 = vunpack.c.l.b16 %v420
    %v1557 = vunpack.c.l.b16 %v421
    %v1558 = vunpack.c.h.b16 %v421
    %v1559 = vunpack.c.l.b16 %v422
    %v1560 = vunpack.c.h.b16 %v422
    %v1561 = vunpack.c.l.b16 %v423
    %v1562 = vunpack.c.h.b16 %v423
    %v1563 = vunpack.c.l.b16 %v424
    %v1564 = vunpack.c.h.b16 %v424
    %v1565 = vunpack.c.l.b16 %v425
    %v1566 = vunpack.c.l.b16 %v426
    %v1567 = vunpack.c.h.b16 %v426
    %v1568 = vunpack.c.l.b16 %v427
    %v1569 = vunpack.c.h.b16 %v427
    %v1570 = vunpack.c.l.b16 %v428
    %v1571 = vunpack.c.h.b16 %v428
    %v1572 = vunpack.c.l.b16 %v429
    %v1573 = vunpack.c.h.b16 %v429
    %v1574 = vunpack.c.l.b16 %v430
    %v1575 = vunpack.c.l.b16 %v431
    %v1576 = vunpack.c.h.b16 %v431
    %v1577 = vunpack.c.l.b16 %v432
    %v1578 = vunpack.c.h.b16 %v432
    %v1579 = vunpack.c.l.b16 %v433
    %v1580 = vunpack.c.h.b16 %v433
    %v1581 = vunpack.c.l.b16 %v434
    %v1582 = vunpack.c.h.b16 %v434
    %v1583 = vunpack.c.l.b16 %v435
    %v1584 = vunpack.c.l.b16 %v436
    %v1585 = vunpack.c.h.b16 %v436
    %v1586 = vunpack.c.l.b16 %v437
    %v1587 = vunpack.c.h.b16 %v437
    %v1588 = vunpack.c.l.b16 %v438
    %v1589 = vunpack.c.h.b16 %v438
    %v1590 = vunpack.c.l.b16 %v439
    %v1591 = vunpack.c.h.b16 %v439
    %v1592 = vunpack.c.l.b16 %v440
    %v1593 = vunpack.c.l.b16 %v441
    %v1594 = vunpack.c.h.b16 %v441
    %v1595 = vunpack.c.l.b16 %v442
    %v1596 = vunpack.c.h.b16 %v442
    %v1597 = vunpack.c.l.b16 %v443
    %v1598 = vunpack.c.h.b16 %v443
    %v1599 = vunpack.c.l.b16 %v444
    %v1600 = vunpack.c.h.b16 %v444
    %v1601 = vunpack.c.l.b16 %v445
    %v1602 = vunpack.c.l.b16 %v446
    %v1603 = vunpack.c.h.b16 %v446
    %v1604 = vunpack.c.l.b16 %v447
    %v1605 = vunpack.c.h.b16 %v447
    %v1606 = vunpack.c.l.b16 %v448
    %v1607 = vunpack.c.h.b16 %v448
    %v1608 = vunpack.c.l.b16 %v449
    %v1609 = vunpack.c.h.b16 %v449
    %v1610 = vunpack.c.l.b16 %v450
    %v1611 = vunpack.c.l.b16 %v451
    %v1612 = vunpack.c.h.b16 %v451
    %v1613 = vunpack.c.l.b16 %v452
    %v1614 = vunpack.c.h.b16 %v452
    %v1615 = vunpack.c.l.b16 %v453
    %v1616 = vunpack.c.h.b16 %v453
    %v1617 = vunpack.c.l.b16 %v454
    %v1618 = vunpack.c.h.b16 %v454
    %v1619 = vunpack.c.l.b16 %v455
    %v1620 = vunpack.c.l.b16 %v456
    %v1621 = vunpack.c.h.b16 %v456
    %v1622 = vunpack.c.l.b16 %v457
    %v1623 = vunpack.c.h.b16 %v457
    %v1624 = vunpack.c.l.b16 %v458
    %v1625 = vunpack.c.h.b16 %v458
    %v1626 = vunpack.c.l.b16 %v459
    %v1627 = vunpack.c.h.b16 %v459
    %v1628 = vunpack.c.l.b16 %v460
    %v1629 = vunpack.c.l.b16 %v461
    %v1630 = vunpack.c.h.b16 %v461
    %v1631 = vunpack.c.l.b16 %v462
    %v1632 = vunpack.c.h.b16 %v462
    %v1633 = vunpack.c.l.b16 %v463
    %v1634 = vunpack.c.h.b16 %v463
    %v1635 = vunpack.c.l.b16 %v464
    %v1636 = vunpack.c.h.b16 %v464
    %v1637 = vunpack.c.l.b16 %v465
    %v1638 = vunpack.c.l.b16 %v466
    %v1639 = vunpack.c.h.b16 %v466
    %v1640 = vunpack.c.l.b16 %v467
    %v1641 = vunpack.c.h.b16 %v467
    %v1642 = vunpack.c.l.b16 %v468
    %v1643 = vunpack.c.h.b16 %v468
    %v1644 = vunpack.c.l.b16 %v469
    %v1645 = vunpack.c.h.b16 %v469
    %v1646 = vunpack.c.l.b16 %v470
    %v1647 = vunpack.c.l.b16 %v471
    %v1648 = vunpack.c.h.b16 %v471
    %v1649 = vunpack.c.l.b16 %v472
    %v1650 = vunpack.c.h.b16 %v472
    %v1651 = vunpack.c.l.b16 %v473
    %v1652 = vunpack.c.h.b16 %v473
    %v1653 = vunpack.c.l.b16 %v474
    %v1654 = vunpack.c.h.b16 %v474
    %v1655 = vunpack.c.l.b16 %v475
    %v1656 = vunpack.c.l.b16 %v476
    %v1657 = vunpack.c.h.b16 %v476
    %v1658 = vunpack.c.l.b16 %v477
    %v1659 = vunpack.c.h.b16 %v477
    %v1660 = vunpack.c.l.b16 %v478
    %v1661 = vunpack.c.h.b16 %v478
    %v1662 = vunpack.c.l.b16 %v479
    %v1663 = vunpack.c.h.b16 %v479
    %v1664 = vunpack.c.l.b16 %v480
    %v1665 = vunpack.c.l.b16 %v481
    %v1666 = vunpack.c.h.b16 %v481
    %v1667 = vunpack.c.l.b16 %v482
    %v1668 = vunpack.c.h.b16 %v482
    %v1669 = vunpack.c.l.b16 %v483
    %v1670 = vunpack.c.h.b16 %v483
    %v1671 = vunpack.c.l.b16 %v484
    %v1672 = vunpack.c.h.b16 %v484
    %v1673 = vunpack.c.l.b16 %v485
    %v1674 = vunpack.c.l.b16 %v486
    %v1675 = vunpack.c.h.b16 %v486
    %v1676 = vunpack.c.l.b16 %v487
    %v1677 = vunpack.c.h.b16 %v487
    %v1678 = vunpack.c.l.b16 %v488
    %v1679 = vunpack.c.h.b16 %v488
    %v1680 = vunpack.c.l.b16 %v489
    %v1681 = vunpack.c.h.b16 %v489
    %v1682 = vunpack.c.l.b16 %v490
    %v1683 = vunpack.c.l.b16 %v491
    %v1684 = vunpack.c.h.b16 %v491
    %v1685 = vunpack.c.l.b16 %v492
    %v1686 = vunpack.c.h.b16 %v492
    %v1687 = vunpack.c.l.b16 %v493
    %v1688 = vunpack.c.h.b16 %v493
    %v1689 = vunpack.c.l.b16 %v494
    %v1690 = vunpack.c.h.b16 %v494
    %v1691 = vunpack.c.l.b16 %v495
    %v1692 = vunpack.c.l.b16 %v496
    %v1693 = vunpack.c.h.b16 %v496
    %v1694 = vunpack.c.l.b16 %v497
    %v1695 = vunpack.c.h.b16 %v497
    %v1696 = vunpack.c.l.b16 %v498
    %v1697 = vunpack.c.h.b16 %v498
    %v1698 = vunpack.c.l.b16 %v499
    %v1699 = vunpack.c.h.b16 %v499
    %v1700 = vunpack.c.l.b16 %v500
    %v1701 = vunpack.c.l.b16 %v501
    %v1702 = vunpack.c.h.b16 %v501
    %v1703 = vunpack.c.l.b16 %v502
    %v1704 = vunpack.c.h.b16 %v502
    %v1705 = vunpack.c.l.b16 %v503
    %v1706 = vunpack.c.h.b16 %v503
    %v1707 = vunpack.c.l.b16 %v504
    %v1708 = vunpack.c.h.b16 %v504
    %v1709 = vunpack.c.l.b16 %v505
    %v1710 = vunpack.c.l.b16 %v506
    %v1711 = vunpack.c.h.b16 %v506
    %v1712 = vunpack.c.l.b16 %v507
    %v1713 = vunpack.c.h.b16 %v507
    %v1714 = vunpack.c.l.b16 %v508
    %v1715 = vunpack.c.h.b16 %v508
    %v1716 = vunpack.c.l.b16 %v509
    %v1717 = vunpack.c.h.b16 %v509
    %v1718 = vunpack.c.l.b16 %v510
    %v1719 = vunpack.c.l.b16 %v511
    %v1720 = vunpack.c.h.b16 %v511
    %v1721 = vunpack.c.l.b16 %v512
    %v1722 = vunpack.c.h.b16 %v512
    %v1723 = vunpack.c.l.b16 %v513
    %v1724 = vunpack.c.h.b16 %v513
    %v1725 = vunpack.c.l.b16 %v514
    %v1726 = vunpack.c.h.b16 %v514
    %v1727 = vunpack.c.l.b16 %v515
    %v1728 = vunpack.c.l.b16 %v516
    %v1729 = vunpack.c.h.b16 %v516
    %v1730 = vunpack.c.l.b16 %v517
    %v1731 = vunpack.c.h.b16 %v517
    %v1732 = vunpack.c.l.b16 %v518
    %v1733 = vunpack.c.h.b16 %v518
    %v1734 = vunpack.c.l.b16 %v519
    %v1735 = vunpack.c.h.b16 %v519
    %v1736 = vunpack.c.l.b16 %v520
    %v1737 = vunpack.c.l.b16 %v521
    %v1738 = vunpack.c.h.b16 %v521
    %v1739 = vunpack.c.l.b16 %v522
    %v1740 = vunpack.c.h.b16 %v522
    %v1741 = vunpack.c.l.b16 %v523
    %v1742 = vunpack.c.h.b16 %v523
    %v1743 = vunpack.c.l.b16 %v524
    %v1744 = vunpack.c.h.b16 %v524
    %v1745 = vunpack.c.l.b16 %v525
    %v1746 = vunpack.c.l.b16 %v526
    %v1747 = vunpack.c.h.b16 %v526
    %v1748 = vunpack.c.l.b16 %v527
    %v1749 = vunpack.c.h.b16 %v527
    %v1750 = vunpack.c.l.b16 %v528
    %v1751 = vunpack.c.h.b16 %v528
    %v1752 = vunpack.c.l.b16 %v529
    %v1753 = vunpack.c.h.b16 %v529
    %v1754 = vunpack.c.l.b16 %v530
    %v1755 = vunpack.c.l.b16 %v531
    %v1756 = vunpack.c.h.b16 %v531
    %v1757 = vunpack.c.l.b16 %v532
    %v1758 = vunpack.c.h.b16 %v532
    %v1759 = vunpack.c.l.b16 %v533
    %v1760 = vunpack.c.h.b16 %v533
    %v1761 = vunpack.c.l.b16 %v534
    %v1762 = vunpack.c.h.b16 %v534
    %v1763 = vunpack.c.l.b16 %v535
    %v1764 = vunpack.c.l.b16 %v536
    %v1765 = vunpack.c.h.b16 %v536
    %v1766 = vunpack.c.l.b16 %v537
    %v1767 = vunpack.c.h.b16 %v537
    %v1768 = vunpack.c.l.b16 %v538
    %v1769 = vunpack.c.h.b16 %v538
    %v1770 = vunpack.c.l.b16 %v539
    %v1771 = vunpack.c.h.b16 %v539
    %v1772 = vunpack.c.l.b16 %v540
    %v1773 = vunpack.c.l.b16 %v541
    %v1774 = vunpack.c.h.b16 %v541
    %v1775 = vunpack.c.l.b16 %v542
    %v1776 = vunpack.c.h.b16 %v542
    %v1777 = vunpack.c.l.b16 %v543
    %v1778 = vunpack.c.h.b16 %v543
    %v1779 = vunpack.c.l.b16 %v544
    %v1780 = vunpack.c.h.b16 %v544
    %v1781 = vunpack.c.l.b16 %v545
    %v1782 = vunpack.c.l.b16 %v546
    %v1783 = vunpack.c.h.b16 %v546
    %v1784 = vunpack.c.l.b16 %v547
    %v1785 = vunpack.c.h.b16 %v547
    %v1786 = vunpack.c.l.b16 %v548
    %v1787 = vunpack.c.h.b16 %v548
    %v1788 = vunpack.c.l.b16 %v549
    %v1789 = vunpack.c.h.b16 %v549
    %v1790 = vunpack.c.l.b16 %v550
    %v1791 = vunpack.c.l.b16 %v551
    %v1792 = vunpack.c.h.b16 %v551
    %v1793 = vunpack.c.l.b16 %v552
    %v1794 = vunpack.c.h.b16 %v552
    %v1795 = vunpack.c.l.b16 %v553
    %v1796 = vunpack.c.h.b16 %v553
    %v1797 = vunpack.c.l.b16 %v554
    %v1798 = vunpack.c.h.b16 %v554
    %v1799 = vunpack.c.l.b16 %v555
    %v1800 = vunpack.c.l.b16 %v556
    %v1801 = vunpack.c.h.b16 %v556
    %v1802 = vunpack.c.l.b16 %v557
    %v1803 = vunpack.c.h.b16 %v557
    %v1804 = vunpack.c.l.b16 %v558
    %v1805 = vunpack.c.h.b16 %v558
    %v1806 = vunpack.c.l.b16 %v559
    %v1807 = vunpack.c.h.b16 %v559
    %v1808 = vunpack.c.l.b16 %v560
    %v1809 = vunpack.c.l.b16 %v561
    %v1810 = vunpack.c.h.b16 %v561
    %v1811 = vunpack.c.l.b16 %v562
    %v1812 = vunpack.c.h.b16 %v562
    %v1813 = vunpack.c.l.b16 %v563
    %v1814 = vunpack.c.h.b16 %v563
    %v1815 = vunpack.c.l.b16 %v564
    %v1816 = vunpack.c.h.b16 %v564
    %v1817 = vunpack.c.l.b16 %v565
    %v1818 = vunpack.c.l.b16 %v566
    %v1819 = vunpack.c.h.b16 %v566
    %v1820 = vunpack.c.l.b16 %v567
    %v1821 = vunpack.c.h.b16 %v567
    %v1822 = vunpack.c.l.b16 %v568
    %v1823 = vunpack.c.h.b16 %v568
    %v1824 = vunpack.c.l.b16 %v569
    %v1825 = vunpack.c.h.b16 %v569
    %v1826 = vunpack.c.l.b16 %v570
    %v1827 = vunpack.c.l.b16 %v571
    %v1828 = vunpack.c.h.b16 %v571
    %v1829 = vunpack.c.l.b16 %v572
    %v1830 = vunpack.c.h.b16 %v572
    %v1831 = vunpack.c.l.b16 %v573
    %v1832 = vunpack.c.h.b16 %v573
    %v1833 = vunpack.c.l.b16 %v574
    %v1834 = vunpack.c.h.b16 %v574
    %v1835 = vunpack.c.l.b16 %v575
    %v1836 = vunpack.c.l.b16 %v576
    %v1837 = vunpack.c.h.b16 %v576
    %v1838 = vunpack.c.l.b16 %v577
    %v1839 = vunpack.c.h.b16 %v577
    %v1840 = vunpack.c.l.b16 %v578
    %v1841 = vunpack.c.h.b16 %v578
    %v1842 = vunpack.c.l.b16 %v579
    %v1843 = vunpack.c.h.b16 %v579
    %v1844 = vunpack.c.l.b16 %v580
    %v1845 = vunpack.c.l.b16 %v581
    %v1846 = vunpack.c.h.b16 %v581
    %v1847 = vunpack.c.l.b16 %v582
    %v1848 = vunpack.c.h.b16 %v582
    %v1849 = vunpack.c.l.b16 %v583
    %v1850 = vunpack.c.h.b16 %v583
    %v1851 = vunpack.c.l.b16 %v584
    %v1852 = vunpack.c.h.b16 %v584
    %v1853 = vunpack.c.l.b16 %v585
    %v1854 = vunpack.c.l.b16 %v586
    %v1855 = vunpack.c.h.b16 %v586
    %v1856 = vunpack.c.l.b16 %v587
    %v1857 = vunpack.c.h.b16 %v587
    %v1858 = vunpack.c.l.b16 %v588
    %v1859 = vunpack.c.h.b16 %v588
    %v1860 = vunpack.c.l.b16 %v589
    %v1861 = vunpack.c.h.b16 %v589
    %v1862 = vunpack.c.l.b16 %v590
    %v1863 = vunpack.c.l.b16 %v591
    %v1864 = vunpack.c.h.b16 %v591
    %v1865 = vunpack.c.l.b16 %v592
    %v1866 = vunpack.c.h.b16 %v592
    %v1867 = vunpack.c.l.b16 %v593
    %v1868 = vunpack.c.h.b16 %v593
    %v1869 = vunpack.c.l.b16 %v594
    %v1870 = vunpack.c.h.b16 %v594
    %v1871 = vunpack.c.l.b16 %v595
    %v1872 = vunpack.c.l.b16 %v596
    %v1873 = vunpack.c.h.b16 %v596
    %v1874 = vunpack.c.l.b16 %v597
    %v1875 = vunpack.c.h.b16 %v597
    %v1876 = vunpack.c.l.b16 %v598
    %v1877 = vunpack.c.h.b16 %v598
    %v1878 = vunpack.c.l.b16 %v599
    %v1879 = vunpack.c.h.b16 %v599
    %v1880 = vunpack.c.l.b16 %v600
    %v1881 = vunpack.c.l.b16 %v601
    %v1882 = vunpack.c.h.b16 %v601
    %v1883 = vunpack.c.l.b16 %v602
    %v1884 = vunpack.c.h.b16 %v602
    %v1885 = vunpack.c.l.b16 %v603
    %v1886 = vunpack.c.h.b16 %v603
    %v1887 = vunpack.c.l.b16 %v604
    %v1888 = vunpack.c.h.b16 %v604
    %v1889 = vunpack.c.l.b16 %v605
    %v1890 = vunpack.c.l.b16 %v606
    %v1891 = vunpack.c.h.b16 %v606
    %v1892 = vunpack.c.l.b16 %v607
    %v1893 = vunpack.c.h.b16 %v607
    %v1894 = vunpack.c.l.b16 %v608
    %v1895 = vunpack.c.h.b16 %v608
    %v1896 = vunpack.c.l.b16 %v609
    %v1897 = vunpack.c.h.b16 %v609
    %v1898 = vunpack.c.l.b16 %v610
    %v1899 = vunpack.c.l.b16 %v611
    %v1900 = vunpack.c.h.b16 %v611
    %v1901 = vunpack.c.l.b16 %v612
    %v1902 = vunpack.c.h.b16 %v612
    %v1903 = vunpack.c.l.b16 %v613
    %v1904 = vunpack.c.h.b16 %v613
    %v1905 = vunpack.c.l.b16 %v614
    %v1906 = vunpack.c.h.b16 %v614
    %v1907 = vunpack.c.l.b16 %v615
    %v1908 = vunpack.c.l.b16 %v616
    %v1909 = vunpack.c.h.b16 %v616
    %v1910 = vunpack.c.l.b16 %v617
    %v1911 = vunpack.c.h.b16 %v617
    %v1912 = vunpack.c.l.b16 %v618
    %v1913 = vunpack.c.h.b16 %v618
    %v1914 = vunpack.c.l.b16 %v619
    %v1915 = vunpack.c.h.b16 %v619
    %v1916 = vunpack.c.l.b16 %v620
    %v1917 = vunpack.c.l.b16 %v621
    %v1918 = vunpack.c.h.b16 %v621
    %v1919 = vunpack.c.l.b16 %v622
    %v1920 = vunpack.c.h.b16 %v622
    %v1921 = vunpack.c.l.b16 %v623
    %v1922 = vunpack.c.h.b16 %v623
    %v1923 = vunpack.c.l.b16 %v624
    %v1924 = vunpack.c.h.b16 %v624
    %v1925 = vunpack.c.l.b16 %v625
    %v1926 = vunpack.c.l.b16 %v626
    %v1927 = vunpack.c.h.b16 %v626
    %v1928 = vunpack.c.l.b16 %v627
    %v1929 = vunpack.c.h.b16 %v627
    %v1930 = vunpack.c.l.b16 %v628
    %v1931 = vunpack.c.h.b16 %v628
    %v1932 = vunpack.c.l.b16 %v629
    %v1933 = vunpack.c.h.b16 %v629
    %v1934 = vunpack.c.l.b16 %v630
    %v1935 = vunpack.c.l.b16 %v631
    %v1936 = vunpack.c.h.b16 %v631
    %v1937 = vunpack.c.l.b16 %v632
    %v1938 = vunpack.c.h.b16 %v632
    %v1939 = vunpack.c.l.b16 %v633
    %v1940 = vunpack.c.h.b16 %v633
    %v1941 = vunpack.c.l.b16 %v634
    %v1942 = vunpack.c.h.b16 %v634
    %v1943 = vunpack.c.l.b16 %v635
    %v1944 = vunpack.c.l.b16 %v636
    %v1945 = vunpack.c.h.b16 %v636
    %v1946 = vunpack.c.l.b16 %v637
    %v1947 = vunpack.c.h.b16 %v637
    %v1948 = vunpack.c.l.b16 %v638
    %v1949 = vunpack.c.h.b16 %v638
    %v1950 = vunpack.c.l.b16 %v639
    %v1951 = vunpack.c.h.b16 %v639
    %v1952 = vunpack.c.l.b16 %v640
    %v1953 = vunpack.c.l.b16 %v641
    %v1954 = vunpack.c.h.b16 %v641
    %v1955 = vunpack.c.l.b16 %v642
    %v1956 = vunpack.c.h.b16 %v642
    %v1957 = vunpack.c.l.b16 %v643
    %v1958 = vunpack.c.h.b16 %v643
    %v1959 = vunpack.c.l.b16 %v644
    %v1960 = vunpack.c.h.b16 %v644
    %v1961 = vunpack.c.l.b16 %v645
    %v1962 = vunpack.c.l.b16 %v646
    %v1963 = vunpack.c.h.b16 %v646
    %v1964 = vunpack.c.l.b16 %v647
    %v1965 = vunpack.c.h.b16 %v647
    %v1966 = vunpack.c.l.b16 %v648
    %v1967 = vunpack.c.h.b16 %v648
    %v1968 = vunpack.c.l.b16 %v649
    %v1969 = vunpack.c.h.b16 %v649
    %v1970 = vunpack.c.l.b16 %v650
    %v1971 = vunpack.c.l.b16 %v651
    %v1972 = vunpack.c.h.b16 %v651
    %v1973 = vunpack.c.l.b16 %v652
    %v1974 = vunpack.c.h.b16 %v652
    %v1975 = vunpack.c.l.b16 %v653
    %v1976 = vunpack.c.h.b16 %v653
    %v1977 = vunpack.c.l.b16 %v654
    %v1978 = vunpack.c.h.b16 %v654
    %v1979 = vunpack.c.l.b16 %v655
    %v1980 = vunpack.c.l.b16 %v656
    %v1981 = vunpack.c.h.b16 %v656
    %v1982 = vunpack.c.l.b16 %v657
    %v1983 = vunpack.c.h.b16 %v657
    %v1984 = vunpack.c.l.b16 %v658
    %v1985 = vunpack.c.h.b16 %v658
    %v1986 = vunpack.c.l.b16 %v659
    %v1987 = vunpack.c.h.b16 %v659
    %v1988 = vunpack.c.l.b16 %v660
    %v1989 = vunpack.c.l.b16 %v661
    %v1990 = vunpack.c.h.b16 %v661
    %v1991 = vunpack.c.l.b16 %v662
    %v1992 = vunpack.c.h.b16 %v662
    %v1993 = vunpack.c.l.b16 %v663
    %v1994 = vunpack.c.h.b16 %v663
    %v1995 = vunpack.c.l.b16 %v664
    %v1996 = vunpack.c.h.b16 %v664
    %v1997 = vunpack.c.l.b16 %v665
    %v1998 = vunpack.c.l.b16 %v666
    %v1999 = vunpack.c.h.b16 %v666
    %v2000 = vunpack.c.l.b16 %v667
    %v2001 = vunpack.c.h.b16 %v667
    %v2002 = vunpack.c.l.b16 %v668
    %v2003 = vunpack.c.h.b16 %v668
    %v2004 = vunpack.c.l.b16 %v669
    %v2005 = vunpack.c.h.b16 %v669
    %v2006 = vunpack.c.l.b16 %v670
    %v2007 = vunpack.c.l.b16 %v671
    %v2008 = vunpack.c.h.b16 %v671
    %v2009 = vunpack.c.l.b16 %v672
    %v2010 = vunpack.c.h.b16 %v672
    %v2011 = vunpack.c.l.b16 %v673
    %v2012 = vunpack.c.h.b16 %v673
    %v2013 = vunpack.c.l.b16 %v674
    %v2014 = vunpack.c.h.b16 %v674
    %v2015 = vunpack.c.l.b16 %v675
    %v2016 = vunpack.c.l.b16 %v676
    %v2017 = vunpack.c.h.b16 %v676
    %v2018 = vunpack.c.l.b16 %v677
    %v2019 = vunpack.c.h.b16 %v677
    %v2020 = vunpack.c.l.b16 %v678
    %v2021 = vunpack.c.h.b16 %v678
    %v2022 = vunpack.c.l.b16 %v679
    %v2023 = vunpack.c.h.b16 %v679
    %v2024 = vunpack.c.l.b16 %v680
    %v2025 = vunpack.c.l.b16 %v681
    %v2026 = vunpack.c.h.b16 %v681
    %v2027 = vunpack.c.l.b16 %v682
    %v2028 = vunpack.c.h.b16 %v682
    %v2029 = vunpack.c.l.b16 %v683
    %v2030 = vunpack.c.h.b16 %v683
    %v2031 = vunpack.c.l.b16 %v684
    %v2032 = vunpack.c.h.b16 %v684
    %v2033 = vunpack.c.l.b16 %v685
    %v2034 = vunpack.c.l.b16 %v686
    %v2035 = vunpack.c.h.b16 %v686
    %v2036 = vunpack.c.l.b16 %v687
    %v2037 = vunpack.c.h.b16 %v687
    %v2038 = vunpack.c.l.b16 %v688
    %v2039 = vunpack.c.h.b16 %v688
    %v2040 = vunpack.c.l.b16 %v689
    %v2041 = vunpack.c.h.b16 %v689
    %v2042 = vunpack.c.l.b16 %v690
    %v2043 = vunpack.c.l.b16 %v691
    %v2044 = vunpack.c.h.b16 %v691
    %v2045 = vunpack.c.l.b16 %v692
    %v2046 = vunpack.c.h.b16 %v692
    %v2047 = vunpack.c.l.b16 %v693
    %v2048 = vunpack.c.h.b16 %v693
    %v2049 = vunpack.c.l.b16 %v694
    %v2050 = vunpack.c.h.b16 %v694
    %v2051 = vunpack.c.l.b16 %v695
    %v2052 = vunpack.c.l.b16 %v696
    %v2053 = vunpack.c.h.b16 %v696
    %v2054 = vunpack.c.l.b16 %v697
    %v2055 = vunpack.c.h.b16 %v697
    %v2056 = vunpack.c.l.b16 %v698
    %v2057 = vunpack.c.h.b16 %v698
    %v2058 = vunpack.c.l.b16 %v699
    %v2059 = vunpack.c.h.b16 %v699
    %v2060 = vunpack.c.l.b16 %v700
    %v2061 = vunpack.c.l.b16 %v701
    %v2062 = vunpack.c.h.b16 %v701
    %v2063 = vunpack.c.l.b16 %v702
    %v2064 = vunpack.c.h.b16 %v702
    %v2065 = vunpack.c.l.b16 %v703
    %v2066 = vunpack.c.h.b16 %v703
    %v2067 = vunpack.c.l.b16 %v704
    %v2068 = vunpack.c.h.b16 %v704
    %v2069 = vunpack.c.l.b16 %v705
    %v2070 = vunpack.c.l.b16 %v706
    %v2071 = vunpack.c.h.b16 %v706
    %v2072 = vunpack.c.l.b16 %v707
    %v2073 = vunpack.c.h.b16 %v707
    %v2074 = vunpack.c.l.b16 %v708
    %v2075 = vunpack.c.h.b16 %v708
    %v2076 = vunpack.c.l.b16 %v709
    %v2077 = vunpack.c.h.b16 %v709
    %v2078 = vunpack.c.l.b16 %v710
    %v2079 = vunpack.c.l.b16 %v711
    %v2080 = vunpack.c.h.b16 %v711
    %v2081 = vunpack.c.l.b16 %v712
    %v2082 = vunpack.c.h.b16 %v712
    %v2083 = vunpack.c.l.b16 %v713
    %v2084 = vunpack.c.h.b16 %v713
    %v2085 = vunpack.c.l.b16 %v714
    %v2086 = vunpack.c.h.b16 %v714
    %v2087 = vunpack.c.l.b16 %v715
    %v2088 = vpack.c.b16 %v1215, %v1206
    %v2089 = vpack.c.b16 %v1216, %v1207
    %v2090 = vpack.c.b16 %v1217, %v1208
    %v2091 = vpack.c.b16 %v1218, %v1209
    %v2092 = vpack.c.b16 %v1219, %v1210
    %v2093 = vpack.c.b16 %v1220, %v1211
    %v2094 = vpack.c.b16 %v1221, %v1212
    %v2095 = vpack.c.b16 %v1222, %v1213
    %v2096 = vpack.c.b16 %v1223, %v1214
    %v2097 = vpack.c.b16 %v1233, %v1224
    %v2098 = vpack.c.b16 %v1234, %v1225
    %v2099 = vpack.c.b16 %v1235, %v1226
    %v2100 = vpack.c.b16 %v1236, %v1227
    %v2101 = vpack.c.b16 %v1237, %v1228
    %v2102 = vpack.c.b16 %v1238, %v1229
    %v2103 = vpack.c.b16 %v1239, %v1230
    %v2104 = vpack.c.b16 %v1240, %v1231
    %v2105 = vpack.c.b16 %v1241, %v1232
    %v2106 = vpack.c.b16 %v1251, %v1242
    %v2107 = vpack.c.b16 %v1252, %v1243
    %v2108 = vpack.c.b16 %v1253, %v1244
    %v2109 = vpack.c.b16 %v1254, %v1245
    %v2110 = vpack.c.b16 %v1255, %v1246
    %v2111 = vpack.c.b16 %v1256, %v1247
    %v2112 = vpack.c.b16 %v1257, %v1248
    %v2113 = vpack.c.b16 %v1258, %v1249
    %v2114 = vpack.c.b16 %v1259, %v1250
    %v2115 = vpack.c.b16 %v1269, %v1260
    %v2116 = vpack.c.b16 %v1270, %v1261
    %v2117 = vpack.c.b16 %v1271, %v1262
    %v2118 = vpack.c.b16 %v1272, %v1263
    %v2119 = vpack.c.b16 %v1273, %v1264
    %v2120 = vpack.c.b16 %v1274, %v1265
    %v2121 = vpack.c.b16 %v1275, %v1266
    %v2122 = vpack.c.b16 %v1276, %v1267
    %v2123 = vpack.c.b16 %v1277, %v1268
    %v2124 = vpack.c.b16 %v1287, %v1278
    %v2125 = vpack.c.b16 %v1288, %v1279
    %v2126 = vpack.c.b16 %v1289, %v1280
    %v2127 = vpack.c.b16 %v1290, %v1281
    %v2128 = vpack.c.b16 %v1291, %v1282
    %v2129 = vpack.c.b16 %v1292, %v1283
    %v2130 = vpack.c.b16 %v1293, %v1284
    %v2131 = vpack.c.b16 %v1294, %v1285
    %v2132 = vpack.c.b16 %v1295, %v1286
    %v2133 = vpack.c.b16 %v1305, %v1296
    %v2134 = vpack.c.b16 %v1306, %v1297
    %v2135 = vpack.c.b16 %v1307, %v1298
    %v2136 = vpack.c.b16 %v1308, %v1299
    %v2137 = vpack.c.b16 %v1309, %v1300
    %v2138 = vpack.c.b16 %v1310, %v1301
    %v2139 = vpack.c.b16 %v1311, %v1302
    %v2140 = vpack.c.b16 %v1312, %v1303
    %v2141 = vpack.c.b16 %v1313, %v1304
    %v2142 = vpack.c.b16 %v1323, %v1314
    %v2143 = vpack.c.b16 %v1324, %v1315
    %v2144 = vpack.c.b16 %v1325, %v1316
    %v2145 = vpack.c.b16 %v1326, %v1317
    %v2146 = vpack.c.b16 %v1327, %v1318
    %v2147 = vpack.c.b16 %v1328, %v1319
    %v2148 = vpack.c.b16 %v1329, %v1320
    %v2149 = vpack.c.b16 %v1330, %v1321
    %v2150 = vpack.c.b16 %v1331, %v1322
    %v2151 = vpack.c.b16 %v1341, %v1332
    %v2152 = vpack.c.b16 %v1342, %v1333
    %v2153 = vpack.c.b16 %v1343, %v1334
    %v2154 = vpack.c.b16 %v1344, %v1335
    %v2155 = vpack.c.b16 %v1345, %v1336
    %v2156 = vpack.c.b16 %v1346, %v1337
    %v2157 = vpack.c.b16 %v1347, %v1338
    %v2158 = vpack.c.b16 %v1348, %v1339
    %v2159 = vpack.c.b16 %v1349, %v1340
    %v2160 = vpack.c.b16 %v1359, %v1350
    %v2161 = vpack.c.b16 %v1360, %v1351
    %v2162 = vpack.c.b16 %v1361, %v1352
    %v2163 = vpack.c.b16 %v1362, %v1353
    %v2164 = vpack.c.b16 %v1363, %v1354
    %v2165 = vpack.c.b16 %v1364, %v1355
    %v2166 = vpack.c.b16 %v1365, %v1356
    %v2167 = vpack.c.b16 %v1366, %v1357
    %v2168 = vpack.c.b16 %v1367, %v1358
    %v2169 = vpack.c.b16 %v1377, %v1368
    %v2170 = vpack.c.b16 %v1378, %v1369
    %v2171 = vpack.c.b16 %v1379, %v1370
    %v2172 = vpack.c.b16 %v1380, %v1371
    %v2173 = vpack.c.b16 %v1381, %v1372
    %v2174 = vpack.c.b16 %v1382, %v1373
    %v2175 = vpack.c.b16 %v1383, %v1374
    %v2176 = vpack.c.b16 %v1384, %v1375
    %v2177 = vpack.c.b16 %v1385, %v1376
    %v2178 = vpack.c.b16 %v1395, %v1386
    %v2179 = vpack.c.b16 %v1396, %v1387
    %v2180 = vpack.c.b16 %v1397, %v1388
    %v2181 = vpack.c.b16 %v1398, %v1389
    %v2182 = vpack.c.b16 %v1399, %v1390
    %v2183 = vpack.c.b16 %v1400, %v1391
    %v2184 = vpack.c.b16 %v1401, %v1392
    %v2185 = vpack.c.b16 %v1402, %v1393
    %v2186 = vpack.c.b16 %v1403, %v1394
    %v2187 = vpack.c.b16 %v1413, %v1404
    %v2188 = vpack.c.b16 %v1414, %v1405
    %v2189 = vpack.c.b16 %v1415, %v1406
    %v2190 = vpack.c.b16 %v1416, %v1407
    %v2191 = vpack.c.b16 %v1417, %v1408
    %v2192 = vpack.c.b16 %v1418, %v1409
    %v2193 = vpack.c.b16 %v1419, %v1410
    %v2194 = vpack.c.b16 %v1420, %v1411
    %v2195 = vpack.c.b16 %v1421, %v1412
    %v2196 = vpack.c.b16 %v1431, %v1422
    %v2197 = vpack.c.b16 %v1432, %v1423
    %v2198 = vpack.c.b16 %v1433, %v1424
    %v2199 = vpack.c.b16 %v1434, %v1425
    %v2200 = vpack.c.b16 %v1435, %v1426
    %v2201 = vpack.c.b16 %v1436, %v1427
    %v2202 = vpack.c.b16 %v1437, %v1428
    %v2203 = vpack.c.b16 %v1438, %v1429
    %v2204 = vpack.c.b16 %v1439, %v1430
    %v2205 = vpack.c.b16 %v1449, %v1440
    %v2206 = vpack.c.b16 %v1450, %v1441
    %v2207 = vpack.c.b16 %v1451, %v1442
    %v2208 = vpack.c.b16 %v1452, %v1443
    %v2209 = vpack.c.b16 %v1453, %v1444
    %v2210 = vpack.c.b16 %v1454, %v1445
    %v2211 = vpack.c.b16 %v1455, %v1446
    %v2212 = vpack.c.b16 %v1456, %v1447
    %v2213 = vpack.c.b16 %v1457, %v1448
    %v2214 = vpack.c.b16 %v1467, %v1458
    %v2215 = vpack.c.b16 %v1468, %v1459
    %v2216 = vpack.c.b16 %v1469, %v1460
    %v2217 = vpack.c.b16 %v1470, %v1461
    %v2218 = vpack.c.b16 %v1471, %v1462
    %v2219 = vpack.c.b16 %v1472, %v1463
    %v2220 = vpack.c.b16 %v1473, %v1464
    %v2221 = vpack.c.b16 %v1474, %v1465
    %v2222 = vpack.c.b16 %v1475, %v1466
    %v2223 = vpack.c.b16 %v1485, %v1476
    %v2224 = vpack.c.b16 %v1486, %v1477
    %v2225 = vpack.c.b16 %v1487, %v1478
    %v2226 = vpack.c.b16 %v1488, %v1479
    %v2227 = vpack.c.b16 %v1489, %v1480
    %v2228 = vpack.c.b16 %v1490, %v1481
    %v2229 = vpack.c.b16 %v1491, %v1482
    %v2230 = vpack.c.b16 %v1492, %v1483
    %v2231 = vpack.c.b16 %v1493, %v1484
    %v2232 = vpack.c.b16 %v1503, %v1494
    %v2233 = vpack.c.b16 %v1504, %v1495
    %v2234 = vpack.c.b16 %v1505, %v1496
    %v2235 = vpack.c.b16 %v1506, %v1497
    %v2236 = vpack.c.b16 %v1507, %v1498
    %v2237 = vpack.c.b16 %v1508, %v1499
    %v2238 = vpack.c.b16 %v1509, %v1500
    %v2239 = vpack.c.b16 %v1510, %v1501
    %v2240 = vpack.c.b16 %v1511, %v1502
    %v2241 = vpack.c.b16 %v1521, %v1512
    %v2242 = vpack.c.b16 %v1522, %v1513
    %v2243 = vpack.c.b16 %v1523, %v1514
    %v2244 = vpack.c.b16 %v1524, %v1515
    %v2245 = vpack.c.b16 %v1525, %v1516
    %v2246 = vpack.c.b16 %v1526, %v1517
    %v2247 = vpack.c.b16 %v1527, %v1518
    %v2248 = vpack.c.b16 %v1528, %v1519
    %v2249 = vpack.c.b16 %v1529, %v1520
    %v2250 = vpack.c.b16 %v1539, %v1530
    %v2251 = vpack.c.b16 %v1540, %v1531
    %v2252 = vpack.c.b16 %v1541, %v1532
    %v2253 = vpack.c.b16 %v1542, %v1533
    %v2254 = vpack.c.b16 %v1543, %v1534
    %v2255 = vpack.c.b16 %v1544, %v1535
    %v2256 = vpack.c.b16 %v1545, %v1536
    %v2257 = vpack.c.b16 %v1546, %v1537
    %v2258 = vpack.c.b16 %v1547, %v1538
    %v2259 = vpack.c.b16 %v1557, %v1548
    %v2260 = vpack.c.b16 %v1558, %v1549
    %v2261 = vpack.c.b16 %v1559, %v1550
    %v2262 = vpack.c.b16 %v1560, %v1551
    %v2263 = vpack.c.b16 %v1561, %v1552
    %v2264 = vpack.c.b16 %v1562, %v1553
    %v2265 = vpack.c.b16 %v1563, %v1554
    %v2266 = vpack.c.b16 %v1564, %v1555
    %v2267 = vpack.c.b16 %v1565, %v1556
    %v2268 = vpack.c.b16 %v1575, %v1566
    %v2269 = vpack.c.b16 %v1576, %v1567
    %v2270 = vpack.c.b16 %v1577, %v1568
    %v2271 = vpack.c.b16 %v1578, %v1569
    %v2272 = vpack.c.b16 %v1579, %v1570
    %v2273 = vpack.c.b16 %v1580, %v1571
    %v2274 = vpack.c.b16 %v1581, %v1572
    %v2275 = vpack.c.b16 %v1582, %v1573
    %v2276 = vpack.c.b16 %v1583, %v1574
    %v2277 = vpack.c.b16 %v1593, %v1584
    %v2278 = vpack.c.b16 %v1594, %v1585
    %v2279 = vpack.c.b16 %v1595, %v1586
    %v2280 = vpack.c.b16 %v1596, %v1587
    %v2281 = vpack.c.b16 %v1597, %v1588
    %v2282 = vpack.c.b16 %v1598, %v1589
    %v2283 = vpack.c.b16 %v1599, %v1590
    %v2284 = vpack.c.b16 %v1600, %v1591
    %v2285 = vpack.c.b16 %v1601, %v1592
    %v2286 = vpack.c.b16 %v1611, %v1602
    %v2287 = vpack.c.b16 %v1612, %v1603
    %v2288 = vpack.c.b16 %v1613, %v1604
    %v2289 = vpack.c.b16 %v1614, %v1605
    %v2290 = vpack.c.b16 %v1615, %v1606
    %v2291 = vpack.c.b16 %v1616, %v1607
    %v2292 = vpack.c.b16 %v1617, %v1608
    %v2293 = vpack.c.b16 %v1618, %v1609
    %v2294 = vpack.c.b16 %v1619, %v1610
    %v2295 = vpack.c.b16 %v1629, %v1620
    %v2296 = vpack.c.b16 %v1630, %v1621
    %v2297 = vpack.c.b16 %v1631, %v1622
    %v2298 = vpack.c.b16 %v1632, %v1623
    %v2299 = vpack.c.b16 %v1633, %v1624
    %v2300 = vpack.c.b16 %v1634, %v1625
    %v2301 = vpack.c.b16 %v1635, %v1626
    %v2302 = vpack.c.b16 %v1636, %v1627
    %v2303 = vpack.c.b16 %v1637, %v1628
    %v2304 = vpack.c.b16 %v1647, %v1638
    %v2305 = vpack.c.b16 %v1648, %v1639
    %v2306 = vpack.c.b16 %v1649, %v1640
    %v2307 = vpack.c.b16 %v1650, %v1641
    %v2308 = vpack.c.b16 %v1651, %v1642
    %v2309 = vpack.c.b16 %v1652, %v1643
    %v2310 = vpack.c.b16 %v1653, %v1644
    %v2311 = vpack.c.b16 %v1654, %v1645
    %v2312 = vpack.c.b16 %v1655, %v1646
    %v2313 = vpack.c.b16 %v1665, %v1656
    %v2314 = vpack.c.b16 %v1666, %v1657
    %v2315 = vpack.c.b16 %v1667, %v1658
    %v2316 = vpack.c.b16 %v1668, %v1659
    %v2317 = vpack.c.b16 %v1669, %v1660
    %v2318 = vpack.c.b16 %v1670, %v1661
    %v2319 = vpack.c.b16 %v1671, %v1662
    %v2320 = vpack.c.b16 %v1672, %v1663
    %v2321 = vpack.c.b16 %v1673, %v1664
    %v2322 = vpack.c.b16 %v1683, %v1674
    %v2323 = vpack.c.b16 %v1684, %v1675
    %v2324 = vpack.c.b16 %v1685, %v1676
    %v2325 = vpack.c.b16 %v1686, %v1677
    %v2326 = vpack.c.b16 %v1687, %v1678
    %v2327 = vpack.c.b16 %v1688, %v1679
    %v2328 = vpack.c.b16 %v1689, %v1680
    %v2329 = vpack.c.b16 %v1690, %v1681
    %v2330 = vpack.c.b16 %v1691, %v1682
    %v2331 = vpack.c.b16 %v1701, %v1692
    %v2332 = vpack.c.b16 %v1702, %v1693
    %v2333 = vpack.c.b16 %v1703, %v1694
    %v2334 = vpack.c.b16 %v1704, %v1695
    %v2335 = vpack.c.b16 %v1705, %v1696
    %v2336 = vpack.c.b16 %v1706, %v1697
    %v2337 = vpack.c.b16 %v1707, %v1698
    %v2338 = vpack.c.b16 %v1708, %v1699
    %v2339 = vpack.c.b16 %v1709, %v1700
    %v2340 = vpack.c.b16 %v1719, %v1710
    %v2341 = vpack.c.b16 %v1720, %v1711
    %v2342 = vpack.c.b16 %v1721, %v1712
    %v2343 = vpack.c.b16 %v1722, %v1713
    %v2344 = vpack.c.b16 %v1723, %v1714
    %v2345 = vpack.c.b16 %v1724, %v1715
    %v2346 = vpack.c.b16 %v1725, %v1716
    %v2347 = vpack.c.b16 %v1726, %v1717
    %v2348 = vpack.c.b16 %v1727, %v1718
    %v2349 = vpack.c.b16 %v1737, %v1728
    %v2350 = vpack.c.b16 %v1738, %v1729
    %v2351 = vpack.c.b16 %v1739, %v1730
    %v2352 = vpack.c.b16 %v1740, %v1731
    %v2353 = vpack.c.b16 %v1741, %v1732
    %v2354 = vpack.c.b16 %v1742, %v1733
    %v2355 = vpack.c.b16 %v1743, %v1734
    %v2356 = vpack.c.b16 %v1744, %v1735
    %v2357 = vpack.c.b16 %v1745, %v1736
    %v2358 = vpack.c.b16 %v1755, %v1746
    %v2359 = vpack.c.b16 %v1756, %v1747
    %v2360 = vpack.c.b16 %v1757, %v1748
    %v2361 = vpack.c.b16 %v1758, %v1749
    %v2362 = vpack.c.b16 %v1759, %v1750
    %v2363 = vpack.c.b16 %v1760, %v1751
    %v2364 = vpack.c.b16 %v1761, %v1752
    %v2365 = vpack.c.b16 %v1762, %v1753
    %v2366 = vpack.c.b16 %v1763, %v1754
    %v2367 = vpack.c.b16 %v1773, %v1764
    %v2368 = vpack.c.b16 %v1774, %v1765
    %v2369 = vpack.c.b16 %v1775, %v1766
    %v2370 = vpack.c.b16 %v1776, %v1767
    %v2371 = vpack.c.b16 %v1777, %v1768
    %v2372 = vpack.c.b16 %v1778, %v1769
    %v2373 = vpack.c.b16 %v1779, %v1770
    %v2374 = vpack.c.b16 %v1780, %v1771
    %v2375 = vpack.c.b16 %v1781, %v1772
    %v2376 = vpack.c.b16 %v1791, %v1782
    %v2377 = vpack.c.b16 %v1792, %v1783
    %v2378 = vpack.c.b16 %v1793, %v1784
    %v2379 = vpack.c.b16 %v1794, %v1785
    %v2380 = vpack.c.b16 %v1795, %v1786
    %v2381 = vpack.c.b16 %v1796, %v1787
    %v2382 = vpack.c.b16 %v1797, %v1788
    %v2383 = vpack.c.b16 %v1798, %v1789
    %v2384 = vpack.c.b16 %v1799, %v1790
    %v2385 = vpack.c.b16 %v1809, %v1800
    %v2386 = vpack.c.b16 %v1810, %v1801
    %v2387 = vpack.c.b16 %v1811, %v1802
    %v2388 = vpack.c.b16 %v1812, %v1803
    %v2389 = vpack.c.b16 %v1813, %v1804
    %v2390 = vpack.c.b16 %v1814, %v1805
    %v2391 = vpack.c.b16 %v1815, %v1806
    %v2392 = vpack.c.b16 %v1816, %v1807
    %v2393 = vpack.c.b16 %v1817, %v1808
    %v2394 = vpack.c.b16 %v1827, %v1818
    %v2395 = vpack.c.b16 %v1828, %v1819
    %v2396 = vpack.c.b16 %v1829, %v1820
    %v2397 = vpack.c.b16 %v1830, %v1821
    %v2398 = vpack.c.b16 %v1831, %v1822
    %v2399 = vpack.c.b16 %v1832, %v1823
    %v2400 = vpack.c.b16 %v1833, %v1824
    %v2401 = vpack.c.b16 %v1834, %v1825
    %v2402 = vpack.c.b16 %v1835, %v1826
    %v2403 = vpack.c.b16 %v1845, %v1836
    %v2404 = vpack.c.b16 %v1846, %v1837
    %v2405 = vpack.c.b16 %v1847, %v1838
    %v2406 = vpack.c.b16 %v1848, %v1839
    %v2407 = vpack.c.b16 %v1849, %v1840
    %v2408 = vpack.c.b16 %v1850, %v1841
    %v2409 = vpack.c.b16 %v1851, %v1842
    %v2410 = vpack.c.b16 %v1852, %v1843
    %v2411 = vpack.c.b16 %v1853, %v1844
    %v2412 = vpack.c.b16 %v1863, %v1854
    %v2413 = vpack.c.b16 %v1864, %v1855
    %v2414 = vpack.c.b16 %v1865, %v1856
    %v2415 = vpack.c.b16 %v1866, %v1857
    %v2416 = vpack.c.b16 %v1867, %v1858
    %v2417 = vpack.c.b16 %v1868, %v1859
    %v2418 = vpack.c.b16 %v1869, %v1860
    %v2419 = vpack.c.b16 %v1870, %v1861
    %v2420 = vpack.c.b16 %v1871, %v1862
    %v2421 = vpack.c.b16 %v1881, %v1872
    %v2422 = vpack.c.b16 %v1882, %v1873
    %v2423 = vpack.c.b16 %v1883, %v1874
    %v2424 = vpack.c.b16 %v1884, %v1875
    %v2425 = vpack.c.b16 %v1885, %v1876
    %v2426 = vpack.c.b16 %v1886, %v1877
    %v2427 = vpack.c.b16 %v1887, %v1878
    %v2428 = vpack.c.b16 %v1888, %v1879
    %v2429 = vpack.c.b16 %v1889, %v1880
    %v2430 = vpack.c.b16 %v1899, %v1890
    %v2431 = vpack.c.b16 %v1900, %v1891
    %v2432 = vpack.c.b16 %v1901, %v1892
    %v2433 = vpack.c.b16 %v1902, %v1893
    %v2434 = vpack.c.b16 %v1903, %v1894
    %v2435 = vpack.c.b16 %v1904, %v1895
    %v2436 = vpack.c.b16 %v1905, %v1896
    %v2437 = vpack.c.b16 %v1906, %v1897
    %v2438 = vpack.c.b16 %v1907, %v1898
    %v2439 = vpack.c.b16 %v1917, %v1908
    %v2440 = vpack.c.b16 %v1918, %v1909
    %v2441 = vpack.c.b16 %v1919, %v1910
    %v2442 = vpack.c.b16 %v1920, %v1911
    %v2443 = vpack.c.b16 %v1921, %v1912
    %v2444 = vpack.c.b16 %v1922, %v1913
    %v2445 = vpack.c.b16 %v1923, %v1914
    %v2446 = vpack.c.b16 %v1924, %v1915
    %v2447 = vpack.c.b16 %v1925, %v1916
    %v2448 = vpack.c.b16 %v1935, %v1926
    %v2449 = vpack.c.b16 %v1936, %v1927
    %v2450 = vpack.c.b16 %v1937, %v1928
    %v2451 = vpack.c.b16 %v1938, %v1929
    %v2452 = vpack.c.b16 %v1939, %v1930
    %v2453 = vpack.c.b16 %v1940, %v1931
    %v2454 = vpack.c.b16 %v1941, %v1932
    %v2455 = vpack.c.b16 %v1942, %v1933
    %v2456 = vpack.c.b16 %v1943, %v1934
    %v2457 = vpack.c.b16 %v1953, %v1944
    %v2458 = vpack.c.b16 %v1954, %v1945
    %v2459 = vpack.c.b16 %v1955, %v1946
    %v2460 = vpack.c.b16 %v1956, %v1947
    %v2461 = vpack.c.b16 %v1957, %v1948
    %v2462 = vpack.c.b16 %v1958, %v1949
    %v2463 = vpack.c.b16 %v1959, %v1950
    %v2464 = vpack.c.b16 %v1960, %v1951
    %v2465 = vpack.c.b16 %v1961, %v1952
    %v2466 = vpack.c.b16 %v1971, %v1962
    %v2467 = vpack.c.b16 %v1972, %v1963
    %v2468 = vpack.c.b16 %v1973, %v1964
    %v2469 = vpack.c.b16 %v1974, %v1965
    %v2470 = vpack.c.b16 %v1975, %v1966
    %v2471 = vpack.c.b16 %v1976, %v1967
    %v2472 = vpack.c.b16 %v1977, %v1968
    %v2473 = vpack.c.b16 %v1978, %v1969
    %v2474 = vpack.c.b16 %v1979, %v1970
    %v2475 = vpack.c.b16 %v1989, %v1980
    %v2476 = vpack.c.b16 %v1990, %v1981
    %v2477 = vpack.c.b16 %v1991, %v1982
    %v2478 = vpack.c.b16 %v1992, %v1983
    %v2479 = vpack.c.b16 %v1993, %v1984
    %v2480 = vpack.c.b16 %v1994, %v1985
    %v2481 = vpack.c.b16 %v1995, %v1986
    %v2482 = vpack.c.b16 %v1996, %v1987
    %v2483 = vpack.c.b16 %v1997, %v1988
    %v2484 = vpack.c.b16 %v2007, %v1998
    %v2485 = vpack.c.b16 %v2008, %v1999
    %v2486 = vpack.c.b16 %v2009, %v2000
    %v2487 = vpack.c.b16 %v2010, %v2001
    %v2488 = vpack.c.b16 %v2011, %v2002
    %v2489 = vpack.c.b16 %v2012, %v2003
    %v2490 = vpack.c.b16 %v2013, %v2004
    %v2491 = vpack.c.b16 %v2014, %v2005
    %v2492 = vpack.c.b16 %v2015, %v2006
    %v2493 = vpack.c.b16 %v2025, %v2016
    %v2494 = vpack.c.b16 %v2026, %v2017
    %v2495 = vpack.c.b16 %v2027, %v2018
    %v2496 = vpack.c.b16 %v2028, %v2019
    %v2497 = vpack.c.b16 %v2029, %v2020
    %v2498 = vpack.c.b16 %v2030, %v2021
    %v2499 = vpack.c.b16 %v2031, %v2022
    %v2500 = vpack.c.b16 %v2032, %v2023
    %v2501 = vpack.c.b16 %v2033, %v2024
    %v2502 = vpack.c.b16 %v2043, %v2034
    %v2503 = vpack.c.b16 %v2044, %v2035
    %v2504 = vpack.c.b16 %v2045, %v2036
    %v2505 = vpack.c.b16 %v2046, %v2037
    %v2506 = vpack.c.b16 %v2047, %v2038
    %v2507 = vpack.c.b16 %v2048, %v2039
    %v2508 = vpack.c.b16 %v2049, %v2040
    %v2509 = vpack.c.b16 %v2050, %v2041
    %v2510 = vpack.c.b16 %v2051, %v2042
    %v2511 = vpack.c.b16 %v2061, %v2052
    %v2512 = vpack.c.b16 %v2062, %v2053
    %v2513 = vpack.c.b16 %v2063, %v2054
    %v2514 = vpack.c.b16 %v2064, %v2055
    %v2515 = vpack.c.b16 %v2065, %v2056
    %v2516 = vpack.c.b16 %v2066, %v2057
    %v2517 = vpack.c.b16 %v2067, %v2058
    %v2518 = vpack.c.b16 %v2068, %v2059
    %v2519 = vpack.c.b16 %v2069, %v2060
    %v2520 = vpack.c.b16 %v2079, %v2070
    %v2521 = vpack.c.b16 %v2080, %v2071
    %v2522 = vpack.c.b16 %v2081, %v2072
    %v2523 = vpack.c.b16 %v2082, %v2073
    %v2524 = vpack.c.b16 %v2083, %v2074
    %v2525 = vpack.c.b16 %v2084, %v2075
    %v2526 = vpack.c.b16 %v2085, %v2076
    %v2527 = vpack.c.b16 %v2086, %v2077
    %v2528 = vpack.c.b16 %v2087, %v2078
    %vm2970 = vcmask 130048
    %v2972 = vsel %vm2970, %v176, 0
    %v2975 = vsel %vm2970, %v183, 0
    %v2978 = vsel %vm2970, %v190, 0
    %v2981 = vsel %vm2970, %v197, 0
    %v2984 = vsel %vm2970, %v204, 0
    %v2987 = vsel %vm2970, %v211, 0
    %v2990 = vsel %vm2970, %v218, 0
    %v2993 = vsel %vm2970, %v225, 0
    %2995 = vmatprep.subr.bf16.mxu0 %v2152
    %2996 = vmatpush1.bf16.msra.mxu0 %v2151
    %2997 = vmatprep.subr.bf16.mxu0 %v2143
    %2998 = vmatpush1.bf16.msra.mxu0 %v2142
    %2999 = vmatprep.subr.bf16.mxu0 %v2134
    %3000 = vmatpush1.bf16.msra.mxu0 %v2133
    %3001 = vmatprep.subr.bf16.mxu0 %v2125
    %3002 = vmatpush1.bf16.msra.mxu0 %v2124
    %3003 = vmatprep.subr.bf16.mxu0 %v2116
    %3004 = vmatpush1.bf16.msra.mxu0 %v2115
    %3005 = vmatprep.subr.bf16.mxu0 %v2107
    %3006 = vmatpush1.bf16.msra.mxu0 %v2106
    %3007 = vmatprep.subr.bf16.mxu0 %v2098
    %3008 = vmatpush1.bf16.msra.mxu0 %v2097
    %3009 = vmatprep.subr.bf16.mxu0 %v2089
    %3010 = vmatpush1.bf16.msra.mxu0 %v2088
    %3011 = vmatprep.subr.bf16.mxu0 %v2224
    %3012 = vmatpush2.bf16.msra.mxu0 %v2223
    %3013 = vmatprep.subr.bf16.mxu0 %v2215
    %3014 = vmatpush2.bf16.msra.mxu0 %v2214
    %3015 = vmatprep.subr.bf16.mxu0 %v2206
    %3016 = vmatpush2.bf16.msra.mxu0 %v2205
    %3017 = vmatprep.subr.bf16.mxu0 %v2197
    %3018 = vmatpush2.bf16.msra.mxu0 %v2196
    %3019 = vmatprep.subr.bf16.mxu0 %v2188
    %3020 = vmatpush2.bf16.msra.mxu0 %v2187
    %3021 = vmatprep.subr.bf16.mxu0 %v2179
    %3022 = vmatpush2.bf16.msra.mxu0 %v2178
    %3023 = vmatprep.subr.bf16.mxu0 %v2170
    %3024 = vmatpush2.bf16.msra.mxu0 %v2169
    %3025 = vmatprep.subr.bf16.mxu0 %v2161
    %3026 = vmatpush2.bf16.msra.mxu0 %v2160
    %3027 = vmatprep.mubr.bf16.mxu0 %v171
    %3028 = vmatmul.mubr.bf16.gmra.mxu0 %v170
    %v3029 = vpop.f32.mrf.mxu0
    %v3030 = vadd.f32 0.0, %v3029
    %v3031 = vpop.f32.mrf.mxu0
    %v3032 = vadd.f32 0.0, %v3031
    %v3033 = vpop.f32.mrf.mxu0
    %v3034 = vadd.f32 0.0, %v3033
    %v3035 = vpop.f32.mrf.mxu0
    %v3036 = vadd.f32 0.0, %v3035
    %3037 = vmatprep.mubr.bf16.mxu0 %v178
    %3038 = vmatmul.mubr.bf16.gmra.mxu0 %v177
    %v3039 = vpop.f32.mrf.mxu0
    %v3040 = vadd.f32 0.0, %v3039
    %v3041 = vpop.f32.mrf.mxu0
    %v3042 = vadd.f32 0.0, %v3041
    %v3043 = vpop.f32.mrf.mxu0
    %v3044 = vadd.f32 0.0, %v3043
    %v3045 = vpop.f32.mrf.mxu0
    %v3046 = vadd.f32 0.0, %v3045
    %3047 = vmatprep.mubr.bf16.mxu0 %v185
    %3048 = vmatmul.mubr.bf16.gmra.mxu0 %v184
    %v3049 = vpop.f32.mrf.mxu0
    %v3050 = vadd.f32 0.0, %v3049
    %v3051 = vpop.f32.mrf.mxu0
    %v3052 = vadd.f32 0.0, %v3051
    %v3053 = vpop.f32.mrf.mxu0
    %v3054 = vadd.f32 0.0, %v3053
    %v3055 = vpop.f32.mrf.mxu0
    %v3056 = vadd.f32 0.0, %v3055
    %3057 = vmatprep.mubr.bf16.mxu0 %v192
    %3058 = vmatmul.mubr.bf16.gmra.mxu0 %v191
    %v3059 = vpop.f32.mrf.mxu0
    %v3060 = vadd.f32 0.0, %v3059
    %v3061 = vpop.f32.mrf.mxu0
    %v3062 = vadd.f32 0.0, %v3061
    %v3063 = vpop.f32.mrf.mxu0
    %v3064 = vadd.f32 0.0, %v3063
    %v3065 = vpop.f32.mrf.mxu0
    %v3066 = vadd.f32 0.0, %v3065
    %3067 = vmatprep.mubr.bf16.mxu0 %v199
    %3068 = vmatmul.mubr.bf16.gmra.mxu0 %v198
    %v3069 = vpop.f32.mrf.mxu0
    %v3070 = vadd.f32 0.0, %v3069
    %v3071 = vpop.f32.mrf.mxu0
    %v3072 = vadd.f32 0.0, %v3071
    %v3073 = vpop.f32.mrf.mxu0
    %v3074 = vadd.f32 0.0, %v3073
    %v3075 = vpop.f32.mrf.mxu0
    %v3076 = vadd.f32 0.0, %v3075
    %3077 = vmatprep.mubr.bf16.mxu0 %v206
    %3078 = vmatmul.mubr.bf16.gmra.mxu0 %v205
    %v3079 = vpop.f32.mrf.mxu0
    %v3080 = vadd.f32 0.0, %v3079
    %v3081 = vpop.f32.mrf.mxu0
    %v3082 = vadd.f32 0.0, %v3081
    %v3083 = vpop.f32.mrf.mxu0
    %v3084 = vadd.f32 0.0, %v3083
    %v3085 = vpop.f32.mrf.mxu0
    %v3086 = vadd.f32 0.0, %v3085
    %3087 = vmatprep.mubr.bf16.mxu0 %v213
    %3088 = vmatmul.mubr.bf16.gmra.mxu0 %v212
    %v3089 = vpop.f32.mrf.mxu0
    %v3090 = vadd.f32 0.0, %v3089
    %v3091 = vpop.f32.mrf.mxu0
    %v3092 = vadd.f32 0.0, %v3091
    %v3093 = vpop.f32.mrf.mxu0
    %v3094 = vadd.f32 0.0, %v3093
    %v3095 = vpop.f32.mrf.mxu0
    %v3096 = vadd.f32 0.0, %v3095
    %3097 = vmatprep.mubr.bf16.mxu0 %v220
    %3098 = vmatmul.mubr.bf16.gmra.mxu0 %v219
    %v3099 = vpop.f32.mrf.mxu0
    %v3100 = vadd.f32 0.0, %v3099
    %v3101 = vpop.f32.mrf.mxu0
    %v3102 = vadd.f32 0.0, %v3101
    %v3103 = vpop.f32.mrf.mxu0
    %v3104 = vadd.f32 0.0, %v3103
    %v3105 = vpop.f32.mrf.mxu0
    %v3106 = vadd.f32 0.0, %v3105
    %3107 = vdwg.mxu0
    %3108 = vmatprep.subr.bf16.mxu0 %v2296
    %3109 = vmatpush1.bf16.msra.mxu0 %v2295
    %3110 = vmatprep.subr.bf16.mxu0 %v2287
    %3111 = vmatpush1.bf16.msra.mxu0 %v2286
    %3112 = vmatprep.subr.bf16.mxu0 %v2278
    %3113 = vmatpush1.bf16.msra.mxu0 %v2277
    %3114 = vmatprep.subr.bf16.mxu0 %v2269
    %3115 = vmatpush1.bf16.msra.mxu0 %v2268
    %3116 = vmatprep.subr.bf16.mxu0 %v2260
    %3117 = vmatpush1.bf16.msra.mxu0 %v2259
    %3118 = vmatprep.subr.bf16.mxu0 %v2251
    %3119 = vmatpush1.bf16.msra.mxu0 %v2250
    %3120 = vmatprep.subr.bf16.mxu0 %v2242
    %3121 = vmatpush1.bf16.msra.mxu0 %v2241
    %3122 = vmatprep.subr.bf16.mxu0 %v2233
    %3123 = vmatpush1.bf16.msra.mxu0 %v2232
    %3124 = vmatprep.subr.bf16.mxu0 %v2368
    %3125 = vmatpush2.bf16.msra.mxu0 %v2367
    %3126 = vmatprep.subr.bf16.mxu0 %v2359
    %3127 = vmatpush2.bf16.msra.mxu0 %v2358
    %3128 = vmatprep.subr.bf16.mxu0 %v2350
    %3129 = vmatpush2.bf16.msra.mxu0 %v2349
    %3130 = vmatprep.subr.bf16.mxu0 %v2341
    %3131 = vmatpush2.bf16.msra.mxu0 %v2340
    %3132 = vmatprep.subr.bf16.mxu0 %v2332
    %3133 = vmatpush2.bf16.msra.mxu0 %v2331
    %3134 = vmatprep.subr.bf16.mxu0 %v2323
    %3135 = vmatpush2.bf16.msra.mxu0 %v2322
    %3136 = vmatprep.subr.bf16.mxu0 %v2314
    %3137 = vmatpush2.bf16.msra.mxu0 %v2313
    %3138 = vmatprep.subr.bf16.mxu0 %v2305
    %3139 = vmatpush2.bf16.msra.mxu0 %v2304
    %3140 = vmatprep.mubr.bf16.mxu0 %v173
    %3141 = vmatmul.mubr.bf16.gmra.mxu0 %v172
    %v3142 = vpop.f32.mrf.mxu0
    %v3143 = vadd.f32 %v3030, %v3142
    %v3144 = vpop.f32.mrf.mxu0
    %v3145 = vadd.f32 %v3032, %v3144
    %v3146 = vpop.f32.mrf.mxu0
    %v3147 = vadd.f32 %v3034, %v3146
    %v3148 = vpop.f32.mrf.mxu0
    %v3149 = vadd.f32 %v3036, %v3148
    %3150 = vmatprep.mubr.bf16.mxu0 %v180
    %3151 = vmatmul.mubr.bf16.gmra.mxu0 %v179
    %v3152 = vpop.f32.mrf.mxu0
    %v3153 = vadd.f32 %v3040, %v3152
    %v3154 = vpop.f32.mrf.mxu0
    %v3155 = vadd.f32 %v3042, %v3154
    %v3156 = vpop.f32.mrf.mxu0
    %v3157 = vadd.f32 %v3044, %v3156
    %v3158 = vpop.f32.mrf.mxu0
    %v3159 = vadd.f32 %v3046, %v3158
    %3160 = vmatprep.mubr.bf16.mxu0 %v187
    %3161 = vmatmul.mubr.bf16.gmra.mxu0 %v186
    %v3162 = vpop.f32.mrf.mxu0
    %v3163 = vadd.f32 %v3050, %v3162
    %v3164 = vpop.f32.mrf.mxu0
    %v3165 = vadd.f32 %v3052, %v3164
    %v3166 = vpop.f32.mrf.mxu0
    %v3167 = vadd.f32 %v3054, %v3166
    %v3168 = vpop.f32.mrf.mxu0
    %v3169 = vadd.f32 %v3056, %v3168
    %3170 = vmatprep.mubr.bf16.mxu0 %v194
    %3171 = vmatmul.mubr.bf16.gmra.mxu0 %v193
    %v3172 = vpop.f32.mrf.mxu0
    %v3173 = vadd.f32 %v3060, %v3172
    %v3174 = vpop.f32.mrf.mxu0
    %v3175 = vadd.f32 %v3062, %v3174
    %v3176 = vpop.f32.mrf.mxu0
    %v3177 = vadd.f32 %v3064, %v3176
    %v3178 = vpop.f32.mrf.mxu0
    %v3179 = vadd.f32 %v3066, %v3178
    %3180 = vmatprep.mubr.bf16.mxu0 %v201
    %3181 = vmatmul.mubr.bf16.gmra.mxu0 %v200
    %v3182 = vpop.f32.mrf.mxu0
    %v3183 = vadd.f32 %v3070, %v3182
    %v3184 = vpop.f32.mrf.mxu0
    %v3185 = vadd.f32 %v3072, %v3184
    %v3186 = vpop.f32.mrf.mxu0
    %v3187 = vadd.f32 %v3074, %v3186
    %v3188 = vpop.f32.mrf.mxu0
    %v3189 = vadd.f32 %v3076, %v3188
    %3190 = vmatprep.mubr.bf16.mxu0 %v208
    %3191 = vmatmul.mubr.bf16.gmra.mxu0 %v207
    %v3192 = vpop.f32.mrf.mxu0
    %v3193 = vadd.f32 %v3080, %v3192
    %v3194 = vpop.f32.mrf.mxu0
    %v3195 = vadd.f32 %v3082, %v3194
    %v3196 = vpop.f32.mrf.mxu0
    %v3197 = vadd.f32 %v3084, %v3196
    %v3198 = vpop.f32.mrf.mxu0
    %v3199 = vadd.f32 %v3086, %v3198
    %3200 = vmatprep.mubr.bf16.mxu0 %v215
    %3201 = vmatmul.mubr.bf16.gmra.mxu0 %v214
    %v3202 = vpop.f32.mrf.mxu0
    %v3203 = vadd.f32 %v3090, %v3202
    %v3204 = vpop.f32.mrf.mxu0
    %v3205 = vadd.f32 %v3092, %v3204
    %v3206 = vpop.f32.mrf.mxu0
    %v3207 = vadd.f32 %v3094, %v3206
    %v3208 = vpop.f32.mrf.mxu0
    %v3209 = vadd.f32 %v3096, %v3208
    %3210 = vmatprep.mubr.bf16.mxu0 %v222
    %3211 = vmatmul.mubr.bf16.gmra.mxu0 %v221
    %v3212 = vpop.f32.mrf.mxu0
    %v3213 = vadd.f32 %v3100, %v3212
    %v3214 = vpop.f32.mrf.mxu0
    %v3215 = vadd.f32 %v3102, %v3214
    %v3216 = vpop.f32.mrf.mxu0
    %v3217 = vadd.f32 %v3104, %v3216
    %v3218 = vpop.f32.mrf.mxu0
    %v3219 = vadd.f32 %v3106, %v3218
    %3220 = vdwg.mxu0
    %3221 = vmatprep.subr.bf16.mxu0 %v2440
    %3222 = vmatpush1.bf16.msra.mxu0 %v2439
    %3223 = vmatprep.subr.bf16.mxu0 %v2431
    %3224 = vmatpush1.bf16.msra.mxu0 %v2430
    %3225 = vmatprep.subr.bf16.mxu0 %v2422
    %3226 = vmatpush1.bf16.msra.mxu0 %v2421
    %3227 = vmatprep.subr.bf16.mxu0 %v2413
    %3228 = vmatpush1.bf16.msra.mxu0 %v2412
    %3229 = vmatprep.subr.bf16.mxu0 %v2404
    %3230 = vmatpush1.bf16.msra.mxu0 %v2403
    %3231 = vmatprep.subr.bf16.mxu0 %v2395
    %3232 = vmatpush1.bf16.msra.mxu0 %v2394
    %3233 = vmatprep.subr.bf16.mxu0 %v2386
    %3234 = vmatpush1.bf16.msra.mxu0 %v2385
    %3235 = vmatprep.subr.bf16.mxu0 %v2377
    %3236 = vmatpush1.bf16.msra.mxu0 %v2376
    %3237 = vmatprep.subr.bf16.mxu0 %v2512
    %3238 = vmatpush2.bf16.msra.mxu0 %v2511
    %3239 = vmatprep.subr.bf16.mxu0 %v2503
    %3240 = vmatpush2.bf16.msra.mxu0 %v2502
    %3241 = vmatprep.subr.bf16.mxu0 %v2494
    %3242 = vmatpush2.bf16.msra.mxu0 %v2493
    %3243 = vmatprep.subr.bf16.mxu0 %v2485
    %3244 = vmatpush2.bf16.msra.mxu0 %v2484
    %3245 = vmatprep.subr.bf16.mxu0 %v2476
    %3246 = vmatpush2.bf16.msra.mxu0 %v2475
    %3247 = vmatprep.subr.bf16.mxu0 %v2467
    %3248 = vmatpush2.bf16.msra.mxu0 %v2466
    %3249 = vmatprep.subr.bf16.mxu0 %v2458
    %3250 = vmatpush2.bf16.msra.mxu0 %v2457
    %3251 = vmatprep.subr.bf16.mxu0 %v2449
    %3252 = vmatpush2.bf16.msra.mxu0 %v2448
    %3253 = vmatprep.mubr.bf16.mxu0 %v175
    %3254 = vmatmul.mubr.bf16.gmra.mxu0 %v174
    %v3255 = vpop.f32.mrf.mxu0
    %v3256 = vadd.f32 %v3143, %v3255
    %v3257 = vpop.f32.mrf.mxu0
    %v3258 = vadd.f32 %v3145, %v3257
    %v3259 = vpop.f32.mrf.mxu0
    %v3260 = vadd.f32 %v3147, %v3259
    %v3261 = vpop.f32.mrf.mxu0
    %v3262 = vadd.f32 %v3149, %v3261
    %3263 = vmatprep.mubr.bf16.mxu0 %v182
    %3264 = vmatmul.mubr.bf16.gmra.mxu0 %v181
    %v3265 = vpop.f32.mrf.mxu0
    %v3266 = vadd.f32 %v3153, %v3265
    %v3267 = vpop.f32.mrf.mxu0
    %v3268 = vadd.f32 %v3155, %v3267
    %v3269 = vpop.f32.mrf.mxu0
    %v3270 = vadd.f32 %v3157, %v3269
    %v3271 = vpop.f32.mrf.mxu0
    %v3272 = vadd.f32 %v3159, %v3271
    %3273 = vmatprep.mubr.bf16.mxu0 %v189
    %3274 = vmatmul.mubr.bf16.gmra.mxu0 %v188
    %v3275 = vpop.f32.mrf.mxu0
    %v3276 = vadd.f32 %v3163, %v3275
    %v3277 = vpop.f32.mrf.mxu0
    %v3278 = vadd.f32 %v3165, %v3277
    %v3279 = vpop.f32.mrf.mxu0
    %v3280 = vadd.f32 %v3167, %v3279
    %v3281 = vpop.f32.mrf.mxu0
    %v3282 = vadd.f32 %v3169, %v3281
    %3283 = vmatprep.mubr.bf16.mxu0 %v196
    %3284 = vmatmul.mubr.bf16.gmra.mxu0 %v195
    %v3285 = vpop.f32.mrf.mxu0
    %v3286 = vadd.f32 %v3173, %v3285
    %v3287 = vpop.f32.mrf.mxu0
    %v3288 = vadd.f32 %v3175, %v3287
    %v3289 = vpop.f32.mrf.mxu0
    %v3290 = vadd.f32 %v3177, %v3289
    %v3291 = vpop.f32.mrf.mxu0
    %v3292 = vadd.f32 %v3179, %v3291
    %3293 = vmatprep.mubr.bf16.mxu0 %v203
    %3294 = vmatmul.mubr.bf16.gmra.mxu0 %v202
    %v3295 = vpop.f32.mrf.mxu0
    %v3296 = vadd.f32 %v3183, %v3295
    %v3297 = vpop.f32.mrf.mxu0
    %v3298 = vadd.f32 %v3185, %v3297
    %v3299 = vpop.f32.mrf.mxu0
    %v3300 = vadd.f32 %v3187, %v3299
    %v3301 = vpop.f32.mrf.mxu0
    %v3302 = vadd.f32 %v3189, %v3301
    %3303 = vmatprep.mubr.bf16.mxu0 %v210
    %3304 = vmatmul.mubr.bf16.gmra.mxu0 %v209
    %v3305 = vpop.f32.mrf.mxu0
    %v3306 = vadd.f32 %v3193, %v3305
    %v3307 = vpop.f32.mrf.mxu0
    %v3308 = vadd.f32 %v3195, %v3307
    %v3309 = vpop.f32.mrf.mxu0
    %v3310 = vadd.f32 %v3197, %v3309
    %v3311 = vpop.f32.mrf.mxu0
    %v3312 = vadd.f32 %v3199, %v3311
    %3313 = vmatprep.mubr.bf16.mxu0 %v217
    %3314 = vmatmul.mubr.bf16.gmra.mxu0 %v216
    %v3315 = vpop.f32.mrf.mxu0
    %v3316 = vadd.f32 %v3203, %v3315
    %v3317 = vpop.f32.mrf.mxu0
    %v3318 = vadd.f32 %v3205, %v3317
    %v3319 = vpop.f32.mrf.mxu0
    %v3320 = vadd.f32 %v3207, %v3319
    %v3321 = vpop.f32.mrf.mxu0
    %v3322 = vadd.f32 %v3209, %v3321
    %3323 = vmatprep.mubr.bf16.mxu0 %v224
    %3324 = vmatmul.mubr.bf16.gmra.mxu0 %v223
    %v3325 = vpop.f32.mrf.mxu0
    %v3326 = vadd.f32 %v3213, %v3325
    %v3327 = vpop.f32.mrf.mxu0
    %v3328 = vadd.f32 %v3215, %v3327
    %v3329 = vpop.f32.mrf.mxu0
    %v3330 = vadd.f32 %v3217, %v3329
    %v3331 = vpop.f32.mrf.mxu0
    %v3332 = vadd.f32 %v3219, %v3331
    %3333 = vdwg.mxu0
    %3334 = vmatprep.subr.bf16.mxu0 0
    %3335 = vmatpush1.bf16.msra.mxu0 0
    %3336 = vmatprep.subr.bf16.mxu0 0
    %3337 = vmatpush1.bf16.msra.mxu0 0
    %3338 = vmatprep.subr.bf16.mxu0 0
    %3339 = vmatpush1.bf16.msra.mxu0 0
    %3340 = vmatprep.subr.bf16.mxu0 0
    %3341 = vmatpush1.bf16.msra.mxu0 0
    %3342 = vmatprep.subr.bf16.mxu0 0
    %3343 = vmatpush1.bf16.msra.mxu0 0
    %3344 = vmatprep.subr.bf16.mxu0 0
    %3345 = vmatpush1.bf16.msra.mxu0 0
    %3346 = vmatprep.subr.bf16.mxu0 0
    %3347 = vmatpush1.bf16.msra.mxu0 0
    %3348 = vmatprep.subr.bf16.mxu0 %v2521
    %3349 = vmatpush1.bf16.msra.mxu0 %v2520
    %3350 = vmatprep.subr.bf16.mxu0 0
    %3351 = vmatpush2.bf16.msra.mxu0 0
    %3352 = vmatprep.subr.bf16.mxu0 0
    %3353 = vmatpush2.bf16.msra.mxu0 0
    %3354 = vmatprep.subr.bf16.mxu0 0
    %3355 = vmatpush2.bf16.msra.mxu0 0
    %3356 = vmatprep.subr.bf16.mxu0 0
    %3357 = vmatpush2.bf16.msra.mxu0 0
    %3358 = vmatprep.subr.bf16.mxu0 0
    %3359 = vmatpush2.bf16.msra.mxu0 0
    %3360 = vmatprep.subr.bf16.mxu0 0
    %3361 = vmatpush2.bf16.msra.mxu0 0
    %3362 = vmatprep.subr.bf16.mxu0 0
    %3363 = vmatpush2.bf16.msra.mxu0 0
    %3364 = vmatprep.subr.bf16.mxu0 0
    %3365 = vmatpush2.bf16.msra.mxu0 0
    %3366 = vmatprep.mubr.bf16.mxu0 0
    %3367 = vmatmul.mubr.bf16.gmra.mxu0 %v2972
    %v3368 = vpop.f32.mrf.mxu0
    %v3369 = vadd.f32 %v3256, %v3368
    %v3370 = vpop.f32.mrf.mxu0
    %v3371 = vadd.f32 %v3258, %v3370
    %v3372 = vpop.f32.mrf.mxu0
    %v3373 = vadd.f32 %v3260, %v3372
    %v3374 = vpop.f32.mrf.mxu0
    %v3375 = vadd.f32 %v3262, %v3374
    %3376 = vmatprep.mubr.bf16.mxu0 0
    %3377 = vmatmul.mubr.bf16.gmra.mxu0 %v2975
    %v3378 = vpop.f32.mrf.mxu0
    %v3379 = vadd.f32 %v3266, %v3378
    %v3380 = vpop.f32.mrf.mxu0
    %v3381 = vadd.f32 %v3268, %v3380
    %v3382 = vpop.f32.mrf.mxu0
    %v3383 = vadd.f32 %v3270, %v3382
    %v3384 = vpop.f32.mrf.mxu0
    %v3385 = vadd.f32 %v3272, %v3384
    %3386 = vmatprep.mubr.bf16.mxu0 0
    %3387 = vmatmul.mubr.bf16.gmra.mxu0 %v2978
    %v3388 = vpop.f32.mrf.mxu0
    %v3389 = vadd.f32 %v3276, %v3388
    %v3390 = vpop.f32.mrf.mxu0
    %v3391 = vadd.f32 %v3278, %v3390
    %v3392 = vpop.f32.mrf.mxu0
    %v3393 = vadd.f32 %v3280, %v3392
    %v3394 = vpop.f32.mrf.mxu0
    %v3395 = vadd.f32 %v3282, %v3394
    %3396 = vmatprep.mubr.bf16.mxu0 0
    %3397 = vmatmul.mubr.bf16.gmra.mxu0 %v2981
    %v3398 = vpop.f32.mrf.mxu0
    %v3399 = vadd.f32 %v3286, %v3398
    %v3400 = vpop.f32.mrf.mxu0
    %v3401 = vadd.f32 %v3288, %v3400
    %v3402 = vpop.f32.mrf.mxu0
    %v3403 = vadd.f32 %v3290, %v3402
    %v3404 = vpop.f32.mrf.mxu0
    %v3405 = vadd.f32 %v3292, %v3404
    %3406 = vmatprep.mubr.bf16.mxu0 0
    %3407 = vmatmul.mubr.bf16.gmra.mxu0 %v2984
    %v3408 = vpop.f32.mrf.mxu0
    %v3409 = vadd.f32 %v3296, %v3408
    %v3410 = vpop.f32.mrf.mxu0
    %v3411 = vadd.f32 %v3298, %v3410
    %v3412 = vpop.f32.mrf.mxu0
    %v3413 = vadd.f32 %v3300, %v3412
    %v3414 = vpop.f32.mrf.mxu0
    %v3415 = vadd.f32 %v3302, %v3414
    %3416 = vmatprep.mubr.bf16.mxu0 0
    %3417 = vmatmul.mubr.bf16.gmra.mxu0 %v2987
    %v3418 = vpop.f32.mrf.mxu0
    %v3419 = vadd.f32 %v3306, %v3418
    %v3420 = vpop.f32.mrf.mxu0
    %v3421 = vadd.f32 %v3308, %v3420
    %v3422 = vpop.f32.mrf.mxu0
    %v3423 = vadd.f32 %v3310, %v3422
    %v3424 = vpop.f32.mrf.mxu0
    %v3425 = vadd.f32 %v3312, %v3424
    %3426 = vmatprep.mubr.bf16.mxu0 0
    %3427 = vmatmul.mubr.bf16.gmra.mxu0 %v2990
    %v3428 = vpop.f32.mrf.mxu0
    %v3429 = vadd.f32 %v3316, %v3428
    %v3430 = vpop.f32.mrf.mxu0
    %v3431 = vadd.f32 %v3318, %v3430
    %v3432 = vpop.f32.mrf.mxu0
    %v3433 = vadd.f32 %v3320, %v3432
    %v3434 = vpop.f32.mrf.mxu0
    %v3435 = vadd.f32 %v3322, %v3434
    %3436 = vmatprep.mubr.bf16.mxu0 0
    %3437 = vmatmul.mubr.bf16.gmra.mxu0 %v2993
    %v3438 = vpop.f32.mrf.mxu0
    %v3439 = vadd.f32 %v3326, %v3438
    %v3440 = vpop.f32.mrf.mxu0
    %v3441 = vadd.f32 %v3328, %v3440
    %v3442 = vpop.f32.mrf.mxu0
    %v3443 = vadd.f32 %v3330, %v3442
    %v3444 = vpop.f32.mrf.mxu0
    %v3445 = vadd.f32 %v3332, %v3444
    %3446 = vdwg.mxu0
    %3447 = vmatprep.subr.bf16.mxu0 %v2154
    %3448 = vmatpush1.bf16.msra.mxu0 %v2153
    %3449 = vmatprep.subr.bf16.mxu0 %v2145
    %3450 = vmatpush1.bf16.msra.mxu0 %v2144
    %3451 = vmatprep.subr.bf16.mxu0 %v2136
    %3452 = vmatpush1.bf16.msra.mxu0 %v2135
    %3453 = vmatprep.subr.bf16.mxu0 %v2127
    %3454 = vmatpush1.bf16.msra.mxu0 %v2126
    %3455 = vmatprep.subr.bf16.mxu0 %v2118
    %3456 = vmatpush1.bf16.msra.mxu0 %v2117
    %3457 = vmatprep.subr.bf16.mxu0 %v2109
    %3458 = vmatpush1.bf16.msra.mxu0 %v2108
    %3459 = vmatprep.subr.bf16.mxu0 %v2100
    %3460 = vmatpush1.bf16.msra.mxu0 %v2099
    %3461 = vmatprep.subr.bf16.mxu0 %v2091
    %3462 = vmatpush1.bf16.msra.mxu0 %v2090
    %3463 = vmatprep.subr.bf16.mxu0 %v2226
    %3464 = vmatpush2.bf16.msra.mxu0 %v2225
    %3465 = vmatprep.subr.bf16.mxu0 %v2217
    %3466 = vmatpush2.bf16.msra.mxu0 %v2216
    %3467 = vmatprep.subr.bf16.mxu0 %v2208
    %3468 = vmatpush2.bf16.msra.mxu0 %v2207
    %3469 = vmatprep.subr.bf16.mxu0 %v2199
    %3470 = vmatpush2.bf16.msra.mxu0 %v2198
    %3471 = vmatprep.subr.bf16.mxu0 %v2190
    %3472 = vmatpush2.bf16.msra.mxu0 %v2189
    %3473 = vmatprep.subr.bf16.mxu0 %v2181
    %3474 = vmatpush2.bf16.msra.mxu0 %v2180
    %3475 = vmatprep.subr.bf16.mxu0 %v2172
    %3476 = vmatpush2.bf16.msra.mxu0 %v2171
    %3477 = vmatprep.subr.bf16.mxu0 %v2163
    %3478 = vmatpush2.bf16.msra.mxu0 %v2162
    %3479 = vmatprep.mubr.bf16.mxu0 %v171
    %3480 = vmatmul.mubr.bf16.gmra.mxu0 %v170
    %v3481 = vpop.f32.mrf.mxu0
    %v3482 = vadd.f32 0.0, %v3481
    %v3483 = vpop.f32.mrf.mxu0
    %v3484 = vadd.f32 0.0, %v3483
    %v3485 = vpop.f32.mrf.mxu0
    %v3486 = vadd.f32 0.0, %v3485
    %v3487 = vpop.f32.mrf.mxu0
    %v3488 = vadd.f32 0.0, %v3487
    %3489 = vmatprep.mubr.bf16.mxu0 %v178
    %3490 = vmatmul.mubr.bf16.gmra.mxu0 %v177
    %v3491 = vpop.f32.mrf.mxu0
    %v3492 = vadd.f32 0.0, %v3491
    %v3493 = vpop.f32.mrf.mxu0
    %v3494 = vadd.f32 0.0, %v3493
    %v3495 = vpop.f32.mrf.mxu0
    %v3496 = vadd.f32 0.0, %v3495
    %v3497 = vpop.f32.mrf.mxu0
    %v3498 = vadd.f32 0.0, %v3497
    %3499 = vmatprep.mubr.bf16.mxu0 %v185
    %3500 = vmatmul.mubr.bf16.gmra.mxu0 %v184
    %v3501 = vpop.f32.mrf.mxu0
    %v3502 = vadd.f32 0.0, %v3501
    %v3503 = vpop.f32.mrf.mxu0
    %v3504 = vadd.f32 0.0, %v3503
    %v3505 = vpop.f32.mrf.mxu0
    %v3506 = vadd.f32 0.0, %v3505
    %v3507 = vpop.f32.mrf.mxu0
    %v3508 = vadd.f32 0.0, %v3507
    %3509 = vmatprep.mubr.bf16.mxu0 %v192
    %3510 = vmatmul.mubr.bf16.gmra.mxu0 %v191
    %v3511 = vpop.f32.mrf.mxu0
    %v3512 = vadd.f32 0.0, %v3511
    %v3513 = vpop.f32.mrf.mxu0
    %v3514 = vadd.f32 0.0, %v3513
    %v3515 = vpop.f32.mrf.mxu0
    %v3516 = vadd.f32 0.0, %v3515
    %v3517 = vpop.f32.mrf.mxu0
    %v3518 = vadd.f32 0.0, %v3517
    %3519 = vmatprep.mubr.bf16.mxu0 %v199
    %3520 = vmatmul.mubr.bf16.gmra.mxu0 %v198
    %v3521 = vpop.f32.mrf.mxu0
    %v3522 = vadd.f32 0.0, %v3521
    %v3523 = vpop.f32.mrf.mxu0
    %v3524 = vadd.f32 0.0, %v3523
    %v3525 = vpop.f32.mrf.mxu0
    %v3526 = vadd.f32 0.0, %v3525
    %v3527 = vpop.f32.mrf.mxu0
    %v3528 = vadd.f32 0.0, %v3527
    %3529 = vmatprep.mubr.bf16.mxu0 %v206
    %3530 = vmatmul.mubr.bf16.gmra.mxu0 %v205
    %v3531 = vpop.f32.mrf.mxu0
    %v3532 = vadd.f32 0.0, %v3531
    %v3533 = vpop.f32.mrf.mxu0
    %v3534 = vadd.f32 0.0, %v3533
    %v3535 = vpop.f32.mrf.mxu0
    %v3536 = vadd.f32 0.0, %v3535
    %v3537 = vpop.f32.mrf.mxu0
    %v3538 = vadd.f32 0.0, %v3537
    %3539 = vmatprep.mubr.bf16.mxu0 %v213
    %3540 = vmatmul.mubr.bf16.gmra.mxu0 %v212
    %v3541 = vpop.f32.mrf.mxu0
    %v3542 = vadd.f32 0.0, %v3541
    %v3543 = vpop.f32.mrf.mxu0
    %v3544 = vadd.f32 0.0, %v3543
    %v3545 = vpop.f32.mrf.mxu0
    %v3546 = vadd.f32 0.0, %v3545
    %v3547 = vpop.f32.mrf.mxu0
    %v3548 = vadd.f32 0.0, %v3547
    %3549 = vmatprep.mubr.bf16.mxu0 %v220
    %3550 = vmatmul.mubr.bf16.gmra.mxu0 %v219
    %v3551 = vpop.f32.mrf.mxu0
    %v3552 = vadd.f32 0.0, %v3551
    %v3553 = vpop.f32.mrf.mxu0
    %v3554 = vadd.f32 0.0, %v3553
    %v3555 = vpop.f32.mrf.mxu0
    %v3556 = vadd.f32 0.0, %v3555
    %v3557 = vpop.f32.mrf.mxu0
    %v3558 = vadd.f32 0.0, %v3557
    %3559 = vdwg.mxu0
    %3560 = vmatprep.subr.bf16.mxu0 %v2298
    %3561 = vmatpush1.bf16.msra.mxu0 %v2297
    %3562 = vmatprep.subr.bf16.mxu0 %v2289
    %3563 = vmatpush1.bf16.msra.mxu0 %v2288
    %3564 = vmatprep.subr.bf16.mxu0 %v2280
    %3565 = vmatpush1.bf16.msra.mxu0 %v2279
    %3566 = vmatprep.subr.bf16.mxu0 %v2271
    %3567 = vmatpush1.bf16.msra.mxu0 %v2270
    %3568 = vmatprep.subr.bf16.mxu0 %v2262
    %3569 = vmatpush1.bf16.msra.mxu0 %v2261
    %3570 = vmatprep.subr.bf16.mxu0 %v2253
    %3571 = vmatpush1.bf16.msra.mxu0 %v2252
    %3572 = vmatprep.subr.bf16.mxu0 %v2244
    %3573 = vmatpush1.bf16.msra.mxu0 %v2243
    %3574 = vmatprep.subr.bf16.mxu0 %v2235
    %3575 = vmatpush1.bf16.msra.mxu0 %v2234
    %3576 = vmatprep.subr.bf16.mxu0 %v2370
    %3577 = vmatpush2.bf16.msra.mxu0 %v2369
    %3578 = vmatprep.subr.bf16.mxu0 %v2361
    %3579 = vmatpush2.bf16.msra.mxu0 %v2360
    %3580 = vmatprep.subr.bf16.mxu0 %v2352
    %3581 = vmatpush2.bf16.msra.mxu0 %v2351
    %3582 = vmatprep.subr.bf16.mxu0 %v2343
    %3583 = vmatpush2.bf16.msra.mxu0 %v2342
    %3584 = vmatprep.subr.bf16.mxu0 %v2334
    %3585 = vmatpush2.bf16.msra.mxu0 %v2333
    %3586 = vmatprep.subr.bf16.mxu0 %v2325
    %3587 = vmatpush2.bf16.msra.mxu0 %v2324
    %3588 = vmatprep.subr.bf16.mxu0 %v2316
    %3589 = vmatpush2.bf16.msra.mxu0 %v2315
    %3590 = vmatprep.subr.bf16.mxu0 %v2307
    %3591 = vmatpush2.bf16.msra.mxu0 %v2306
    %3592 = vmatprep.mubr.bf16.mxu0 %v173
    %3593 = vmatmul.mubr.bf16.gmra.mxu0 %v172
    %v3594 = vpop.f32.mrf.mxu0
    %v3595 = vadd.f32 %v3482, %v3594
    %v3596 = vpop.f32.mrf.mxu0
    %v3597 = vadd.f32 %v3484, %v3596
    %v3598 = vpop.f32.mrf.mxu0
    %v3599 = vadd.f32 %v3486, %v3598
    %v3600 = vpop.f32.mrf.mxu0
    %v3601 = vadd.f32 %v3488, %v3600
    %3602 = vmatprep.mubr.bf16.mxu0 %v180
    %3603 = vmatmul.mubr.bf16.gmra.mxu0 %v179
    %v3604 = vpop.f32.mrf.mxu0
    %v3605 = vadd.f32 %v3492, %v3604
    %v3606 = vpop.f32.mrf.mxu0
    %v3607 = vadd.f32 %v3494, %v3606
    %v3608 = vpop.f32.mrf.mxu0
    %v3609 = vadd.f32 %v3496, %v3608
    %v3610 = vpop.f32.mrf.mxu0
    %v3611 = vadd.f32 %v3498, %v3610
    %3612 = vmatprep.mubr.bf16.mxu0 %v187
    %3613 = vmatmul.mubr.bf16.gmra.mxu0 %v186
    %v3614 = vpop.f32.mrf.mxu0
    %v3615 = vadd.f32 %v3502, %v3614
    %v3616 = vpop.f32.mrf.mxu0
    %v3617 = vadd.f32 %v3504, %v3616
    %v3618 = vpop.f32.mrf.mxu0
    %v3619 = vadd.f32 %v3506, %v3618
    %v3620 = vpop.f32.mrf.mxu0
    %v3621 = vadd.f32 %v3508, %v3620
    %3622 = vmatprep.mubr.bf16.mxu0 %v194
    %3623 = vmatmul.mubr.bf16.gmra.mxu0 %v193
    %v3624 = vpop.f32.mrf.mxu0
    %v3625 = vadd.f32 %v3512, %v3624
    %v3626 = vpop.f32.mrf.mxu0
    %v3627 = vadd.f32 %v3514, %v3626
    %v3628 = vpop.f32.mrf.mxu0
    %v3629 = vadd.f32 %v3516, %v3628
    %v3630 = vpop.f32.mrf.mxu0
    %v3631 = vadd.f32 %v3518, %v3630
    %3632 = vmatprep.mubr.bf16.mxu0 %v201
    %3633 = vmatmul.mubr.bf16.gmra.mxu0 %v200
    %v3634 = vpop.f32.mrf.mxu0
    %v3635 = vadd.f32 %v3522, %v3634
    %v3636 = vpop.f32.mrf.mxu0
    %v3637 = vadd.f32 %v3524, %v3636
    %v3638 = vpop.f32.mrf.mxu0
    %v3639 = vadd.f32 %v3526, %v3638
    %v3640 = vpop.f32.mrf.mxu0
    %v3641 = vadd.f32 %v3528, %v3640
    %3642 = vmatprep.mubr.bf16.mxu0 %v208
    %3643 = vmatmul.mubr.bf16.gmra.mxu0 %v207
    %v3644 = vpop.f32.mrf.mxu0
    %v3645 = vadd.f32 %v3532, %v3644
    %v3646 = vpop.f32.mrf.mxu0
    %v3647 = vadd.f32 %v3534, %v3646
    %v3648 = vpop.f32.mrf.mxu0
    %v3649 = vadd.f32 %v3536, %v3648
    %v3650 = vpop.f32.mrf.mxu0
    %v3651 = vadd.f32 %v3538, %v3650
    %3652 = vmatprep.mubr.bf16.mxu0 %v215
    %3653 = vmatmul.mubr.bf16.gmra.mxu0 %v214
    %v3654 = vpop.f32.mrf.mxu0
    %v3655 = vadd.f32 %v3542, %v3654
    %v3656 = vpop.f32.mrf.mxu0
    %v3657 = vadd.f32 %v3544, %v3656
    %v3658 = vpop.f32.mrf.mxu0
    %v3659 = vadd.f32 %v3546, %v3658
    %v3660 = vpop.f32.mrf.mxu0
    %v3661 = vadd.f32 %v3548, %v3660
    %3662 = vmatprep.mubr.bf16.mxu0 %v222
    %3663 = vmatmul.mubr.bf16.gmra.mxu0 %v221
    %v3664 = vpop.f32.mrf.mxu0
    %v3665 = vadd.f32 %v3552, %v3664
    %v3666 = vpop.f32.mrf.mxu0
    %v3667 = vadd.f32 %v3554, %v3666
    %v3668 = vpop.f32.mrf.mxu0
    %v3669 = vadd.f32 %v3556, %v3668
    %v3670 = vpop.f32.mrf.mxu0
    %v3671 = vadd.f32 %v3558, %v3670
    %3672 = vdwg.mxu0
    %3673 = vmatprep.subr.bf16.mxu0 %v2442
    %3674 = vmatpush1.bf16.msra.mxu0 %v2441
    %3675 = vmatprep.subr.bf16.mxu0 %v2433
    %3676 = vmatpush1.bf16.msra.mxu0 %v2432
    %3677 = vmatprep.subr.bf16.mxu0 %v2424
    %3678 = vmatpush1.bf16.msra.mxu0 %v2423
    %3679 = vmatprep.subr.bf16.mxu0 %v2415
    %3680 = vmatpush1.bf16.msra.mxu0 %v2414
    %3681 = vmatprep.subr.bf16.mxu0 %v2406
    %3682 = vmatpush1.bf16.msra.mxu0 %v2405
    %3683 = vmatprep.subr.bf16.mxu0 %v2397
    %3684 = vmatpush1.bf16.msra.mxu0 %v2396
    %3685 = vmatprep.subr.bf16.mxu0 %v2388
    %3686 = vmatpush1.bf16.msra.mxu0 %v2387
    %3687 = vmatprep.subr.bf16.mxu0 %v2379
    %3688 = vmatpush1.bf16.msra.mxu0 %v2378
    %3689 = vmatprep.subr.bf16.mxu0 %v2514
    %3690 = vmatpush2.bf16.msra.mxu0 %v2513
    %3691 = vmatprep.subr.bf16.mxu0 %v2505
    %3692 = vmatpush2.bf16.msra.mxu0 %v2504
    %3693 = vmatprep.subr.bf16.mxu0 %v2496
    %3694 = vmatpush2.bf16.msra.mxu0 %v2495
    %3695 = vmatprep.subr.bf16.mxu0 %v2487
    %3696 = vmatpush2.bf16.msra.mxu0 %v2486
    %3697 = vmatprep.subr.bf16.mxu0 %v2478
    %3698 = vmatpush2.bf16.msra.mxu0 %v2477
    %3699 = vmatprep.subr.bf16.mxu0 %v2469
    %3700 = vmatpush2.bf16.msra.mxu0 %v2468
    %3701 = vmatprep.subr.bf16.mxu0 %v2460
    %3702 = vmatpush2.bf16.msra.mxu0 %v2459
    %3703 = vmatprep.subr.bf16.mxu0 %v2451
    %3704 = vmatpush2.bf16.msra.mxu0 %v2450
    %3705 = vmatprep.mubr.bf16.mxu0 %v175
    %3706 = vmatmul.mubr.bf16.gmra.mxu0 %v174
    %v3707 = vpop.f32.mrf.mxu0
    %v3708 = vadd.f32 %v3595, %v3707
    %v3709 = vpop.f32.mrf.mxu0
    %v3710 = vadd.f32 %v3597, %v3709
    %v3711 = vpop.f32.mrf.mxu0
    %v3712 = vadd.f32 %v3599, %v3711
    %v3713 = vpop.f32.mrf.mxu0
    %v3714 = vadd.f32 %v3601, %v3713
    %3715 = vmatprep.mubr.bf16.mxu0 %v182
    %3716 = vmatmul.mubr.bf16.gmra.mxu0 %v181
    %v3717 = vpop.f32.mrf.mxu0
    %v3718 = vadd.f32 %v3605, %v3717
    %v3719 = vpop.f32.mrf.mxu0
    %v3720 = vadd.f32 %v3607, %v3719
    %v3721 = vpop.f32.mrf.mxu0
    %v3722 = vadd.f32 %v3609, %v3721
    %v3723 = vpop.f32.mrf.mxu0
    %v3724 = vadd.f32 %v3611, %v3723
    %3725 = vmatprep.mubr.bf16.mxu0 %v189
    %3726 = vmatmul.mubr.bf16.gmra.mxu0 %v188
    %v3727 = vpop.f32.mrf.mxu0
    %v3728 = vadd.f32 %v3615, %v3727
    %v3729 = vpop.f32.mrf.mxu0
    %v3730 = vadd.f32 %v3617, %v3729
    %v3731 = vpop.f32.mrf.mxu0
    %v3732 = vadd.f32 %v3619, %v3731
    %v3733 = vpop.f32.mrf.mxu0
    %v3734 = vadd.f32 %v3621, %v3733
    %3735 = vmatprep.mubr.bf16.mxu0 %v196
    %3736 = vmatmul.mubr.bf16.gmra.mxu0 %v195
    %v3737 = vpop.f32.mrf.mxu0
    %v3738 = vadd.f32 %v3625, %v3737
    %v3739 = vpop.f32.mrf.mxu0
    %v3740 = vadd.f32 %v3627, %v3739
    %v3741 = vpop.f32.mrf.mxu0
    %v3742 = vadd.f32 %v3629, %v3741
    %v3743 = vpop.f32.mrf.mxu0
    %v3744 = vadd.f32 %v3631, %v3743
    %3745 = vmatprep.mubr.bf16.mxu0 %v203
    %3746 = vmatmul.mubr.bf16.gmra.mxu0 %v202
    %v3747 = vpop.f32.mrf.mxu0
    %v3748 = vadd.f32 %v3635, %v3747
    %v3749 = vpop.f32.mrf.mxu0
    %v3750 = vadd.f32 %v3637, %v3749
    %v3751 = vpop.f32.mrf.mxu0
    %v3752 = vadd.f32 %v3639, %v3751
    %v3753 = vpop.f32.mrf.mxu0
    %v3754 = vadd.f32 %v3641, %v3753
    %3755 = vmatprep.mubr.bf16.mxu0 %v210
    %3756 = vmatmul.mubr.bf16.gmra.mxu0 %v209
    %v3757 = vpop.f32.mrf.mxu0
    %v3758 = vadd.f32 %v3645, %v3757
    %v3759 = vpop.f32.mrf.mxu0
    %v3760 = vadd.f32 %v3647, %v3759
    %v3761 = vpop.f32.mrf.mxu0
    %v3762 = vadd.f32 %v3649, %v3761
    %v3763 = vpop.f32.mrf.mxu0
    %v3764 = vadd.f32 %v3651, %v3763
    %3765 = vmatprep.mubr.bf16.mxu0 %v217
    %3766 = vmatmul.mubr.bf16.gmra.mxu0 %v216
    %v3767 = vpop.f32.mrf.mxu0
    %v3768 = vadd.f32 %v3655, %v3767
    %v3769 = vpop.f32.mrf.mxu0
    %v3770 = vadd.f32 %v3657, %v3769
    %v3771 = vpop.f32.mrf.mxu0
    %v3772 = vadd.f32 %v3659, %v3771
    %v3773 = vpop.f32.mrf.mxu0
    %v3774 = vadd.f32 %v3661, %v3773
    %3775 = vmatprep.mubr.bf16.mxu0 %v224
    %3776 = vmatmul.mubr.bf16.gmra.mxu0 %v223
    %v3777 = vpop.f32.mrf.mxu0
    %v3778 = vadd.f32 %v3665, %v3777
    %v3779 = vpop.f32.mrf.mxu0
    %v3780 = vadd.f32 %v3667, %v3779
    %v3781 = vpop.f32.mrf.mxu0
    %v3782 = vadd.f32 %v3669, %v3781
    %v3783 = vpop.f32.mrf.mxu0
    %v3784 = vadd.f32 %v3671, %v3783
    %3785 = vdwg.mxu0
    %3786 = vmatprep.subr.bf16.mxu0 0
    %3787 = vmatpush1.bf16.msra.mxu0 0
    %3788 = vmatprep.subr.bf16.mxu0 0
    %3789 = vmatpush1.bf16.msra.mxu0 0
    %3790 = vmatprep.subr.bf16.mxu0 0
    %3791 = vmatpush1.bf16.msra.mxu0 0
    %3792 = vmatprep.subr.bf16.mxu0 0
    %3793 = vmatpush1.bf16.msra.mxu0 0
    %3794 = vmatprep.subr.bf16.mxu0 0
    %3795 = vmatpush1.bf16.msra.mxu0 0
    %3796 = vmatprep.subr.bf16.mxu0 0
    %3797 = vmatpush1.bf16.msra.mxu0 0
    %3798 = vmatprep.subr.bf16.mxu0 0
    %3799 = vmatpush1.bf16.msra.mxu0 0
    %3800 = vmatprep.subr.bf16.mxu0 %v2523
    %3801 = vmatpush1.bf16.msra.mxu0 %v2522
    %3802 = vmatprep.subr.bf16.mxu0 0
    %3803 = vmatpush2.bf16.msra.mxu0 0
    %3804 = vmatprep.subr.bf16.mxu0 0
    %3805 = vmatpush2.bf16.msra.mxu0 0
    %3806 = vmatprep.subr.bf16.mxu0 0
    %3807 = vmatpush2.bf16.msra.mxu0 0
    %3808 = vmatprep.subr.bf16.mxu0 0
    %3809 = vmatpush2.bf16.msra.mxu0 0
    %3810 = vmatprep.subr.bf16.mxu0 0
    %3811 = vmatpush2.bf16.msra.mxu0 0
    %3812 = vmatprep.subr.bf16.mxu0 0
    %3813 = vmatpush2.bf16.msra.mxu0 0
    %3814 = vmatprep.subr.bf16.mxu0 0
    %3815 = vmatpush2.bf16.msra.mxu0 0
    %3816 = vmatprep.subr.bf16.mxu0 0
    %3817 = vmatpush2.bf16.msra.mxu0 0
    %3818 = vmatprep.mubr.bf16.mxu0 0
    %3819 = vmatmul.mubr.bf16.gmra.mxu0 %v2972
    %v3820 = vpop.f32.mrf.mxu0
    %v3821 = vadd.f32 %v3708, %v3820
    %v3822 = vpop.f32.mrf.mxu0
    %v3823 = vadd.f32 %v3710, %v3822
    %v3824 = vpop.f32.mrf.mxu0
    %v3825 = vadd.f32 %v3712, %v3824
    %v3826 = vpop.f32.mrf.mxu0
    %v3827 = vadd.f32 %v3714, %v3826
    %3828 = vmatprep.mubr.bf16.mxu0 0
    %3829 = vmatmul.mubr.bf16.gmra.mxu0 %v2975
    %v3830 = vpop.f32.mrf.mxu0
    %v3831 = vadd.f32 %v3718, %v3830
    %v3832 = vpop.f32.mrf.mxu0
    %v3833 = vadd.f32 %v3720, %v3832
    %v3834 = vpop.f32.mrf.mxu0
    %v3835 = vadd.f32 %v3722, %v3834
    %v3836 = vpop.f32.mrf.mxu0
    %v3837 = vadd.f32 %v3724, %v3836
    %3838 = vmatprep.mubr.bf16.mxu0 0
    %3839 = vmatmul.mubr.bf16.gmra.mxu0 %v2978
    %v3840 = vpop.f32.mrf.mxu0
    %v3841 = vadd.f32 %v3728, %v3840
    %v3842 = vpop.f32.mrf.mxu0
    %v3843 = vadd.f32 %v3730, %v3842
    %v3844 = vpop.f32.mrf.mxu0
    %v3845 = vadd.f32 %v3732, %v3844
    %v3846 = vpop.f32.mrf.mxu0
    %v3847 = vadd.f32 %v3734, %v3846
    %3848 = vmatprep.mubr.bf16.mxu0 0
    %3849 = vmatmul.mubr.bf16.gmra.mxu0 %v2981
    %v3850 = vpop.f32.mrf.mxu0
    %v3851 = vadd.f32 %v3738, %v3850
    %v3852 = vpop.f32.mrf.mxu0
    %v3853 = vadd.f32 %v3740, %v3852
    %v3854 = vpop.f32.mrf.mxu0
    %v3855 = vadd.f32 %v3742, %v3854
    %v3856 = vpop.f32.mrf.mxu0
    %v3857 = vadd.f32 %v3744, %v3856
    %3858 = vmatprep.mubr.bf16.mxu0 0
    %3859 = vmatmul.mubr.bf16.gmra.mxu0 %v2984
    %v3860 = vpop.f32.mrf.mxu0
    %v3861 = vadd.f32 %v3748, %v3860
    %v3862 = vpop.f32.mrf.mxu0
    %v3863 = vadd.f32 %v3750, %v3862
    %v3864 = vpop.f32.mrf.mxu0
    %v3865 = vadd.f32 %v3752, %v3864
    %v3866 = vpop.f32.mrf.mxu0
    %v3867 = vadd.f32 %v3754, %v3866
    %3868 = vmatprep.mubr.bf16.mxu0 0
    %3869 = vmatmul.mubr.bf16.gmra.mxu0 %v2987
    %v3870 = vpop.f32.mrf.mxu0
    %v3871 = vadd.f32 %v3758, %v3870
    %v3872 = vpop.f32.mrf.mxu0
    %v3873 = vadd.f32 %v3760, %v3872
    %v3874 = vpop.f32.mrf.mxu0
    %v3875 = vadd.f32 %v3762, %v3874
    %v3876 = vpop.f32.mrf.mxu0
    %v3877 = vadd.f32 %v3764, %v3876
    %3878 = vmatprep.mubr.bf16.mxu0 0
    %3879 = vmatmul.mubr.bf16.gmra.mxu0 %v2990
    %v3880 = vpop.f32.mrf.mxu0
    %v3881 = vadd.f32 %v3768, %v3880
    %v3882 = vpop.f32.mrf.mxu0
    %v3883 = vadd.f32 %v3770, %v3882
    %v3884 = vpop.f32.mrf.mxu0
    %v3885 = vadd.f32 %v3772, %v3884
    %v3886 = vpop.f32.mrf.mxu0
    %v3887 = vadd.f32 %v3774, %v3886
    %3888 = vmatprep.mubr.bf16.mxu0 0
    %3889 = vmatmul.mubr.bf16.gmra.mxu0 %v2993
    %v3890 = vpop.f32.mrf.mxu0
    %v3891 = vadd.f32 %v3778, %v3890
    %v3892 = vpop.f32.mrf.mxu0
    %v3893 = vadd.f32 %v3780, %v3892
    %v3894 = vpop.f32.mrf.mxu0
    %v3895 = vadd.f32 %v3782, %v3894
    %v3896 = vpop.f32.mrf.mxu0
    %v3897 = vadd.f32 %v3784, %v3896
    %3898 = vdwg.mxu0
    %3899 = vmatprep.subr.bf16.mxu0 %v2156
    %3900 = vmatpush1.bf16.msra.mxu0 %v2155
    %3901 = vmatprep.subr.bf16.mxu0 %v2147
    %3902 = vmatpush1.bf16.msra.mxu0 %v2146
    %3903 = vmatprep.subr.bf16.mxu0 %v2138
    %3904 = vmatpush1.bf16.msra.mxu0 %v2137
    %3905 = vmatprep.subr.bf16.mxu0 %v2129
    %3906 = vmatpush1.bf16.msra.mxu0 %v2128
    %3907 = vmatprep.subr.bf16.mxu0 %v2120
    %3908 = vmatpush1.bf16.msra.mxu0 %v2119
    %3909 = vmatprep.subr.bf16.mxu0 %v2111
    %3910 = vmatpush1.bf16.msra.mxu0 %v2110
    %3911 = vmatprep.subr.bf16.mxu0 %v2102
    %3912 = vmatpush1.bf16.msra.mxu0 %v2101
    %3913 = vmatprep.subr.bf16.mxu0 %v2093
    %3914 = vmatpush1.bf16.msra.mxu0 %v2092
    %3915 = vmatprep.subr.bf16.mxu0 %v2228
    %3916 = vmatpush2.bf16.msra.mxu0 %v2227
    %3917 = vmatprep.subr.bf16.mxu0 %v2219
    %3918 = vmatpush2.bf16.msra.mxu0 %v2218
    %3919 = vmatprep.subr.bf16.mxu0 %v2210
    %3920 = vmatpush2.bf16.msra.mxu0 %v2209
    %3921 = vmatprep.subr.bf16.mxu0 %v2201
    %3922 = vmatpush2.bf16.msra.mxu0 %v2200
    %3923 = vmatprep.subr.bf16.mxu0 %v2192
    %3924 = vmatpush2.bf16.msra.mxu0 %v2191
    %3925 = vmatprep.subr.bf16.mxu0 %v2183
    %3926 = vmatpush2.bf16.msra.mxu0 %v2182
    %3927 = vmatprep.subr.bf16.mxu0 %v2174
    %3928 = vmatpush2.bf16.msra.mxu0 %v2173
    %3929 = vmatprep.subr.bf16.mxu0 %v2165
    %3930 = vmatpush2.bf16.msra.mxu0 %v2164
    %3931 = vmatprep.mubr.bf16.mxu0 %v171
    %3932 = vmatmul.mubr.bf16.gmra.mxu0 %v170
    %v3933 = vpop.f32.mrf.mxu0
    %v3934 = vadd.f32 0.0, %v3933
    %v3935 = vpop.f32.mrf.mxu0
    %v3936 = vadd.f32 0.0, %v3935
    %v3937 = vpop.f32.mrf.mxu0
    %v3938 = vadd.f32 0.0, %v3937
    %v3939 = vpop.f32.mrf.mxu0
    %v3940 = vadd.f32 0.0, %v3939
    %3941 = vmatprep.mubr.bf16.mxu0 %v178
    %3942 = vmatmul.mubr.bf16.gmra.mxu0 %v177
    %v3943 = vpop.f32.mrf.mxu0
    %v3944 = vadd.f32 0.0, %v3943
    %v3945 = vpop.f32.mrf.mxu0
    %v3946 = vadd.f32 0.0, %v3945
    %v3947 = vpop.f32.mrf.mxu0
    %v3948 = vadd.f32 0.0, %v3947
    %v3949 = vpop.f32.mrf.mxu0
    %v3950 = vadd.f32 0.0, %v3949
    %3951 = vmatprep.mubr.bf16.mxu0 %v185
    %3952 = vmatmul.mubr.bf16.gmra.mxu0 %v184
    %v3953 = vpop.f32.mrf.mxu0
    %v3954 = vadd.f32 0.0, %v3953
    %v3955 = vpop.f32.mrf.mxu0
    %v3956 = vadd.f32 0.0, %v3955
    %v3957 = vpop.f32.mrf.mxu0
    %v3958 = vadd.f32 0.0, %v3957
    %v3959 = vpop.f32.mrf.mxu0
    %v3960 = vadd.f32 0.0, %v3959
    %3961 = vmatprep.mubr.bf16.mxu0 %v192
    %3962 = vmatmul.mubr.bf16.gmra.mxu0 %v191
    %v3963 = vpop.f32.mrf.mxu0
    %v3964 = vadd.f32 0.0, %v3963
    %v3965 = vpop.f32.mrf.mxu0
    %v3966 = vadd.f32 0.0, %v3965
    %v3967 = vpop.f32.mrf.mxu0
    %v3968 = vadd.f32 0.0, %v3967
    %v3969 = vpop.f32.mrf.mxu0
    %v3970 = vadd.f32 0.0, %v3969
    %3971 = vmatprep.mubr.bf16.mxu0 %v199
    %3972 = vmatmul.mubr.bf16.gmra.mxu0 %v198
    %v3973 = vpop.f32.mrf.mxu0
    %v3974 = vadd.f32 0.0, %v3973
    %v3975 = vpop.f32.mrf.mxu0
    %v3976 = vadd.f32 0.0, %v3975
    %v3977 = vpop.f32.mrf.mxu0
    %v3978 = vadd.f32 0.0, %v3977
    %v3979 = vpop.f32.mrf.mxu0
    %v3980 = vadd.f32 0.0, %v3979
    %3981 = vmatprep.mubr.bf16.mxu0 %v206
    %3982 = vmatmul.mubr.bf16.gmra.mxu0 %v205
    %v3983 = vpop.f32.mrf.mxu0
    %v3984 = vadd.f32 0.0, %v3983
    %v3985 = vpop.f32.mrf.mxu0
    %v3986 = vadd.f32 0.0, %v3985
    %v3987 = vpop.f32.mrf.mxu0
    %v3988 = vadd.f32 0.0, %v3987
    %v3989 = vpop.f32.mrf.mxu0
    %v3990 = vadd.f32 0.0, %v3989
    %3991 = vmatprep.mubr.bf16.mxu0 %v213
    %3992 = vmatmul.mubr.bf16.gmra.mxu0 %v212
    %v3993 = vpop.f32.mrf.mxu0
    %v3994 = vadd.f32 0.0, %v3993
    %v3995 = vpop.f32.mrf.mxu0
    %v3996 = vadd.f32 0.0, %v3995
    %v3997 = vpop.f32.mrf.mxu0
    %v3998 = vadd.f32 0.0, %v3997
    %v3999 = vpop.f32.mrf.mxu0
    %v4000 = vadd.f32 0.0, %v3999
    %4001 = vmatprep.mubr.bf16.mxu0 %v220
    %4002 = vmatmul.mubr.bf16.gmra.mxu0 %v219
    %v4003 = vpop.f32.mrf.mxu0
    %v4004 = vadd.f32 0.0, %v4003
    %v4005 = vpop.f32.mrf.mxu0
    %v4006 = vadd.f32 0.0, %v4005
    %v4007 = vpop.f32.mrf.mxu0
    %v4008 = vadd.f32 0.0, %v4007
    %v4009 = vpop.f32.mrf.mxu0
    %v4010 = vadd.f32 0.0, %v4009
    %4011 = vdwg.mxu0
    %4012 = vmatprep.subr.bf16.mxu0 %v2300
    %4013 = vmatpush1.bf16.msra.mxu0 %v2299
    %4014 = vmatprep.subr.bf16.mxu0 %v2291
    %4015 = vmatpush1.bf16.msra.mxu0 %v2290
    %4016 = vmatprep.subr.bf16.mxu0 %v2282
    %4017 = vmatpush1.bf16.msra.mxu0 %v2281
    %4018 = vmatprep.subr.bf16.mxu0 %v2273
    %4019 = vmatpush1.bf16.msra.mxu0 %v2272
    %4020 = vmatprep.subr.bf16.mxu0 %v2264
    %4021 = vmatpush1.bf16.msra.mxu0 %v2263
    %4022 = vmatprep.subr.bf16.mxu0 %v2255
    %4023 = vmatpush1.bf16.msra.mxu0 %v2254
    %4024 = vmatprep.subr.bf16.mxu0 %v2246
    %4025 = vmatpush1.bf16.msra.mxu0 %v2245
    %4026 = vmatprep.subr.bf16.mxu0 %v2237
    %4027 = vmatpush1.bf16.msra.mxu0 %v2236
    %4028 = vmatprep.subr.bf16.mxu0 %v2372
    %4029 = vmatpush2.bf16.msra.mxu0 %v2371
    %4030 = vmatprep.subr.bf16.mxu0 %v2363
    %4031 = vmatpush2.bf16.msra.mxu0 %v2362
    %4032 = vmatprep.subr.bf16.mxu0 %v2354
    %4033 = vmatpush2.bf16.msra.mxu0 %v2353
    %4034 = vmatprep.subr.bf16.mxu0 %v2345
    %4035 = vmatpush2.bf16.msra.mxu0 %v2344
    %4036 = vmatprep.subr.bf16.mxu0 %v2336
    %4037 = vmatpush2.bf16.msra.mxu0 %v2335
    %4038 = vmatprep.subr.bf16.mxu0 %v2327
    %4039 = vmatpush2.bf16.msra.mxu0 %v2326
    %4040 = vmatprep.subr.bf16.mxu0 %v2318
    %4041 = vmatpush2.bf16.msra.mxu0 %v2317
    %4042 = vmatprep.subr.bf16.mxu0 %v2309
    %4043 = vmatpush2.bf16.msra.mxu0 %v2308
    %4044 = vmatprep.mubr.bf16.mxu0 %v173
    %4045 = vmatmul.mubr.bf16.gmra.mxu0 %v172
    %v4046 = vpop.f32.mrf.mxu0
    %v4047 = vadd.f32 %v3934, %v4046
    %v4048 = vpop.f32.mrf.mxu0
    %v4049 = vadd.f32 %v3936, %v4048
    %v4050 = vpop.f32.mrf.mxu0
    %v4051 = vadd.f32 %v3938, %v4050
    %v4052 = vpop.f32.mrf.mxu0
    %v4053 = vadd.f32 %v3940, %v4052
    %4054 = vmatprep.mubr.bf16.mxu0 %v180
    %4055 = vmatmul.mubr.bf16.gmra.mxu0 %v179
    %v4056 = vpop.f32.mrf.mxu0
    %v4057 = vadd.f32 %v3944, %v4056
    %v4058 = vpop.f32.mrf.mxu0
    %v4059 = vadd.f32 %v3946, %v4058
    %v4060 = vpop.f32.mrf.mxu0
    %v4061 = vadd.f32 %v3948, %v4060
    %v4062 = vpop.f32.mrf.mxu0
    %v4063 = vadd.f32 %v3950, %v4062
    %4064 = vmatprep.mubr.bf16.mxu0 %v187
    %4065 = vmatmul.mubr.bf16.gmra.mxu0 %v186
    %v4066 = vpop.f32.mrf.mxu0
    %v4067 = vadd.f32 %v3954, %v4066
    %v4068 = vpop.f32.mrf.mxu0
    %v4069 = vadd.f32 %v3956, %v4068
    %v4070 = vpop.f32.mrf.mxu0
    %v4071 = vadd.f32 %v3958, %v4070
    %v4072 = vpop.f32.mrf.mxu0
    %v4073 = vadd.f32 %v3960, %v4072
    %4074 = vmatprep.mubr.bf16.mxu0 %v194
    %4075 = vmatmul.mubr.bf16.gmra.mxu0 %v193
    %v4076 = vpop.f32.mrf.mxu0
    %v4077 = vadd.f32 %v3964, %v4076
    %v4078 = vpop.f32.mrf.mxu0
    %v4079 = vadd.f32 %v3966, %v4078
    %v4080 = vpop.f32.mrf.mxu0
    %v4081 = vadd.f32 %v3968, %v4080
    %v4082 = vpop.f32.mrf.mxu0
    %v4083 = vadd.f32 %v3970, %v4082
    %4084 = vmatprep.mubr.bf16.mxu0 %v201
    %4085 = vmatmul.mubr.bf16.gmra.mxu0 %v200
    %v4086 = vpop.f32.mrf.mxu0
    %v4087 = vadd.f32 %v3974, %v4086
    %v4088 = vpop.f32.mrf.mxu0
    %v4089 = vadd.f32 %v3976, %v4088
    %v4090 = vpop.f32.mrf.mxu0
    %v4091 = vadd.f32 %v3978, %v4090
    %v4092 = vpop.f32.mrf.mxu0
    %v4093 = vadd.f32 %v3980, %v4092
    %4094 = vmatprep.mubr.bf16.mxu0 %v208
    %4095 = vmatmul.mubr.bf16.gmra.mxu0 %v207
    %v4096 = vpop.f32.mrf.mxu0
    %v4097 = vadd.f32 %v3984, %v4096
    %v4098 = vpop.f32.mrf.mxu0
    %v4099 = vadd.f32 %v3986, %v4098
    %v4100 = vpop.f32.mrf.mxu0
    %v4101 = vadd.f32 %v3988, %v4100
    %v4102 = vpop.f32.mrf.mxu0
    %v4103 = vadd.f32 %v3990, %v4102
    %4104 = vmatprep.mubr.bf16.mxu0 %v215
    %4105 = vmatmul.mubr.bf16.gmra.mxu0 %v214
    %v4106 = vpop.f32.mrf.mxu0
    %v4107 = vadd.f32 %v3994, %v4106
    %v4108 = vpop.f32.mrf.mxu0
    %v4109 = vadd.f32 %v3996, %v4108
    %v4110 = vpop.f32.mrf.mxu0
    %v4111 = vadd.f32 %v3998, %v4110
    %v4112 = vpop.f32.mrf.mxu0
    %v4113 = vadd.f32 %v4000, %v4112
    %4114 = vmatprep.mubr.bf16.mxu0 %v222
    %4115 = vmatmul.mubr.bf16.gmra.mxu0 %v221
    %v4116 = vpop.f32.mrf.mxu0
    %v4117 = vadd.f32 %v4004, %v4116
    %v4118 = vpop.f32.mrf.mxu0
    %v4119 = vadd.f32 %v4006, %v4118
    %v4120 = vpop.f32.mrf.mxu0
    %v4121 = vadd.f32 %v4008, %v4120
    %v4122 = vpop.f32.mrf.mxu0
    %v4123 = vadd.f32 %v4010, %v4122
    %4124 = vdwg.mxu0
    %4125 = vmatprep.subr.bf16.mxu0 %v2444
    %4126 = vmatpush1.bf16.msra.mxu0 %v2443
    %4127 = vmatprep.subr.bf16.mxu0 %v2435
    %4128 = vmatpush1.bf16.msra.mxu0 %v2434
    %4129 = vmatprep.subr.bf16.mxu0 %v2426
    %4130 = vmatpush1.bf16.msra.mxu0 %v2425
    %4131 = vmatprep.subr.bf16.mxu0 %v2417
    %4132 = vmatpush1.bf16.msra.mxu0 %v2416
    %4133 = vmatprep.subr.bf16.mxu0 %v2408
    %4134 = vmatpush1.bf16.msra.mxu0 %v2407
    %4135 = vmatprep.subr.bf16.mxu0 %v2399
    %4136 = vmatpush1.bf16.msra.mxu0 %v2398
    %4137 = vmatprep.subr.bf16.mxu0 %v2390
    %4138 = vmatpush1.bf16.msra.mxu0 %v2389
    %4139 = vmatprep.subr.bf16.mxu0 %v2381
    %4140 = vmatpush1.bf16.msra.mxu0 %v2380
    %4141 = vmatprep.subr.bf16.mxu0 %v2516
    %4142 = vmatpush2.bf16.msra.mxu0 %v2515
    %4143 = vmatprep.subr.bf16.mxu0 %v2507
    %4144 = vmatpush2.bf16.msra.mxu0 %v2506
    %4145 = vmatprep.subr.bf16.mxu0 %v2498
    %4146 = vmatpush2.bf16.msra.mxu0 %v2497
    %4147 = vmatprep.subr.bf16.mxu0 %v2489
    %4148 = vmatpush2.bf16.msra.mxu0 %v2488
    %4149 = vmatprep.subr.bf16.mxu0 %v2480
    %4150 = vmatpush2.bf16.msra.mxu0 %v2479
    %4151 = vmatprep.subr.bf16.mxu0 %v2471
    %4152 = vmatpush2.bf16.msra.mxu0 %v2470
    %4153 = vmatprep.subr.bf16.mxu0 %v2462
    %4154 = vmatpush2.bf16.msra.mxu0 %v2461
    %4155 = vmatprep.subr.bf16.mxu0 %v2453
    %4156 = vmatpush2.bf16.msra.mxu0 %v2452
    %4157 = vmatprep.mubr.bf16.mxu0 %v175
    %4158 = vmatmul.mubr.bf16.gmra.mxu0 %v174
    %v4159 = vpop.f32.mrf.mxu0
    %v4160 = vadd.f32 %v4047, %v4159
    %v4161 = vpop.f32.mrf.mxu0
    %v4162 = vadd.f32 %v4049, %v4161
    %v4163 = vpop.f32.mrf.mxu0
    %v4164 = vadd.f32 %v4051, %v4163
    %v4165 = vpop.f32.mrf.mxu0
    %v4166 = vadd.f32 %v4053, %v4165
    %4167 = vmatprep.mubr.bf16.mxu0 %v182
    %4168 = vmatmul.mubr.bf16.gmra.mxu0 %v181
    %v4169 = vpop.f32.mrf.mxu0
    %v4170 = vadd.f32 %v4057, %v4169
    %v4171 = vpop.f32.mrf.mxu0
    %v4172 = vadd.f32 %v4059, %v4171
    %v4173 = vpop.f32.mrf.mxu0
    %v4174 = vadd.f32 %v4061, %v4173
    %v4175 = vpop.f32.mrf.mxu0
    %v4176 = vadd.f32 %v4063, %v4175
    %4177 = vmatprep.mubr.bf16.mxu0 %v189
    %4178 = vmatmul.mubr.bf16.gmra.mxu0 %v188
    %v4179 = vpop.f32.mrf.mxu0
    %v4180 = vadd.f32 %v4067, %v4179
    %v4181 = vpop.f32.mrf.mxu0
    %v4182 = vadd.f32 %v4069, %v4181
    %v4183 = vpop.f32.mrf.mxu0
    %v4184 = vadd.f32 %v4071, %v4183
    %v4185 = vpop.f32.mrf.mxu0
    %v4186 = vadd.f32 %v4073, %v4185
    %4187 = vmatprep.mubr.bf16.mxu0 %v196
    %4188 = vmatmul.mubr.bf16.gmra.mxu0 %v195
    %v4189 = vpop.f32.mrf.mxu0
    %v4190 = vadd.f32 %v4077, %v4189
    %v4191 = vpop.f32.mrf.mxu0
    %v4192 = vadd.f32 %v4079, %v4191
    %v4193 = vpop.f32.mrf.mxu0
    %v4194 = vadd.f32 %v4081, %v4193
    %v4195 = vpop.f32.mrf.mxu0
    %v4196 = vadd.f32 %v4083, %v4195
    %4197 = vmatprep.mubr.bf16.mxu0 %v203
    %4198 = vmatmul.mubr.bf16.gmra.mxu0 %v202
    %v4199 = vpop.f32.mrf.mxu0
    %v4200 = vadd.f32 %v4087, %v4199
    %v4201 = vpop.f32.mrf.mxu0
    %v4202 = vadd.f32 %v4089, %v4201
    %v4203 = vpop.f32.mrf.mxu0
    %v4204 = vadd.f32 %v4091, %v4203
    %v4205 = vpop.f32.mrf.mxu0
    %v4206 = vadd.f32 %v4093, %v4205
    %4207 = vmatprep.mubr.bf16.mxu0 %v210
    %4208 = vmatmul.mubr.bf16.gmra.mxu0 %v209
    %v4209 = vpop.f32.mrf.mxu0
    %v4210 = vadd.f32 %v4097, %v4209
    %v4211 = vpop.f32.mrf.mxu0
    %v4212 = vadd.f32 %v4099, %v4211
    %v4213 = vpop.f32.mrf.mxu0
    %v4214 = vadd.f32 %v4101, %v4213
    %v4215 = vpop.f32.mrf.mxu0
    %v4216 = vadd.f32 %v4103, %v4215
    %4217 = vmatprep.mubr.bf16.mxu0 %v217
    %4218 = vmatmul.mubr.bf16.gmra.mxu0 %v216
    %v4219 = vpop.f32.mrf.mxu0
    %v4220 = vadd.f32 %v4107, %v4219
    %v4221 = vpop.f32.mrf.mxu0
    %v4222 = vadd.f32 %v4109, %v4221
    %v4223 = vpop.f32.mrf.mxu0
    %v4224 = vadd.f32 %v4111, %v4223
    %v4225 = vpop.f32.mrf.mxu0
    %v4226 = vadd.f32 %v4113, %v4225
    %4227 = vmatprep.mubr.bf16.mxu0 %v224
    %4228 = vmatmul.mubr.bf16.gmra.mxu0 %v223
    %v4229 = vpop.f32.mrf.mxu0
    %v4230 = vadd.f32 %v4117, %v4229
    %v4231 = vpop.f32.mrf.mxu0
    %v4232 = vadd.f32 %v4119, %v4231
    %v4233 = vpop.f32.mrf.mxu0
    %v4234 = vadd.f32 %v4121, %v4233
    %v4235 = vpop.f32.mrf.mxu0
    %v4236 = vadd.f32 %v4123, %v4235
    %4237 = vdwg.mxu0
    %4238 = vmatprep.subr.bf16.mxu0 0
    %4239 = vmatpush1.bf16.msra.mxu0 0
    %4240 = vmatprep.subr.bf16.mxu0 0
    %4241 = vmatpush1.bf16.msra.mxu0 0
    %4242 = vmatprep.subr.bf16.mxu0 0
    %4243 = vmatpush1.bf16.msra.mxu0 0
    %4244 = vmatprep.subr.bf16.mxu0 0
    %4245 = vmatpush1.bf16.msra.mxu0 0
    %4246 = vmatprep.subr.bf16.mxu0 0
    %4247 = vmatpush1.bf16.msra.mxu0 0
    %4248 = vmatprep.subr.bf16.mxu0 0
    %4249 = vmatpush1.bf16.msra.mxu0 0
    %4250 = vmatprep.subr.bf16.mxu0 0
    %4251 = vmatpush1.bf16.msra.mxu0 0
    %4252 = vmatprep.subr.bf16.mxu0 %v2525
    %4253 = vmatpush1.bf16.msra.mxu0 %v2524
    %4254 = vmatprep.subr.bf16.mxu0 0
    %4255 = vmatpush2.bf16.msra.mxu0 0
    %4256 = vmatprep.subr.bf16.mxu0 0
    %4257 = vmatpush2.bf16.msra.mxu0 0
    %4258 = vmatprep.subr.bf16.mxu0 0
    %4259 = vmatpush2.bf16.msra.mxu0 0
    %4260 = vmatprep.subr.bf16.mxu0 0
    %4261 = vmatpush2.bf16.msra.mxu0 0
    %4262 = vmatprep.subr.bf16.mxu0 0
    %4263 = vmatpush2.bf16.msra.mxu0 0
    %4264 = vmatprep.subr.bf16.mxu0 0
    %4265 = vmatpush2.bf16.msra.mxu0 0
    %4266 = vmatprep.subr.bf16.mxu0 0
    %4267 = vmatpush2.bf16.msra.mxu0 0
    %4268 = vmatprep.subr.bf16.mxu0 0
    %4269 = vmatpush2.bf16.msra.mxu0 0
    %4270 = vmatprep.mubr.bf16.mxu0 0
    %4271 = vmatmul.mubr.bf16.gmra.mxu0 %v2972
    %v4272 = vpop.f32.mrf.mxu0
    %v4273 = vadd.f32 %v4160, %v4272
    %v4274 = vpop.f32.mrf.mxu0
    %v4275 = vadd.f32 %v4162, %v4274
    %v4276 = vpop.f32.mrf.mxu0
    %v4277 = vadd.f32 %v4164, %v4276
    %v4278 = vpop.f32.mrf.mxu0
    %v4279 = vadd.f32 %v4166, %v4278
    %4280 = vmatprep.mubr.bf16.mxu0 0
    %4281 = vmatmul.mubr.bf16.gmra.mxu0 %v2975
    %v4282 = vpop.f32.mrf.mxu0
    %v4283 = vadd.f32 %v4170, %v4282
    %v4284 = vpop.f32.mrf.mxu0
    %v4285 = vadd.f32 %v4172, %v4284
    %v4286 = vpop.f32.mrf.mxu0
    %v4287 = vadd.f32 %v4174, %v4286
    %v4288 = vpop.f32.mrf.mxu0
    %v4289 = vadd.f32 %v4176, %v4288
    %4290 = vmatprep.mubr.bf16.mxu0 0
    %4291 = vmatmul.mubr.bf16.gmra.mxu0 %v2978
    %v4292 = vpop.f32.mrf.mxu0
    %v4293 = vadd.f32 %v4180, %v4292
    %v4294 = vpop.f32.mrf.mxu0
    %v4295 = vadd.f32 %v4182, %v4294
    %v4296 = vpop.f32.mrf.mxu0
    %v4297 = vadd.f32 %v4184, %v4296
    %v4298 = vpop.f32.mrf.mxu0
    %v4299 = vadd.f32 %v4186, %v4298
    %4300 = vmatprep.mubr.bf16.mxu0 0
    %4301 = vmatmul.mubr.bf16.gmra.mxu0 %v2981
    %v4302 = vpop.f32.mrf.mxu0
    %v4303 = vadd.f32 %v4190, %v4302
    %v4304 = vpop.f32.mrf.mxu0
    %v4305 = vadd.f32 %v4192, %v4304
    %v4306 = vpop.f32.mrf.mxu0
    %v4307 = vadd.f32 %v4194, %v4306
    %v4308 = vpop.f32.mrf.mxu0
    %v4309 = vadd.f32 %v4196, %v4308
    %4310 = vmatprep.mubr.bf16.mxu0 0
    %4311 = vmatmul.mubr.bf16.gmra.mxu0 %v2984
    %v4312 = vpop.f32.mrf.mxu0
    %v4313 = vadd.f32 %v4200, %v4312
    %v4314 = vpop.f32.mrf.mxu0
    %v4315 = vadd.f32 %v4202, %v4314
    %v4316 = vpop.f32.mrf.mxu0
    %v4317 = vadd.f32 %v4204, %v4316
    %v4318 = vpop.f32.mrf.mxu0
    %v4319 = vadd.f32 %v4206, %v4318
    %4320 = vmatprep.mubr.bf16.mxu0 0
    %4321 = vmatmul.mubr.bf16.gmra.mxu0 %v2987
    %v4322 = vpop.f32.mrf.mxu0
    %v4323 = vadd.f32 %v4210, %v4322
    %v4324 = vpop.f32.mrf.mxu0
    %v4325 = vadd.f32 %v4212, %v4324
    %v4326 = vpop.f32.mrf.mxu0
    %v4327 = vadd.f32 %v4214, %v4326
    %v4328 = vpop.f32.mrf.mxu0
    %v4329 = vadd.f32 %v4216, %v4328
    %4330 = vmatprep.mubr.bf16.mxu0 0
    %4331 = vmatmul.mubr.bf16.gmra.mxu0 %v2990
    %v4332 = vpop.f32.mrf.mxu0
    %v4333 = vadd.f32 %v4220, %v4332
    %v4334 = vpop.f32.mrf.mxu0
    %v4335 = vadd.f32 %v4222, %v4334
    %v4336 = vpop.f32.mrf.mxu0
    %v4337 = vadd.f32 %v4224, %v4336
    %v4338 = vpop.f32.mrf.mxu0
    %v4339 = vadd.f32 %v4226, %v4338
    %4340 = vmatprep.mubr.bf16.mxu0 0
    %4341 = vmatmul.mubr.bf16.gmra.mxu0 %v2993
    %v4342 = vpop.f32.mrf.mxu0
    %v4343 = vadd.f32 %v4230, %v4342
    %v4344 = vpop.f32.mrf.mxu0
    %v4345 = vadd.f32 %v4232, %v4344
    %v4346 = vpop.f32.mrf.mxu0
    %v4347 = vadd.f32 %v4234, %v4346
    %v4348 = vpop.f32.mrf.mxu0
    %v4349 = vadd.f32 %v4236, %v4348
    %4350 = vdwg.mxu0
    %4351 = vmatprep.subr.bf16.mxu0 %v2158
    %4352 = vmatpush1.bf16.msra.mxu0 %v2157
    %4353 = vmatprep.subr.bf16.mxu0 %v2149
    %4354 = vmatpush1.bf16.msra.mxu0 %v2148
    %4355 = vmatprep.subr.bf16.mxu0 %v2140
    %4356 = vmatpush1.bf16.msra.mxu0 %v2139
    %4357 = vmatprep.subr.bf16.mxu0 %v2131
    %4358 = vmatpush1.bf16.msra.mxu0 %v2130
    %4359 = vmatprep.subr.bf16.mxu0 %v2122
    %4360 = vmatpush1.bf16.msra.mxu0 %v2121
    %4361 = vmatprep.subr.bf16.mxu0 %v2113
    %4362 = vmatpush1.bf16.msra.mxu0 %v2112
    %4363 = vmatprep.subr.bf16.mxu0 %v2104
    %4364 = vmatpush1.bf16.msra.mxu0 %v2103
    %4365 = vmatprep.subr.bf16.mxu0 %v2095
    %4366 = vmatpush1.bf16.msra.mxu0 %v2094
    %4367 = vmatprep.subr.bf16.mxu0 %v2230
    %4368 = vmatpush2.bf16.msra.mxu0 %v2229
    %4369 = vmatprep.subr.bf16.mxu0 %v2221
    %4370 = vmatpush2.bf16.msra.mxu0 %v2220
    %4371 = vmatprep.subr.bf16.mxu0 %v2212
    %4372 = vmatpush2.bf16.msra.mxu0 %v2211
    %4373 = vmatprep.subr.bf16.mxu0 %v2203
    %4374 = vmatpush2.bf16.msra.mxu0 %v2202
    %4375 = vmatprep.subr.bf16.mxu0 %v2194
    %4376 = vmatpush2.bf16.msra.mxu0 %v2193
    %4377 = vmatprep.subr.bf16.mxu0 %v2185
    %4378 = vmatpush2.bf16.msra.mxu0 %v2184
    %4379 = vmatprep.subr.bf16.mxu0 %v2176
    %4380 = vmatpush2.bf16.msra.mxu0 %v2175
    %4381 = vmatprep.subr.bf16.mxu0 %v2167
    %4382 = vmatpush2.bf16.msra.mxu0 %v2166
    %4383 = vmatprep.mubr.bf16.mxu0 %v171
    %4384 = vmatmul.mubr.bf16.gmra.mxu0 %v170
    %v4385 = vpop.f32.mrf.mxu0
    %v4386 = vadd.f32 0.0, %v4385
    %v4387 = vpop.f32.mrf.mxu0
    %v4388 = vadd.f32 0.0, %v4387
    %v4389 = vpop.f32.mrf.mxu0
    %v4390 = vadd.f32 0.0, %v4389
    %v4391 = vpop.f32.mrf.mxu0
    %v4392 = vadd.f32 0.0, %v4391
    %4393 = vmatprep.mubr.bf16.mxu0 %v178
    %4394 = vmatmul.mubr.bf16.gmra.mxu0 %v177
    %v4395 = vpop.f32.mrf.mxu0
    %v4396 = vadd.f32 0.0, %v4395
    %v4397 = vpop.f32.mrf.mxu0
    %v4398 = vadd.f32 0.0, %v4397
    %v4399 = vpop.f32.mrf.mxu0
    %v4400 = vadd.f32 0.0, %v4399
    %v4401 = vpop.f32.mrf.mxu0
    %v4402 = vadd.f32 0.0, %v4401
    %4403 = vmatprep.mubr.bf16.mxu0 %v185
    %4404 = vmatmul.mubr.bf16.gmra.mxu0 %v184
    %v4405 = vpop.f32.mrf.mxu0
    %v4406 = vadd.f32 0.0, %v4405
    %v4407 = vpop.f32.mrf.mxu0
    %v4408 = vadd.f32 0.0, %v4407
    %v4409 = vpop.f32.mrf.mxu0
    %v4410 = vadd.f32 0.0, %v4409
    %v4411 = vpop.f32.mrf.mxu0
    %v4412 = vadd.f32 0.0, %v4411
    %4413 = vmatprep.mubr.bf16.mxu0 %v192
    %4414 = vmatmul.mubr.bf16.gmra.mxu0 %v191
    %v4415 = vpop.f32.mrf.mxu0
    %v4416 = vadd.f32 0.0, %v4415
    %v4417 = vpop.f32.mrf.mxu0
    %v4418 = vadd.f32 0.0, %v4417
    %v4419 = vpop.f32.mrf.mxu0
    %v4420 = vadd.f32 0.0, %v4419
    %v4421 = vpop.f32.mrf.mxu0
    %v4422 = vadd.f32 0.0, %v4421
    %4423 = vmatprep.mubr.bf16.mxu0 %v199
    %4424 = vmatmul.mubr.bf16.gmra.mxu0 %v198
    %v4425 = vpop.f32.mrf.mxu0
    %v4426 = vadd.f32 0.0, %v4425
    %v4427 = vpop.f32.mrf.mxu0
    %v4428 = vadd.f32 0.0, %v4427
    %v4429 = vpop.f32.mrf.mxu0
    %v4430 = vadd.f32 0.0, %v4429
    %v4431 = vpop.f32.mrf.mxu0
    %v4432 = vadd.f32 0.0, %v4431
    %4433 = vmatprep.mubr.bf16.mxu0 %v206
    %4434 = vmatmul.mubr.bf16.gmra.mxu0 %v205
    %v4435 = vpop.f32.mrf.mxu0
    %v4436 = vadd.f32 0.0, %v4435
    %v4437 = vpop.f32.mrf.mxu0
    %v4438 = vadd.f32 0.0, %v4437
    %v4439 = vpop.f32.mrf.mxu0
    %v4440 = vadd.f32 0.0, %v4439
    %v4441 = vpop.f32.mrf.mxu0
    %v4442 = vadd.f32 0.0, %v4441
    %4443 = vmatprep.mubr.bf16.mxu0 %v213
    %4444 = vmatmul.mubr.bf16.gmra.mxu0 %v212
    %v4445 = vpop.f32.mrf.mxu0
    %v4446 = vadd.f32 0.0, %v4445
    %v4447 = vpop.f32.mrf.mxu0
    %v4448 = vadd.f32 0.0, %v4447
    %v4449 = vpop.f32.mrf.mxu0
    %v4450 = vadd.f32 0.0, %v4449
    %v4451 = vpop.f32.mrf.mxu0
    %v4452 = vadd.f32 0.0, %v4451
    %4453 = vmatprep.mubr.bf16.mxu0 %v220
    %4454 = vmatmul.mubr.bf16.gmra.mxu0 %v219
    %v4455 = vpop.f32.mrf.mxu0
    %v4456 = vadd.f32 0.0, %v4455
    %v4457 = vpop.f32.mrf.mxu0
    %v4458 = vadd.f32 0.0, %v4457
    %v4459 = vpop.f32.mrf.mxu0
    %v4460 = vadd.f32 0.0, %v4459
    %v4461 = vpop.f32.mrf.mxu0
    %v4462 = vadd.f32 0.0, %v4461
    %4463 = vdwg.mxu0
    %4464 = vmatprep.subr.bf16.mxu0 %v2302
    %4465 = vmatpush1.bf16.msra.mxu0 %v2301
    %4466 = vmatprep.subr.bf16.mxu0 %v2293
    %4467 = vmatpush1.bf16.msra.mxu0 %v2292
    %4468 = vmatprep.subr.bf16.mxu0 %v2284
    %4469 = vmatpush1.bf16.msra.mxu0 %v2283
    %4470 = vmatprep.subr.bf16.mxu0 %v2275
    %4471 = vmatpush1.bf16.msra.mxu0 %v2274
    %4472 = vmatprep.subr.bf16.mxu0 %v2266
    %4473 = vmatpush1.bf16.msra.mxu0 %v2265
    %4474 = vmatprep.subr.bf16.mxu0 %v2257
    %4475 = vmatpush1.bf16.msra.mxu0 %v2256
    %4476 = vmatprep.subr.bf16.mxu0 %v2248
    %4477 = vmatpush1.bf16.msra.mxu0 %v2247
    %4478 = vmatprep.subr.bf16.mxu0 %v2239
    %4479 = vmatpush1.bf16.msra.mxu0 %v2238
    %4480 = vmatprep.subr.bf16.mxu0 %v2374
    %4481 = vmatpush2.bf16.msra.mxu0 %v2373
    %4482 = vmatprep.subr.bf16.mxu0 %v2365
    %4483 = vmatpush2.bf16.msra.mxu0 %v2364
    %4484 = vmatprep.subr.bf16.mxu0 %v2356
    %4485 = vmatpush2.bf16.msra.mxu0 %v2355
    %4486 = vmatprep.subr.bf16.mxu0 %v2347
    %4487 = vmatpush2.bf16.msra.mxu0 %v2346
    %4488 = vmatprep.subr.bf16.mxu0 %v2338
    %4489 = vmatpush2.bf16.msra.mxu0 %v2337
    %4490 = vmatprep.subr.bf16.mxu0 %v2329
    %4491 = vmatpush2.bf16.msra.mxu0 %v2328
    %4492 = vmatprep.subr.bf16.mxu0 %v2320
    %4493 = vmatpush2.bf16.msra.mxu0 %v2319
    %4494 = vmatprep.subr.bf16.mxu0 %v2311
    %4495 = vmatpush2.bf16.msra.mxu0 %v2310
    %4496 = vmatprep.mubr.bf16.mxu0 %v173
    %4497 = vmatmul.mubr.bf16.gmra.mxu0 %v172
    %v4498 = vpop.f32.mrf.mxu0
    %v4499 = vadd.f32 %v4386, %v4498
    %v4500 = vpop.f32.mrf.mxu0
    %v4501 = vadd.f32 %v4388, %v4500
    %v4502 = vpop.f32.mrf.mxu0
    %v4503 = vadd.f32 %v4390, %v4502
    %v4504 = vpop.f32.mrf.mxu0
    %v4505 = vadd.f32 %v4392, %v4504
    %4506 = vmatprep.mubr.bf16.mxu0 %v180
    %4507 = vmatmul.mubr.bf16.gmra.mxu0 %v179
    %v4508 = vpop.f32.mrf.mxu0
    %v4509 = vadd.f32 %v4396, %v4508
    %v4510 = vpop.f32.mrf.mxu0
    %v4511 = vadd.f32 %v4398, %v4510
    %v4512 = vpop.f32.mrf.mxu0
    %v4513 = vadd.f32 %v4400, %v4512
    %v4514 = vpop.f32.mrf.mxu0
    %v4515 = vadd.f32 %v4402, %v4514
    %4516 = vmatprep.mubr.bf16.mxu0 %v187
    %4517 = vmatmul.mubr.bf16.gmra.mxu0 %v186
    %v4518 = vpop.f32.mrf.mxu0
    %v4519 = vadd.f32 %v4406, %v4518
    %v4520 = vpop.f32.mrf.mxu0
    %v4521 = vadd.f32 %v4408, %v4520
    %v4522 = vpop.f32.mrf.mxu0
    %v4523 = vadd.f32 %v4410, %v4522
    %v4524 = vpop.f32.mrf.mxu0
    %v4525 = vadd.f32 %v4412, %v4524
    %4526 = vmatprep.mubr.bf16.mxu0 %v194
    %4527 = vmatmul.mubr.bf16.gmra.mxu0 %v193
    %v4528 = vpop.f32.mrf.mxu0
    %v4529 = vadd.f32 %v4416, %v4528
    %v4530 = vpop.f32.mrf.mxu0
    %v4531 = vadd.f32 %v4418, %v4530
    %v4532 = vpop.f32.mrf.mxu0
    %v4533 = vadd.f32 %v4420, %v4532
    %v4534 = vpop.f32.mrf.mxu0
    %v4535 = vadd.f32 %v4422, %v4534
    %4536 = vmatprep.mubr.bf16.mxu0 %v201
    %4537 = vmatmul.mubr.bf16.gmra.mxu0 %v200
    %v4538 = vpop.f32.mrf.mxu0
    %v4539 = vadd.f32 %v4426, %v4538
    %v4540 = vpop.f32.mrf.mxu0
    %v4541 = vadd.f32 %v4428, %v4540
    %v4542 = vpop.f32.mrf.mxu0
    %v4543 = vadd.f32 %v4430, %v4542
    %v4544 = vpop.f32.mrf.mxu0
    %v4545 = vadd.f32 %v4432, %v4544
    %4546 = vmatprep.mubr.bf16.mxu0 %v208
    %4547 = vmatmul.mubr.bf16.gmra.mxu0 %v207
    %v4548 = vpop.f32.mrf.mxu0
    %v4549 = vadd.f32 %v4436, %v4548
    %v4550 = vpop.f32.mrf.mxu0
    %v4551 = vadd.f32 %v4438, %v4550
    %v4552 = vpop.f32.mrf.mxu0
    %v4553 = vadd.f32 %v4440, %v4552
    %v4554 = vpop.f32.mrf.mxu0
    %v4555 = vadd.f32 %v4442, %v4554
    %4556 = vmatprep.mubr.bf16.mxu0 %v215
    %4557 = vmatmul.mubr.bf16.gmra.mxu0 %v214
    %v4558 = vpop.f32.mrf.mxu0
    %v4559 = vadd.f32 %v4446, %v4558
    %v4560 = vpop.f32.mrf.mxu0
    %v4561 = vadd.f32 %v4448, %v4560
    %v4562 = vpop.f32.mrf.mxu0
    %v4563 = vadd.f32 %v4450, %v4562
    %v4564 = vpop.f32.mrf.mxu0
    %v4565 = vadd.f32 %v4452, %v4564
    %4566 = vmatprep.mubr.bf16.mxu0 %v222
    %4567 = vmatmul.mubr.bf16.gmra.mxu0 %v221
    %v4568 = vpop.f32.mrf.mxu0
    %v4569 = vadd.f32 %v4456, %v4568
    %v4570 = vpop.f32.mrf.mxu0
    %v4571 = vadd.f32 %v4458, %v4570
    %v4572 = vpop.f32.mrf.mxu0
    %v4573 = vadd.f32 %v4460, %v4572
    %v4574 = vpop.f32.mrf.mxu0
    %v4575 = vadd.f32 %v4462, %v4574
    %4576 = vdwg.mxu0
    %4577 = vmatprep.subr.bf16.mxu0 %v2446
    %4578 = vmatpush1.bf16.msra.mxu0 %v2445
    %4579 = vmatprep.subr.bf16.mxu0 %v2437
    %4580 = vmatpush1.bf16.msra.mxu0 %v2436
    %4581 = vmatprep.subr.bf16.mxu0 %v2428
    %4582 = vmatpush1.bf16.msra.mxu0 %v2427
    %4583 = vmatprep.subr.bf16.mxu0 %v2419
    %4584 = vmatpush1.bf16.msra.mxu0 %v2418
    %4585 = vmatprep.subr.bf16.mxu0 %v2410
    %4586 = vmatpush1.bf16.msra.mxu0 %v2409
    %4587 = vmatprep.subr.bf16.mxu0 %v2401
    %4588 = vmatpush1.bf16.msra.mxu0 %v2400
    %4589 = vmatprep.subr.bf16.mxu0 %v2392
    %4590 = vmatpush1.bf16.msra.mxu0 %v2391
    %4591 = vmatprep.subr.bf16.mxu0 %v2383
    %4592 = vmatpush1.bf16.msra.mxu0 %v2382
    %4593 = vmatprep.subr.bf16.mxu0 %v2518
    %4594 = vmatpush2.bf16.msra.mxu0 %v2517
    %4595 = vmatprep.subr.bf16.mxu0 %v2509
    %4596 = vmatpush2.bf16.msra.mxu0 %v2508
    %4597 = vmatprep.subr.bf16.mxu0 %v2500
    %4598 = vmatpush2.bf16.msra.mxu0 %v2499
    %4599 = vmatprep.subr.bf16.mxu0 %v2491
    %4600 = vmatpush2.bf16.msra.mxu0 %v2490
    %4601 = vmatprep.subr.bf16.mxu0 %v2482
    %4602 = vmatpush2.bf16.msra.mxu0 %v2481
    %4603 = vmatprep.subr.bf16.mxu0 %v2473
    %4604 = vmatpush2.bf16.msra.mxu0 %v2472
    %4605 = vmatprep.subr.bf16.mxu0 %v2464
    %4606 = vmatpush2.bf16.msra.mxu0 %v2463
    %4607 = vmatprep.subr.bf16.mxu0 %v2455
    %4608 = vmatpush2.bf16.msra.mxu0 %v2454
    %4609 = vmatprep.mubr.bf16.mxu0 %v175
    %4610 = vmatmul.mubr.bf16.gmra.mxu0 %v174
    %v4611 = vpop.f32.mrf.mxu0
    %v4612 = vadd.f32 %v4499, %v4611
    %v4613 = vpop.f32.mrf.mxu0
    %v4614 = vadd.f32 %v4501, %v4613
    %v4615 = vpop.f32.mrf.mxu0
    %v4616 = vadd.f32 %v4503, %v4615
    %v4617 = vpop.f32.mrf.mxu0
    %v4618 = vadd.f32 %v4505, %v4617
    %4619 = vmatprep.mubr.bf16.mxu0 %v182
    %4620 = vmatmul.mubr.bf16.gmra.mxu0 %v181
    %v4621 = vpop.f32.mrf.mxu0
    %v4622 = vadd.f32 %v4509, %v4621
    %v4623 = vpop.f32.mrf.mxu0
    %v4624 = vadd.f32 %v4511, %v4623
    %v4625 = vpop.f32.mrf.mxu0
    %v4626 = vadd.f32 %v4513, %v4625
    %v4627 = vpop.f32.mrf.mxu0
    %v4628 = vadd.f32 %v4515, %v4627
    %4629 = vmatprep.mubr.bf16.mxu0 %v189
    %4630 = vmatmul.mubr.bf16.gmra.mxu0 %v188
    %v4631 = vpop.f32.mrf.mxu0
    %v4632 = vadd.f32 %v4519, %v4631
    %v4633 = vpop.f32.mrf.mxu0
    %v4634 = vadd.f32 %v4521, %v4633
    %v4635 = vpop.f32.mrf.mxu0
    %v4636 = vadd.f32 %v4523, %v4635
    %v4637 = vpop.f32.mrf.mxu0
    %v4638 = vadd.f32 %v4525, %v4637
    %4639 = vmatprep.mubr.bf16.mxu0 %v196
    %4640 = vmatmul.mubr.bf16.gmra.mxu0 %v195
    %v4641 = vpop.f32.mrf.mxu0
    %v4642 = vadd.f32 %v4529, %v4641
    %v4643 = vpop.f32.mrf.mxu0
    %v4644 = vadd.f32 %v4531, %v4643
    %v4645 = vpop.f32.mrf.mxu0
    %v4646 = vadd.f32 %v4533, %v4645
    %v4647 = vpop.f32.mrf.mxu0
    %v4648 = vadd.f32 %v4535, %v4647
    %4649 = vmatprep.mubr.bf16.mxu0 %v203
    %4650 = vmatmul.mubr.bf16.gmra.mxu0 %v202
    %v4651 = vpop.f32.mrf.mxu0
    %v4652 = vadd.f32 %v4539, %v4651
    %v4653 = vpop.f32.mrf.mxu0
    %v4654 = vadd.f32 %v4541, %v4653
    %v4655 = vpop.f32.mrf.mxu0
    %v4656 = vadd.f32 %v4543, %v4655
    %v4657 = vpop.f32.mrf.mxu0
    %v4658 = vadd.f32 %v4545, %v4657
    %4659 = vmatprep.mubr.bf16.mxu0 %v210
    %4660 = vmatmul.mubr.bf16.gmra.mxu0 %v209
    %v4661 = vpop.f32.mrf.mxu0
    %v4662 = vadd.f32 %v4549, %v4661
    %v4663 = vpop.f32.mrf.mxu0
    %v4664 = vadd.f32 %v4551, %v4663
    %v4665 = vpop.f32.mrf.mxu0
    %v4666 = vadd.f32 %v4553, %v4665
    %v4667 = vpop.f32.mrf.mxu0
    %v4668 = vadd.f32 %v4555, %v4667
    %4669 = vmatprep.mubr.bf16.mxu0 %v217
    %4670 = vmatmul.mubr.bf16.gmra.mxu0 %v216
    %v4671 = vpop.f32.mrf.mxu0
    %v4672 = vadd.f32 %v4559, %v4671
    %v4673 = vpop.f32.mrf.mxu0
    %v4674 = vadd.f32 %v4561, %v4673
    %v4675 = vpop.f32.mrf.mxu0
    %v4676 = vadd.f32 %v4563, %v4675
    %v4677 = vpop.f32.mrf.mxu0
    %v4678 = vadd.f32 %v4565, %v4677
    %4679 = vmatprep.mubr.bf16.mxu0 %v224
    %4680 = vmatmul.mubr.bf16.gmra.mxu0 %v223
    %v4681 = vpop.f32.mrf.mxu0
    %v4682 = vadd.f32 %v4569, %v4681
    %v4683 = vpop.f32.mrf.mxu0
    %v4684 = vadd.f32 %v4571, %v4683
    %v4685 = vpop.f32.mrf.mxu0
    %v4686 = vadd.f32 %v4573, %v4685
    %v4687 = vpop.f32.mrf.mxu0
    %v4688 = vadd.f32 %v4575, %v4687
    %4689 = vdwg.mxu0
    %4690 = vmatprep.subr.bf16.mxu0 0
    %4691 = vmatpush1.bf16.msra.mxu0 0
    %4692 = vmatprep.subr.bf16.mxu0 0
    %4693 = vmatpush1.bf16.msra.mxu0 0
    %4694 = vmatprep.subr.bf16.mxu0 0
    %4695 = vmatpush1.bf16.msra.mxu0 0
    %4696 = vmatprep.subr.bf16.mxu0 0
    %4697 = vmatpush1.bf16.msra.mxu0 0
    %4698 = vmatprep.subr.bf16.mxu0 0
    %4699 = vmatpush1.bf16.msra.mxu0 0
    %4700 = vmatprep.subr.bf16.mxu0 0
    %4701 = vmatpush1.bf16.msra.mxu0 0
    %4702 = vmatprep.subr.bf16.mxu0 0
    %4703 = vmatpush1.bf16.msra.mxu0 0
    %4704 = vmatprep.subr.bf16.mxu0 %v2527
    %4705 = vmatpush1.bf16.msra.mxu0 %v2526
    %4706 = vmatprep.subr.bf16.mxu0 0
    %4707 = vmatpush2.bf16.msra.mxu0 0
    %4708 = vmatprep.subr.bf16.mxu0 0
    %4709 = vmatpush2.bf16.msra.mxu0 0
    %4710 = vmatprep.subr.bf16.mxu0 0
    %4711 = vmatpush2.bf16.msra.mxu0 0
    %4712 = vmatprep.subr.bf16.mxu0 0
    %4713 = vmatpush2.bf16.msra.mxu0 0
    %4714 = vmatprep.subr.bf16.mxu0 0
    %4715 = vmatpush2.bf16.msra.mxu0 0
    %4716 = vmatprep.subr.bf16.mxu0 0
    %4717 = vmatpush2.bf16.msra.mxu0 0
    %4718 = vmatprep.subr.bf16.mxu0 0
    %4719 = vmatpush2.bf16.msra.mxu0 0
    %4720 = vmatprep.subr.bf16.mxu0 0
    %4721 = vmatpush2.bf16.msra.mxu0 0
    %4722 = vmatprep.mubr.bf16.mxu0 0
    %4723 = vmatmul.mubr.bf16.gmra.mxu0 %v2972
    %v4724 = vpop.f32.mrf.mxu0
    %v4725 = vadd.f32 %v4612, %v4724
    %v4726 = vpop.f32.mrf.mxu0
    %v4727 = vadd.f32 %v4614, %v4726
    %v4728 = vpop.f32.mrf.mxu0
    %v4729 = vadd.f32 %v4616, %v4728
    %v4730 = vpop.f32.mrf.mxu0
    %v4731 = vadd.f32 %v4618, %v4730
    %4732 = vmatprep.mubr.bf16.mxu0 0
    %4733 = vmatmul.mubr.bf16.gmra.mxu0 %v2975
    %v4734 = vpop.f32.mrf.mxu0
    %v4735 = vadd.f32 %v4622, %v4734
    %v4736 = vpop.f32.mrf.mxu0
    %v4737 = vadd.f32 %v4624, %v4736
    %v4738 = vpop.f32.mrf.mxu0
    %v4739 = vadd.f32 %v4626, %v4738
    %v4740 = vpop.f32.mrf.mxu0
    %v4741 = vadd.f32 %v4628, %v4740
    %4742 = vmatprep.mubr.bf16.mxu0 0
    %4743 = vmatmul.mubr.bf16.gmra.mxu0 %v2978
    %v4744 = vpop.f32.mrf.mxu0
    %v4745 = vadd.f32 %v4632, %v4744
    %v4746 = vpop.f32.mrf.mxu0
    %v4747 = vadd.f32 %v4634, %v4746
    %v4748 = vpop.f32.mrf.mxu0
    %v4749 = vadd.f32 %v4636, %v4748
    %v4750 = vpop.f32.mrf.mxu0
    %v4751 = vadd.f32 %v4638, %v4750
    %4752 = vmatprep.mubr.bf16.mxu0 0
    %4753 = vmatmul.mubr.bf16.gmra.mxu0 %v2981
    %v4754 = vpop.f32.mrf.mxu0
    %v4755 = vadd.f32 %v4642, %v4754
    %v4756 = vpop.f32.mrf.mxu0
    %v4757 = vadd.f32 %v4644, %v4756
    %v4758 = vpop.f32.mrf.mxu0
    %v4759 = vadd.f32 %v4646, %v4758
    %v4760 = vpop.f32.mrf.mxu0
    %v4761 = vadd.f32 %v4648, %v4760
    %4762 = vmatprep.mubr.bf16.mxu0 0
    %4763 = vmatmul.mubr.bf16.gmra.mxu0 %v2984
    %v4764 = vpop.f32.mrf.mxu0
    %v4765 = vadd.f32 %v4652, %v4764
    %v4766 = vpop.f32.mrf.mxu0
    %v4767 = vadd.f32 %v4654, %v4766
    %v4768 = vpop.f32.mrf.mxu0
    %v4769 = vadd.f32 %v4656, %v4768
    %v4770 = vpop.f32.mrf.mxu0
    %v4771 = vadd.f32 %v4658, %v4770
    %4772 = vmatprep.mubr.bf16.mxu0 0
    %4773 = vmatmul.mubr.bf16.gmra.mxu0 %v2987
    %v4774 = vpop.f32.mrf.mxu0
    %v4775 = vadd.f32 %v4662, %v4774
    %v4776 = vpop.f32.mrf.mxu0
    %v4777 = vadd.f32 %v4664, %v4776
    %v4778 = vpop.f32.mrf.mxu0
    %v4779 = vadd.f32 %v4666, %v4778
    %v4780 = vpop.f32.mrf.mxu0
    %v4781 = vadd.f32 %v4668, %v4780
    %4782 = vmatprep.mubr.bf16.mxu0 0
    %4783 = vmatmul.mubr.bf16.gmra.mxu0 %v2990
    %v4784 = vpop.f32.mrf.mxu0
    %v4785 = vadd.f32 %v4672, %v4784
    %v4786 = vpop.f32.mrf.mxu0
    %v4787 = vadd.f32 %v4674, %v4786
    %v4788 = vpop.f32.mrf.mxu0
    %v4789 = vadd.f32 %v4676, %v4788
    %v4790 = vpop.f32.mrf.mxu0
    %v4791 = vadd.f32 %v4678, %v4790
    %4792 = vmatprep.mubr.bf16.mxu0 0
    %4793 = vmatmul.mubr.bf16.gmra.mxu0 %v2993
    %v4794 = vpop.f32.mrf.mxu0
    %v4795 = vadd.f32 %v4682, %v4794
    %v4796 = vpop.f32.mrf.mxu0
    %v4797 = vadd.f32 %v4684, %v4796
    %v4798 = vpop.f32.mrf.mxu0
    %v4799 = vadd.f32 %v4686, %v4798
    %v4800 = vpop.f32.mrf.mxu0
    %v4801 = vadd.f32 %v4688, %v4800
    %4802 = vdwg.mxu0
    %4803 = vmatprep.subr.bf16.mxu0 0
    %4804 = vmatpush1.bf16.msra.mxu0 %v2159
    %4805 = vmatprep.subr.bf16.mxu0 0
    %4806 = vmatpush1.bf16.msra.mxu0 %v2150
    %4807 = vmatprep.subr.bf16.mxu0 0
    %4808 = vmatpush1.bf16.msra.mxu0 %v2141
    %4809 = vmatprep.subr.bf16.mxu0 0
    %4810 = vmatpush1.bf16.msra.mxu0 %v2132
    %4811 = vmatprep.subr.bf16.mxu0 0
    %4812 = vmatpush1.bf16.msra.mxu0 %v2123
    %4813 = vmatprep.subr.bf16.mxu0 0
    %4814 = vmatpush1.bf16.msra.mxu0 %v2114
    %4815 = vmatprep.subr.bf16.mxu0 0
    %4816 = vmatpush1.bf16.msra.mxu0 %v2105
    %4817 = vmatprep.subr.bf16.mxu0 0
    %4818 = vmatpush1.bf16.msra.mxu0 %v2096
    %4819 = vmatprep.subr.bf16.mxu0 0
    %4820 = vmatpush2.bf16.msra.mxu0 %v2231
    %4821 = vmatprep.subr.bf16.mxu0 0
    %4822 = vmatpush2.bf16.msra.mxu0 %v2222
    %4823 = vmatprep.subr.bf16.mxu0 0
    %4824 = vmatpush2.bf16.msra.mxu0 %v2213
    %4825 = vmatprep.subr.bf16.mxu0 0
    %4826 = vmatpush2.bf16.msra.mxu0 %v2204
    %4827 = vmatprep.subr.bf16.mxu0 0
    %4828 = vmatpush2.bf16.msra.mxu0 %v2195
    %4829 = vmatprep.subr.bf16.mxu0 0
    %4830 = vmatpush2.bf16.msra.mxu0 %v2186
    %4831 = vmatprep.subr.bf16.mxu0 0
    %4832 = vmatpush2.bf16.msra.mxu0 %v2177
    %4833 = vmatprep.subr.bf16.mxu0 0
    %4834 = vmatpush2.bf16.msra.mxu0 %v2168
    %4835 = vmatprep.mubr.bf16.mxu0 %v171
    %4836 = vmatmul.mubr.bf16.gmra.mxu0 %v170
    %v4837 = vpop.f32.mrf.mxu0
    %v4838 = vadd.f32 0.0, %v4837
    %v4839 = vpop.f32.mrf.mxu0
    %v4840 = vpop.f32.mrf.mxu0
    %v4841 = vadd.f32 0.0, %v4840
    %v4842 = vpop.f32.mrf.mxu0
    %4843 = vmatprep.mubr.bf16.mxu0 %v178
    %4844 = vmatmul.mubr.bf16.gmra.mxu0 %v177
    %v4845 = vpop.f32.mrf.mxu0
    %v4846 = vadd.f32 0.0, %v4845
    %v4847 = vpop.f32.mrf.mxu0
    %v4848 = vpop.f32.mrf.mxu0
    %v4849 = vadd.f32 0.0, %v4848
    %v4850 = vpop.f32.mrf.mxu0
    %4851 = vmatprep.mubr.bf16.mxu0 %v185
    %4852 = vmatmul.mubr.bf16.gmra.mxu0 %v184
    %v4853 = vpop.f32.mrf.mxu0
    %v4854 = vadd.f32 0.0, %v4853
    %v4855 = vpop.f32.mrf.mxu0
    %v4856 = vpop.f32.mrf.mxu0
    %v4857 = vadd.f32 0.0, %v4856
    %v4858 = vpop.f32.mrf.mxu0
    %4859 = vmatprep.mubr.bf16.mxu0 %v192
    %4860 = vmatmul.mubr.bf16.gmra.mxu0 %v191
    %v4861 = vpop.f32.mrf.mxu0
    %v4862 = vadd.f32 0.0, %v4861
    %v4863 = vpop.f32.mrf.mxu0
    %v4864 = vpop.f32.mrf.mxu0
    %v4865 = vadd.f32 0.0, %v4864
    %v4866 = vpop.f32.mrf.mxu0
    %4867 = vmatprep.mubr.bf16.mxu0 %v199
    %4868 = vmatmul.mubr.bf16.gmra.mxu0 %v198
    %v4869 = vpop.f32.mrf.mxu0
    %v4870 = vadd.f32 0.0, %v4869
    %v4871 = vpop.f32.mrf.mxu0
    %v4872 = vpop.f32.mrf.mxu0
    %v4873 = vadd.f32 0.0, %v4872
    %v4874 = vpop.f32.mrf.mxu0
    %4875 = vmatprep.mubr.bf16.mxu0 %v206
    %4876 = vmatmul.mubr.bf16.gmra.mxu0 %v205
    %v4877 = vpop.f32.mrf.mxu0
    %v4878 = vadd.f32 0.0, %v4877
    %v4879 = vpop.f32.mrf.mxu0
    %v4880 = vpop.f32.mrf.mxu0
    %v4881 = vadd.f32 0.0, %v4880
    %v4882 = vpop.f32.mrf.mxu0
    %4883 = vmatprep.mubr.bf16.mxu0 %v213
    %4884 = vmatmul.mubr.bf16.gmra.mxu0 %v212
    %v4885 = vpop.f32.mrf.mxu0
    %v4886 = vadd.f32 0.0, %v4885
    %v4887 = vpop.f32.mrf.mxu0
    %v4888 = vpop.f32.mrf.mxu0
    %v4889 = vadd.f32 0.0, %v4888
    %v4890 = vpop.f32.mrf.mxu0
    %4891 = vmatprep.mubr.bf16.mxu0 %v220
    %4892 = vmatmul.mubr.bf16.gmra.mxu0 %v219
    %v4893 = vpop.f32.mrf.mxu0
    %v4894 = vadd.f32 0.0, %v4893
    %v4895 = vpop.f32.mrf.mxu0
    %v4896 = vpop.f32.mrf.mxu0
    %v4897 = vadd.f32 0.0, %v4896
    %v4898 = vpop.f32.mrf.mxu0
    %4899 = vdwg.mxu0
    %4900 = vmatprep.subr.bf16.mxu0 0
    %4901 = vmatpush1.bf16.msra.mxu0 %v2303
    %4902 = vmatprep.subr.bf16.mxu0 0
    %4903 = vmatpush1.bf16.msra.mxu0 %v2294
    %4904 = vmatprep.subr.bf16.mxu0 0
    %4905 = vmatpush1.bf16.msra.mxu0 %v2285
    %4906 = vmatprep.subr.bf16.mxu0 0
    %4907 = vmatpush1.bf16.msra.mxu0 %v2276
    %4908 = vmatprep.subr.bf16.mxu0 0
    %4909 = vmatpush1.bf16.msra.mxu0 %v2267
    %4910 = vmatprep.subr.bf16.mxu0 0
    %4911 = vmatpush1.bf16.msra.mxu0 %v2258
    %4912 = vmatprep.subr.bf16.mxu0 0
    %4913 = vmatpush1.bf16.msra.mxu0 %v2249
    %4914 = vmatprep.subr.bf16.mxu0 0
    %4915 = vmatpush1.bf16.msra.mxu0 %v2240
    %4916 = vmatprep.subr.bf16.mxu0 0
    %4917 = vmatpush2.bf16.msra.mxu0 %v2375
    %4918 = vmatprep.subr.bf16.mxu0 0
    %4919 = vmatpush2.bf16.msra.mxu0 %v2366
    %4920 = vmatprep.subr.bf16.mxu0 0
    %4921 = vmatpush2.bf16.msra.mxu0 %v2357
    %4922 = vmatprep.subr.bf16.mxu0 0
    %4923 = vmatpush2.bf16.msra.mxu0 %v2348
    %4924 = vmatprep.subr.bf16.mxu0 0
    %4925 = vmatpush2.bf16.msra.mxu0 %v2339
    %4926 = vmatprep.subr.bf16.mxu0 0
    %4927 = vmatpush2.bf16.msra.mxu0 %v2330
    %4928 = vmatprep.subr.bf16.mxu0 0
    %4929 = vmatpush2.bf16.msra.mxu0 %v2321
    %4930 = vmatprep.subr.bf16.mxu0 0
    %4931 = vmatpush2.bf16.msra.mxu0 %v2312
    %4932 = vmatprep.mubr.bf16.mxu0 %v173
    %4933 = vmatmul.mubr.bf16.gmra.mxu0 %v172
    %v4934 = vpop.f32.mrf.mxu0
    %v4935 = vadd.f32 %v4838, %v4934
    %v4936 = vpop.f32.mrf.mxu0
    %v4937 = vpop.f32.mrf.mxu0
    %v4938 = vadd.f32 %v4841, %v4937
    %v4939 = vpop.f32.mrf.mxu0
    %4940 = vmatprep.mubr.bf16.mxu0 %v180
    %4941 = vmatmul.mubr.bf16.gmra.mxu0 %v179
    %v4942 = vpop.f32.mrf.mxu0
    %v4943 = vadd.f32 %v4846, %v4942
    %v4944 = vpop.f32.mrf.mxu0
    %v4945 = vpop.f32.mrf.mxu0
    %v4946 = vadd.f32 %v4849, %v4945
    %v4947 = vpop.f32.mrf.mxu0
    %4948 = vmatprep.mubr.bf16.mxu0 %v187
    %4949 = vmatmul.mubr.bf16.gmra.mxu0 %v186
    %v4950 = vpop.f32.mrf.mxu0
    %v4951 = vadd.f32 %v4854, %v4950
    %v4952 = vpop.f32.mrf.mxu0
    %v4953 = vpop.f32.mrf.mxu0
    %v4954 = vadd.f32 %v4857, %v4953
    %v4955 = vpop.f32.mrf.mxu0
    %4956 = vmatprep.mubr.bf16.mxu0 %v194
    %4957 = vmatmul.mubr.bf16.gmra.mxu0 %v193
    %v4958 = vpop.f32.mrf.mxu0
    %v4959 = vadd.f32 %v4862, %v4958
    %v4960 = vpop.f32.mrf.mxu0
    %v4961 = vpop.f32.mrf.mxu0
    %v4962 = vadd.f32 %v4865, %v4961
    %v4963 = vpop.f32.mrf.mxu0
    %4964 = vmatprep.mubr.bf16.mxu0 %v201
    %4965 = vmatmul.mubr.bf16.gmra.mxu0 %v200
    %v4966 = vpop.f32.mrf.mxu0
    %v4967 = vadd.f32 %v4870, %v4966
    %v4968 = vpop.f32.mrf.mxu0
    %v4969 = vpop.f32.mrf.mxu0
    %v4970 = vadd.f32 %v4873, %v4969
    %v4971 = vpop.f32.mrf.mxu0
    %4972 = vmatprep.mubr.bf16.mxu0 %v208
    %4973 = vmatmul.mubr.bf16.gmra.mxu0 %v207
    %v4974 = vpop.f32.mrf.mxu0
    %v4975 = vadd.f32 %v4878, %v4974
    %v4976 = vpop.f32.mrf.mxu0
    %v4977 = vpop.f32.mrf.mxu0
    %v4978 = vadd.f32 %v4881, %v4977
    %v4979 = vpop.f32.mrf.mxu0
    %4980 = vmatprep.mubr.bf16.mxu0 %v215
    %4981 = vmatmul.mubr.bf16.gmra.mxu0 %v214
    %v4982 = vpop.f32.mrf.mxu0
    %v4983 = vadd.f32 %v4886, %v4982
    %v4984 = vpop.f32.mrf.mxu0
    %v4985 = vpop.f32.mrf.mxu0
    %v4986 = vadd.f32 %v4889, %v4985
    %v4987 = vpop.f32.mrf.mxu0
    %4988 = vmatprep.mubr.bf16.mxu0 %v222
    %4989 = vmatmul.mubr.bf16.gmra.mxu0 %v221
    %v4990 = vpop.f32.mrf.mxu0
    %v4991 = vadd.f32 %v4894, %v4990
    %v4992 = vpop.f32.mrf.mxu0
    %v4993 = vpop.f32.mrf.mxu0
    %v4994 = vadd.f32 %v4897, %v4993
    %v4995 = vpop.f32.mrf.mxu0
    %4996 = vdwg.mxu0
    %4997 = vmatprep.subr.bf16.mxu0 0
    %4998 = vmatpush1.bf16.msra.mxu0 %v2447
    %4999 = vmatprep.subr.bf16.mxu0 0
    %5000 = vmatpush1.bf16.msra.mxu0 %v2438
    %5001 = vmatprep.subr.bf16.mxu0 0
    %5002 = vmatpush1.bf16.msra.mxu0 %v2429
    %5003 = vmatprep.subr.bf16.mxu0 0
    %5004 = vmatpush1.bf16.msra.mxu0 %v2420
    %5005 = vmatprep.subr.bf16.mxu0 0
    %5006 = vmatpush1.bf16.msra.mxu0 %v2411
    %5007 = vmatprep.subr.bf16.mxu0 0
    %5008 = vmatpush1.bf16.msra.mxu0 %v2402
    %5009 = vmatprep.subr.bf16.mxu0 0
    %5010 = vmatpush1.bf16.msra.mxu0 %v2393
    %5011 = vmatprep.subr.bf16.mxu0 0
    %5012 = vmatpush1.bf16.msra.mxu0 %v2384
    %5013 = vmatprep.subr.bf16.mxu0 0
    %5014 = vmatpush2.bf16.msra.mxu0 %v2519
    %5015 = vmatprep.subr.bf16.mxu0 0
    %5016 = vmatpush2.bf16.msra.mxu0 %v2510
    %5017 = vmatprep.subr.bf16.mxu0 0
    %5018 = vmatpush2.bf16.msra.mxu0 %v2501
    %5019 = vmatprep.subr.bf16.mxu0 0
    %5020 = vmatpush2.bf16.msra.mxu0 %v2492
    %5021 = vmatprep.subr.bf16.mxu0 0
    %5022 = vmatpush2.bf16.msra.mxu0 %v2483
    %5023 = vmatprep.subr.bf16.mxu0 0
    %5024 = vmatpush2.bf16.msra.mxu0 %v2474
    %5025 = vmatprep.subr.bf16.mxu0 0
    %5026 = vmatpush2.bf16.msra.mxu0 %v2465
    %5027 = vmatprep.subr.bf16.mxu0 0
    %5028 = vmatpush2.bf16.msra.mxu0 %v2456
    %5029 = vmatprep.mubr.bf16.mxu0 %v175
    %5030 = vmatmul.mubr.bf16.gmra.mxu0 %v174
    %v5031 = vpop.f32.mrf.mxu0
    %v5032 = vadd.f32 %v4935, %v5031
    %v5033 = vpop.f32.mrf.mxu0
    %v5034 = vpop.f32.mrf.mxu0
    %v5035 = vadd.f32 %v4938, %v5034
    %v5036 = vpop.f32.mrf.mxu0
    %5037 = vmatprep.mubr.bf16.mxu0 %v182
    %5038 = vmatmul.mubr.bf16.gmra.mxu0 %v181
    %v5039 = vpop.f32.mrf.mxu0
    %v5040 = vadd.f32 %v4943, %v5039
    %v5041 = vpop.f32.mrf.mxu0
    %v5042 = vpop.f32.mrf.mxu0
    %v5043 = vadd.f32 %v4946, %v5042
    %v5044 = vpop.f32.mrf.mxu0
    %5045 = vmatprep.mubr.bf16.mxu0 %v189
    %5046 = vmatmul.mubr.bf16.gmra.mxu0 %v188
    %v5047 = vpop.f32.mrf.mxu0
    %v5048 = vadd.f32 %v4951, %v5047
    %v5049 = vpop.f32.mrf.mxu0
    %v5050 = vpop.f32.mrf.mxu0
    %v5051 = vadd.f32 %v4954, %v5050
    %v5052 = vpop.f32.mrf.mxu0
    %5053 = vmatprep.mubr.bf16.mxu0 %v196
    %5054 = vmatmul.mubr.bf16.gmra.mxu0 %v195
    %v5055 = vpop.f32.mrf.mxu0
    %v5056 = vadd.f32 %v4959, %v5055
    %v5057 = vpop.f32.mrf.mxu0
    %v5058 = vpop.f32.mrf.mxu0
    %v5059 = vadd.f32 %v4962, %v5058
    %v5060 = vpop.f32.mrf.mxu0
    %5061 = vmatprep.mubr.bf16.mxu0 %v203
    %5062 = vmatmul.mubr.bf16.gmra.mxu0 %v202
    %v5063 = vpop.f32.mrf.mxu0
    %v5064 = vadd.f32 %v4967, %v5063
    %v5065 = vpop.f32.mrf.mxu0
    %v5066 = vpop.f32.mrf.mxu0
    %v5067 = vadd.f32 %v4970, %v5066
    %v5068 = vpop.f32.mrf.mxu0
    %5069 = vmatprep.mubr.bf16.mxu0 %v210
    %5070 = vmatmul.mubr.bf16.gmra.mxu0 %v209
    %v5071 = vpop.f32.mrf.mxu0
    %v5072 = vadd.f32 %v4975, %v5071
    %v5073 = vpop.f32.mrf.mxu0
    %v5074 = vpop.f32.mrf.mxu0
    %v5075 = vadd.f32 %v4978, %v5074
    %v5076 = vpop.f32.mrf.mxu0
    %5077 = vmatprep.mubr.bf16.mxu0 %v217
    %5078 = vmatmul.mubr.bf16.gmra.mxu0 %v216
    %v5079 = vpop.f32.mrf.mxu0
    %v5080 = vadd.f32 %v4983, %v5079
    %v5081 = vpop.f32.mrf.mxu0
    %v5082 = vpop.f32.mrf.mxu0
    %v5083 = vadd.f32 %v4986, %v5082
    %v5084 = vpop.f32.mrf.mxu0
    %5085 = vmatprep.mubr.bf16.mxu0 %v224
    %5086 = vmatmul.mubr.bf16.gmra.mxu0 %v223
    %v5087 = vpop.f32.mrf.mxu0
    %v5088 = vadd.f32 %v4991, %v5087
    %v5089 = vpop.f32.mrf.mxu0
    %v5090 = vpop.f32.mrf.mxu0
    %v5091 = vadd.f32 %v4994, %v5090
    %v5092 = vpop.f32.mrf.mxu0
    %5093 = vdwg.mxu0
    %5094 = vmatprep.subr.bf16.mxu0 0
    %5095 = vmatpush1.bf16.msra.mxu0 0
    %5096 = vmatprep.subr.bf16.mxu0 0
    %5097 = vmatpush1.bf16.msra.mxu0 0
    %5098 = vmatprep.subr.bf16.mxu0 0
    %5099 = vmatpush1.bf16.msra.mxu0 0
    %5100 = vmatprep.subr.bf16.mxu0 0
    %5101 = vmatpush1.bf16.msra.mxu0 0
    %5102 = vmatprep.subr.bf16.mxu0 0
    %5103 = vmatpush1.bf16.msra.mxu0 0
    %5104 = vmatprep.subr.bf16.mxu0 0
    %5105 = vmatpush1.bf16.msra.mxu0 0
    %5106 = vmatprep.subr.bf16.mxu0 0
    %5107 = vmatpush1.bf16.msra.mxu0 0
    %5108 = vmatprep.subr.bf16.mxu0 0
    %5109 = vmatpush1.bf16.msra.mxu0 %v2528
    %5110 = vmatprep.subr.bf16.mxu0 0
    %5111 = vmatpush2.bf16.msra.mxu0 0
    %5112 = vmatprep.subr.bf16.mxu0 0
    %5113 = vmatpush2.bf16.msra.mxu0 0
    %5114 = vmatprep.subr.bf16.mxu0 0
    %5115 = vmatpush2.bf16.msra.mxu0 0
    %5116 = vmatprep.subr.bf16.mxu0 0
    %5117 = vmatpush2.bf16.msra.mxu0 0
    %5118 = vmatprep.subr.bf16.mxu0 0
    %5119 = vmatpush2.bf16.msra.mxu0 0
    %5120 = vmatprep.subr.bf16.mxu0 0
    %5121 = vmatpush2.bf16.msra.mxu0 0
    %5122 = vmatprep.subr.bf16.mxu0 0
    %5123 = vmatpush2.bf16.msra.mxu0 0
    %5124 = vmatprep.subr.bf16.mxu0 0
    %5125 = vmatpush2.bf16.msra.mxu0 0
    %5126 = vmatprep.mubr.bf16.mxu0 0
    %5127 = vmatmul.mubr.bf16.gmra.mxu0 %v2972
    %v5128 = vpop.f32.mrf.mxu0
    %v5129 = vadd.f32 %v5032, %v5128
    %v5130 = vpop.f32.mrf.mxu0
    %v5131 = vpop.f32.mrf.mxu0
    %v5132 = vadd.f32 %v5035, %v5131
    %v5133 = vpop.f32.mrf.mxu0
    %5134 = vmatprep.mubr.bf16.mxu0 0
    %5135 = vmatmul.mubr.bf16.gmra.mxu0 %v2975
    %v5136 = vpop.f32.mrf.mxu0
    %v5137 = vadd.f32 %v5040, %v5136
    %v5138 = vpop.f32.mrf.mxu0
    %v5139 = vpop.f32.mrf.mxu0
    %v5140 = vadd.f32 %v5043, %v5139
    %v5141 = vpop.f32.mrf.mxu0
    %5142 = vmatprep.mubr.bf16.mxu0 0
    %5143 = vmatmul.mubr.bf16.gmra.mxu0 %v2978
    %v5144 = vpop.f32.mrf.mxu0
    %v5145 = vadd.f32 %v5048, %v5144
    %v5146 = vpop.f32.mrf.mxu0
    %v5147 = vpop.f32.mrf.mxu0
    %v5148 = vadd.f32 %v5051, %v5147
    %v5149 = vpop.f32.mrf.mxu0
    %5150 = vmatprep.mubr.bf16.mxu0 0
    %5151 = vmatmul.mubr.bf16.gmra.mxu0 %v2981
    %v5152 = vpop.f32.mrf.mxu0
    %v5153 = vadd.f32 %v5056, %v5152
    %v5154 = vpop.f32.mrf.mxu0
    %v5155 = vpop.f32.mrf.mxu0
    %v5156 = vadd.f32 %v5059, %v5155
    %v5157 = vpop.f32.mrf.mxu0
    %5158 = vmatprep.mubr.bf16.mxu0 0
    %5159 = vmatmul.mubr.bf16.gmra.mxu0 %v2984
    %v5160 = vpop.f32.mrf.mxu0
    %v5161 = vadd.f32 %v5064, %v5160
    %v5162 = vpop.f32.mrf.mxu0
    %v5163 = vpop.f32.mrf.mxu0
    %v5164 = vadd.f32 %v5067, %v5163
    %v5165 = vpop.f32.mrf.mxu0
    %5166 = vmatprep.mubr.bf16.mxu0 0
    %5167 = vmatmul.mubr.bf16.gmra.mxu0 %v2987
    %v5168 = vpop.f32.mrf.mxu0
    %v5169 = vadd.f32 %v5072, %v5168
    %v5170 = vpop.f32.mrf.mxu0
    %v5171 = vpop.f32.mrf.mxu0
    %v5172 = vadd.f32 %v5075, %v5171
    %v5173 = vpop.f32.mrf.mxu0
    %5174 = vmatprep.mubr.bf16.mxu0 0
    %5175 = vmatmul.mubr.bf16.gmra.mxu0 %v2990
    %v5176 = vpop.f32.mrf.mxu0
    %v5177 = vadd.f32 %v5080, %v5176
    %v5178 = vpop.f32.mrf.mxu0
    %v5179 = vpop.f32.mrf.mxu0
    %v5180 = vadd.f32 %v5083, %v5179
    %v5181 = vpop.f32.mrf.mxu0
    %5182 = vmatprep.mubr.bf16.mxu0 0
    %5183 = vmatmul.mubr.bf16.gmra.mxu0 %v2993
    %v5184 = vpop.f32.mrf.mxu0
    %v5185 = vadd.f32 %v5088, %v5184
    %v5186 = vpop.f32.mrf.mxu0
    %v5187 = vpop.f32.mrf.mxu0
    %v5188 = vadd.f32 %v5091, %v5187
    %v5189 = vpop.f32.mrf.mxu0
    %5190 = vdwg.mxu0
    %v5191 = vmax.f32 %v3369, %v3371
    %v5192 = vmax.f32 %v3373, %v3375
    %v5193 = vmax.f32 %v3379, %v3381
    %v5194 = vmax.f32 %v3383, %v3385
    %v5195 = vmax.f32 %v3389, %v3391
    %v5196 = vmax.f32 %v3393, %v3395
    %v5197 = vmax.f32 %v3399, %v3401
    %v5198 = vmax.f32 %v3403, %v3405
    %v5199 = vmax.f32 %v3409, %v3411
    %v5200 = vmax.f32 %v3413, %v3415
    %v5201 = vmax.f32 %v3419, %v3421
    %v5202 = vmax.f32 %v3423, %v3425
    %v5203 = vmax.f32 %v3429, %v3431
    %v5204 = vmax.f32 %v3433, %v3435
    %v5205 = vmax.f32 %v3439, %v3441
    %v5206 = vmax.f32 %v3443, %v3445
    %v5207 = vmax.f32 %v5191, %v3821
    %v5208 = vmax.f32 %v5192, %v3825
    %v5209 = vmax.f32 %v5193, %v3831
    %v5210 = vmax.f32 %v5194, %v3835
    %v5211 = vmax.f32 %v5195, %v3841
    %v5212 = vmax.f32 %v5196, %v3845
    %v5213 = vmax.f32 %v5197, %v3851
    %v5214 = vmax.f32 %v5198, %v3855
    %v5215 = vmax.f32 %v5199, %v3861
    %v5216 = vmax.f32 %v5200, %v3865
    %v5217 = vmax.f32 %v5201, %v3871
    %v5218 = vmax.f32 %v5202, %v3875
    %v5219 = vmax.f32 %v5203, %v3881
    %v5220 = vmax.f32 %v5204, %v3885
    %v5221 = vmax.f32 %v5205, %v3891
    %v5222 = vmax.f32 %v5206, %v3895
    %v5223 = vmax.f32 %v5207, %v3823
    %v5224 = vmax.f32 %v5208, %v3827
    %v5225 = vmax.f32 %v5209, %v3833
    %v5226 = vmax.f32 %v5210, %v3837
    %v5227 = vmax.f32 %v5211, %v3843
    %v5228 = vmax.f32 %v5212, %v3847
    %v5229 = vmax.f32 %v5213, %v3853
    %v5230 = vmax.f32 %v5214, %v3857
    %v5231 = vmax.f32 %v5215, %v3863
    %v5232 = vmax.f32 %v5216, %v3867
    %v5233 = vmax.f32 %v5217, %v3873
    %v5234 = vmax.f32 %v5218, %v3877
    %v5235 = vmax.f32 %v5219, %v3883
    %v5236 = vmax.f32 %v5220, %v3887
    %v5237 = vmax.f32 %v5221, %v3893
    %v5238 = vmax.f32 %v5222, %v3897
    %v5239 = vmax.f32 %v5223, %v4273
    %v5240 = vmax.f32 %v5224, %v4277
    %v5241 = vmax.f32 %v5225, %v4283
    %v5242 = vmax.f32 %v5226, %v4287
    %v5243 = vmax.f32 %v5227, %v4293
    %v5244 = vmax.f32 %v5228, %v4297
    %v5245 = vmax.f32 %v5229, %v4303
    %v5246 = vmax.f32 %v5230, %v4307
    %v5247 = vmax.f32 %v5231, %v4313
    %v5248 = vmax.f32 %v5232, %v4317
    %v5249 = vmax.f32 %v5233, %v4323
    %v5250 = vmax.f32 %v5234, %v4327
    %v5251 = vmax.f32 %v5235, %v4333
    %v5252 = vmax.f32 %v5236, %v4337
    %v5253 = vmax.f32 %v5237, %v4343
    %v5254 = vmax.f32 %v5238, %v4347
    %v5255 = vmax.f32 %v5239, %v4275
    %v5256 = vmax.f32 %v5240, %v4279
    %v5257 = vmax.f32 %v5241, %v4285
    %v5258 = vmax.f32 %v5242, %v4289
    %v5259 = vmax.f32 %v5243, %v4295
    %v5260 = vmax.f32 %v5244, %v4299
    %v5261 = vmax.f32 %v5245, %v4305
    %v5262 = vmax.f32 %v5246, %v4309
    %v5263 = vmax.f32 %v5247, %v4315
    %v5264 = vmax.f32 %v5248, %v4319
    %v5265 = vmax.f32 %v5249, %v4325
    %v5266 = vmax.f32 %v5250, %v4329
    %v5267 = vmax.f32 %v5251, %v4335
    %v5268 = vmax.f32 %v5252, %v4339
    %v5269 = vmax.f32 %v5253, %v4345
    %v5270 = vmax.f32 %v5254, %v4349
    %v5271 = vmax.f32 %v5255, %v4725
    %v5272 = vmax.f32 %v5256, %v4729
    %v5273 = vmax.f32 %v5257, %v4735
    %v5274 = vmax.f32 %v5258, %v4739
    %v5275 = vmax.f32 %v5259, %v4745
    %v5276 = vmax.f32 %v5260, %v4749
    %v5277 = vmax.f32 %v5261, %v4755
    %v5278 = vmax.f32 %v5262, %v4759
    %v5279 = vmax.f32 %v5263, %v4765
    %v5280 = vmax.f32 %v5264, %v4769
    %v5281 = vmax.f32 %v5265, %v4775
    %v5282 = vmax.f32 %v5266, %v4779
    %v5283 = vmax.f32 %v5267, %v4785
    %v5284 = vmax.f32 %v5268, %v4789
    %v5285 = vmax.f32 %v5269, %v4795
    %v5286 = vmax.f32 %v5270, %v4799
    %v5287 = vmax.f32 %v5271, %v4727
    %v5288 = vmax.f32 %v5272, %v4731
    %v5289 = vmax.f32 %v5273, %v4737
    %v5290 = vmax.f32 %v5274, %v4741
    %v5291 = vmax.f32 %v5275, %v4747
    %v5292 = vmax.f32 %v5276, %v4751
    %v5293 = vmax.f32 %v5277, %v4757
    %v5294 = vmax.f32 %v5278, %v4761
    %v5295 = vmax.f32 %v5279, %v4767
    %v5296 = vmax.f32 %v5280, %v4771
    %v5297 = vmax.f32 %v5281, %v4777
    %v5298 = vmax.f32 %v5282, %v4781
    %v5299 = vmax.f32 %v5283, %v4787
    %v5300 = vmax.f32 %v5284, %v4791
    %v5301 = vmax.f32 %v5285, %v4797
    %v5302 = vmax.f32 %v5286, %v4801
    %v5303 = vmax.f32 %v5287, %v5129
    %v5304 = vmax.f32 %v5288, %v5132
    %v5305 = vmax.f32 %v5289, %v5137
    %v5306 = vmax.f32 %v5290, %v5140
    %v5307 = vmax.f32 %v5291, %v5145
    %v5308 = vmax.f32 %v5292, %v5148
    %v5309 = vmax.f32 %v5293, %v5153
    %v5310 = vmax.f32 %v5294, %v5156
    %v5311 = vmax.f32 %v5295, %v5161
    %v5312 = vmax.f32 %v5296, %v5164
    %v5313 = vmax.f32 %v5297, %v5169
    %v5314 = vmax.f32 %v5298, %v5172
    %v5315 = vmax.f32 %v5299, %v5177
    %v5316 = vmax.f32 %v5300, %v5180
    %v5317 = vmax.f32 %v5301, %v5185
    %v5318 = vmax.f32 %v5302, %v5188
    %v5319 = vld [vmem:[#allocation4] sm:$0x1]
    %v5321 = vlaneseq
    %v5322 = vshrl.u32 %v5321, 7
    %v5323 = vsub.s32 0, %v5322
    %v5324 = vrot.slane %v5319, %v5323
    %v5326 = vadd.f32 %v5303, %v5324
    %v5327 = vadd.f32 %v5304, %v5324
    %v5328 = vadd.f32 %v5305, %v5324
    %v5329 = vadd.f32 %v5306, %v5324
    %v5330 = vadd.f32 %v5307, %v5324
    %v5331 = vadd.f32 %v5308, %v5324
    %v5332 = vadd.f32 %v5309, %v5324
    %v5333 = vadd.f32 %v5310, %v5324
    %v5334 = vadd.f32 %v5311, %v5324
    %v5335 = vadd.f32 %v5312, %v5324
    %v5336 = vadd.f32 %v5313, %v5324
    %v5337 = vadd.f32 %v5314, %v5324
    %v5338 = vadd.f32 %v5315, %v5324
    %v5339 = vadd.f32 %v5316, %v5324
    %v5340 = vadd.f32 %v5317, %v5324
    %v5341 = vadd.f32 %v5318, %v5324
    %v5342 = vmax.f32 %v5326, 0.0
    %v5343 = vmax.f32 %v5327, 0.0
    %v5344 = vmax.f32 %v5328, 0.0
    %v5345 = vmax.f32 %v5329, 0.0
    %v5346 = vmax.f32 %v5330, 0.0
    %v5347 = vmax.f32 %v5331, 0.0
    %v5348 = vmax.f32 %v5332, 0.0
    %v5349 = vmax.f32 %v5333, 0.0
    %v5350 = vmax.f32 %v5334, 0.0
    %v5351 = vmax.f32 %v5335, 0.0
    %v5352 = vmax.f32 %v5336, 0.0
    %v5353 = vmax.f32 %v5337, 0.0
    %v5354 = vmax.f32 %v5338, 0.0
    %v5355 = vmax.f32 %v5339, 0.0
    %v5356 = vmax.f32 %v5340, 0.0
    %v5357 = vmax.f32 %v5341, 0.0
    %v5358 = vpack.c.bf16 %v5343, %v5342
    %v5359 = vpack.c.bf16 %v5345, %v5344
    %v5360 = vpack.c.bf16 %v5347, %v5346
    %v5361 = vpack.c.bf16 %v5349, %v5348
    %v5362 = vpack.c.bf16 %v5351, %v5350
    %v5363 = vpack.c.bf16 %v5353, %v5352
    %v5364 = vpack.c.bf16 %v5355, %v5354
    %v5365 = vpack.c.bf16 %v5357, %v5356
    %v5366 = vld [vmem:[%s3] sm:$0xf]
    %v5367 = vld [vmem:[%s3 + $0x4] sm:$0xf]
    %v5368 = vld [vmem:[%s3 + $0x8] sm:$0xf]
    %v5369 = vld [vmem:[%s3 + $0xc] sm:$0xf]
    %v5370 = vld [vmem:[%s3 + $0x10] sm:$0xf]
    %v5371 = vld [vmem:[%s3 + $0x14] sm:$0xf]
    %v5372 = vld [vmem:[%s3 + $0x18] sm:$0xf]
    %v5373 = vld [vmem:[%s3 + $0x1c] sm:$0xf]
    %v5374 = vld [vmem:[%s3 + $0x20] sm:$0xf]
    %v5375 = vld [vmem:[%s3 + $0x24] sm:$0xf]
    %v5376 = vld [vmem:[%s3 + $0x28] sm:$0xf]
    %v5377 = vld [vmem:[%s3 + $0x2c] sm:$0xf]
    %v5378 = vld [vmem:[%s3 + $0x30] sm:$0xf]
    %v5379 = vld [vmem:[%s3 + $0x34] sm:$0xf]
    %v5380 = vld [vmem:[%s3 + $0x38] sm:$0xf]
    %v5381 = vld [vmem:[%s3 + $0x3c] sm:$0xf]
    %v5382 = vld [vmem:[#allocation6] sm:$0x1]
    %v5384 = vlaneseq
    %v5385 = vshrl.u32 %v5384, 7
    %v5386 = vsub.s32 0, %v5385
    %v5387 = vrot.slane %v5382, %v5386
    %v5405 = vunpack.c.l.b16 %v5366
    %v5406 = vunpack.c.l.b16 %v5367
    %v5407 = vunpack.c.l.b16 %v5368
    %v5408 = vunpack.c.l.b16 %v5369
    %v5409 = vunpack.c.l.b16 %v5370
    %v5410 = vunpack.c.l.b16 %v5371
    %v5411 = vunpack.c.l.b16 %v5372
    %v5412 = vunpack.c.l.b16 %v5373
    %v5413 = vunpack.c.l.b16 %v5374
    %v5414 = vunpack.c.l.b16 %v5375
    %v5415 = vunpack.c.l.b16 %v5376
    %v5416 = vunpack.c.l.b16 %v5377
    %v5417 = vunpack.c.l.b16 %v5378
    %v5418 = vunpack.c.l.b16 %v5379
    %v5419 = vunpack.c.l.b16 %v5380
    %v5420 = vunpack.c.l.b16 %v5381
    %v5421 = vpack.c.b16 %v5406, %v5405
    %v5422 = vpack.c.b16 %v5408, %v5407
    %v5423 = vpack.c.b16 %v5410, %v5409
    %v5424 = vpack.c.b16 %v5412, %v5411
    %v5425 = vpack.c.b16 %v5414, %v5413
    %v5426 = vpack.c.b16 %v5416, %v5415
    %v5427 = vpack.c.b16 %v5418, %v5417
    %v5428 = vpack.c.b16 %v5420, %v5419
    %5437 = vmatprep.subr.bf16.mxu0 0
    %5438 = vmatpush1.bf16.msra.mxu0 %v5428
    %5439 = vmatprep.subr.bf16.mxu0 0
    %5440 = vmatpush1.bf16.msra.mxu0 %v5427
    %5441 = vmatprep.subr.bf16.mxu0 0
    %5442 = vmatpush1.bf16.msra.mxu0 %v5426
    %5443 = vmatprep.subr.bf16.mxu0 0
    %5444 = vmatpush1.bf16.msra.mxu0 %v5425
    %5445 = vmatprep.subr.bf16.mxu0 0
    %5446 = vmatpush1.bf16.msra.mxu0 %v5424
    %5447 = vmatprep.subr.bf16.mxu0 0
    %5448 = vmatpush1.bf16.msra.mxu0 %v5423
    %5449 = vmatprep.subr.bf16.mxu0 0
    %5450 = vmatpush1.bf16.msra.mxu0 %v5422
    %5451 = vmatprep.subr.bf16.mxu0 0
    %5452 = vmatpush1.bf16.msra.mxu0 %v5421
    %5453 = vmatprep.subr.bf16.mxu0 0
    %5454 = vmatpush2.bf16.msra.mxu0 0
    %5455 = vmatprep.subr.bf16.mxu0 0
    %5456 = vmatpush2.bf16.msra.mxu0 0
    %5457 = vmatprep.subr.bf16.mxu0 0
    %5458 = vmatpush2.bf16.msra.mxu0 0
    %5459 = vmatprep.subr.bf16.mxu0 0
    %5460 = vmatpush2.bf16.msra.mxu0 0
    %5461 = vmatprep.subr.bf16.mxu0 0
    %5462 = vmatpush2.bf16.msra.mxu0 0
    %5463 = vmatprep.subr.bf16.mxu0 0
    %5464 = vmatpush2.bf16.msra.mxu0 0
    %5465 = vmatprep.subr.bf16.mxu0 0
    %5466 = vmatpush2.bf16.msra.mxu0 0
    %5467 = vmatprep.subr.bf16.mxu0 0
    %5468 = vmatpush2.bf16.msra.mxu0 0
    %5469 = vmatprep.mubr.bf16.mxu0 0
    %5470 = vmatmul.mubr.bf16.gmra.mxu0 %v5358
    %v5471 = vpop.f32.mrf.mxu0
    %v5472 = vadd.f32 %v5387, %v5471
    %v5473 = vpop.f32.mrf.mxu0
    %v5474 = vpop.f32.mrf.mxu0
    %v5475 = vadd.f32 %v5387, %v5474
    %v5476 = vpop.f32.mrf.mxu0
    %5477 = vmatprep.mubr.bf16.mxu0 0
    %5478 = vmatmul.mubr.bf16.gmra.mxu0 %v5359
    %v5479 = vpop.f32.mrf.mxu0
    %v5480 = vadd.f32 %v5387, %v5479
    %v5481 = vpop.f32.mrf.mxu0
    %v5482 = vpop.f32.mrf.mxu0
    %v5483 = vadd.f32 %v5387, %v5482
    %v5484 = vpop.f32.mrf.mxu0
    %5485 = vmatprep.mubr.bf16.mxu0 0
    %5486 = vmatmul.mubr.bf16.gmra.mxu0 %v5360
    %v5487 = vpop.f32.mrf.mxu0
    %v5488 = vadd.f32 %v5387, %v5487
    %v5489 = vpop.f32.mrf.mxu0
    %v5490 = vpop.f32.mrf.mxu0
    %v5491 = vadd.f32 %v5387, %v5490
    %v5492 = vpop.f32.mrf.mxu0
    %5493 = vmatprep.mubr.bf16.mxu0 0
    %5494 = vmatmul.mubr.bf16.gmra.mxu0 %v5361
    %v5495 = vpop.f32.mrf.mxu0
    %v5496 = vadd.f32 %v5387, %v5495
    %v5497 = vpop.f32.mrf.mxu0
    %v5498 = vpop.f32.mrf.mxu0
    %v5499 = vadd.f32 %v5387, %v5498
    %v5500 = vpop.f32.mrf.mxu0
    %5501 = vmatprep.mubr.bf16.mxu0 0
    %5502 = vmatmul.mubr.bf16.gmra.mxu0 %v5362
    %v5503 = vpop.f32.mrf.mxu0
    %v5504 = vadd.f32 %v5387, %v5503
    %v5505 = vpop.f32.mrf.mxu0
    %v5506 = vpop.f32.mrf.mxu0
    %v5507 = vadd.f32 %v5387, %v5506
    %v5508 = vpop.f32.mrf.mxu0
    %5509 = vmatprep.mubr.bf16.mxu0 0
    %5510 = vmatmul.mubr.bf16.gmra.mxu0 %v5363
    %v5511 = vpop.f32.mrf.mxu0
    %v5512 = vadd.f32 %v5387, %v5511
    %v5513 = vpop.f32.mrf.mxu0
    %v5514 = vpop.f32.mrf.mxu0
    %v5515 = vadd.f32 %v5387, %v5514
    %v5516 = vpop.f32.mrf.mxu0
    %5517 = vmatprep.mubr.bf16.mxu0 0
    %5518 = vmatmul.mubr.bf16.gmra.mxu0 %v5364
    %v5519 = vpop.f32.mrf.mxu0
    %v5520 = vadd.f32 %v5387, %v5519
    %v5521 = vpop.f32.mrf.mxu0
    %v5522 = vpop.f32.mrf.mxu0
    %v5523 = vadd.f32 %v5387, %v5522
    %v5524 = vpop.f32.mrf.mxu0
    %5525 = vmatprep.mubr.bf16.mxu0 0
    %5526 = vmatmul.mubr.bf16.gmra.mxu0 %v5365
    %v5527 = vpop.f32.mrf.mxu0
    %v5528 = vadd.f32 %v5387, %v5527
    %v5529 = vpop.f32.mrf.mxu0
    %v5530 = vpop.f32.mrf.mxu0
    %v5531 = vadd.f32 %v5387, %v5530
    %v5532 = vpop.f32.mrf.mxu0
    %5533 = vdwg.mxu0
    %vm5534 = vcmask 80896
    %5535 = vst.msk [vmem:[%s5] sm:$0xff] %vm5534, %v5472
    %5536 = vst.msk [vmem:[%s5 + $0x8] sm:$0xff] %vm5534, %v5475
    %5537 = vst.msk [vmem:[%s5 + $0x10] sm:$0xff] %vm5534, %v5480
    %5538 = vst.msk [vmem:[%s5 + $0x18] sm:$0xff] %vm5534, %v5483
    %5539 = vst.msk [vmem:[%s5 + $0x20] sm:$0xff] %vm5534, %v5488
    %5540 = vst.msk [vmem:[%s5 + $0x28] sm:$0xff] %vm5534, %v5491
    %5541 = vst.msk [vmem:[%s5 + $0x30] sm:$0xff] %vm5534, %v5496
    %5542 = vst.msk [vmem:[%s5 + $0x38] sm:$0xff] %vm5534, %v5499
    %5543 = vst.msk [vmem:[%s5 + $0x40] sm:$0xff] %vm5534, %v5504
    %5544 = vst.msk [vmem:[%s5 + $0x48] sm:$0xff] %vm5534, %v5507
    %5545 = vst.msk [vmem:[%s5 + $0x50] sm:$0xff] %vm5534, %v5512
    %5546 = vst.msk [vmem:[%s5 + $0x58] sm:$0xff] %vm5534, %v5515
    %5547 = vst.msk [vmem:[%s5 + $0x60] sm:$0xff] %vm5534, %v5520
    %5548 = vst.msk [vmem:[%s5 + $0x68] sm:$0xff] %vm5534, %v5523
    %5549 = vst.msk [vmem:[%s5 + $0x70] sm:$0xff] %vm5534, %v5528
    %5550 = vst.msk [vmem:[%s5 + $0x78] sm:$0xff] %vm5534, %v5531
    // Predicated region
    $region34: #{tpu_custom_call.1} parent=1 // pred_check
      _
    $region35: #{tpu_custom_call.1} parent=1 // pred_check_branch
      %5552 = sbr.rel (0) target = $region37
    $region36: #{tpu_custom_call.1} parent=1 // pred_region
      _
    $region37: #{tpu_custom_call.1} parent=1 // pred_fallthru
      _
    // Predicated region
    $region38: #{tpu_custom_call.1} parent=1 // pred_check
      _
    $region39: #{tpu_custom_call.1} parent=1 // pred_check_branch
      %5554 = sbr.rel (0) target = $region41
    $region40: #{tpu_custom_call.1} parent=1 // pred_region
      _
    $region41: #{tpu_custom_call.1} parent=1 // pred_fallthru
      _
    %5555 = vsyncpa [#allocation3], 1
    %5556 = vsyncpa [#allocation5], 1

</llo_original>
